<compile_context>
chip_gen: v7x
topology: tpu7x:2x2x1
jax: 0.10.0
libtpu: 0.0.40
codegen_flags: <defaults>
</compile_context>

<pallas_src>
import math

import numpy as np
import jax
import jax.numpy as jnp
from jax.experimental import pallas as pl
from jax.experimental.pallas import tpu as pltpu

# ----------------------- small configuration (matches __init__) ---------------
STATE_DIM = 16
LATENT_PLAN_DIM = 16
ACTION_DIM = 8
EMBED_DIM = 64
N_LAYERS = 2
N_HEADS = 4
GOAL_SEQ_LEN = 1          # goal_conditioned=True
OBS_SEQ_LEN = 4           # t == obs_seq_len
BATCH = 2

HEAD_DIM = EMBED_DIM // N_HEADS
MLP_DIM = 4 * EMBED_DIM
HEAD_HIDDEN = 100                                   # action_pred hidden (linear_output=False)
HEAD_PAD = 128                                      # padded to the 128-lane boundary
SEQ_SIZE = GOAL_SEQ_LEN + OBS_SEQ_LEN + 2           # pos_emb length
S_LEN = 2 + GOAL_SEQ_LEN + 2 * OBS_SEQ_LEN          # per-batch token count (11)
S_TOT = BATCH * S_LEN                               # stacked token count (22)
SECOND_HALF = GOAL_SEQ_LEN + 2                      # goal conditioned
LN_EPS = 1e-5


# ----------------------------- in-kernel helpers ------------------------------
def _layernorm(x, g, b):
    mu = jnp.mean(x, axis=-1, keepdims=True)
    xc = x - mu
    var = jnp.mean(xc * xc, axis=-1, keepdims=True)
    return xc * jax.lax.rsqrt(var + LN_EPS) * g + b


def _gelu(x):  # exact (erf) GELU, matches torch.nn.GELU() default
    return 0.5 * x * (1.0 + jax.lax.erf(x * (1.0 / math.sqrt(2.0))))


# ---------------------- static attention bias (host, numpy) -------------------
def _build_attn_bias():
    """Additive bias for the grouped row layout:
       rows = [sigma(B) | plan(B) | goal(B*G) | state(B*T) | action(B*T)] (batch-major).
       Allowed iff same batch AND logical causal position i >= j."""
    lpos, bid = [], []
    for b in range(BATCH):                       # sigma tokens
        lpos.append(0); bid.append(b)
    for b in range(BATCH):                       # plan tokens
        lpos.append(1); bid.append(b)
    for b in range(BATCH):                       # goal tokens
        for g in range(GOAL_SEQ_LEN):
            lpos.append(2 + g); bid.append(b)
    for b in range(BATCH):                       # state tokens
        for t in range(OBS_SEQ_LEN):
            lpos.append(2 + GOAL_SEQ_LEN + 2 * t); bid.append(b)
    for b in range(BATCH):                       # action tokens
        for t in range(OBS_SEQ_LEN):
            lpos.append(3 + GOAL_SEQ_LEN + 2 * t); bid.append(b)
    lpos = np.asarray(lpos); bid = np.asarray(bid)
    allowed = (bid[:, None] == bid[None, :]) & (lpos[:, None] >= lpos[None, :])
    return jnp.asarray(np.where(allowed, 0.0, -1e30).astype(np.float32))


# --------------------------------- the kernel ---------------------------------
def gpt_kernel(*refs):
    (sg_ref, act_ref, plan_ref, sig_ref, bias_ref, pos_ref,
     wtok, btok, wact, bact, wplan, bplan, wsig, bsig,
     ln1g, ln1b, wqkv, bqkv, wo, bo, ln2g, ln2b, wm1, bm1, wm2, bm2,
     lnfg, lnfb, wp1, bp1, wp2, bp2, out_ref) = refs

    f32 = jnp.float32

    def lin(x, w, b):
        return jnp.dot(x, w, preferred_element_type=f32) + b

    pos_all = pos_ref[...]                      # (B*(G+T), D)  [goal rows | state rows]
    bias = bias_ref[...]                        # (S_TOT, S_TOT)

    # ---- embeddings (batch stacked along sublanes) ----
    sig_log = jnp.log(sig_ref[...]) * 0.25      # (B, 1)
    emb_t = sig_log * wsig[...] + bsig[...]     # (B, D)   inner dim 1 -> broadcast multiply
    plan_e = lin(plan_ref[...], wplan[...], bplan[...])          # (B, D)
    sg_x = lin(sg_ref[...], wtok[...], btok[...]) + pos_all      # (B*(G+T), D) goal+state
    act_x = (lin(act_ref[...], wact[...], bact[...])
             + pos_all[BATCH * GOAL_SEQ_LEN:, :])                # (B*T, D)

    # grouped row layout: [sigma(B) | plan(B) | goal(B*G) | state(B*T) | action(B*T)]
    # (token ordering only matters to attention, which the static bias encodes)
    h = jnp.concatenate([emb_t, plan_e, sg_x, act_x], axis=0)    # (S_TOT, D)

    scale = 1.0 / math.sqrt(HEAD_DIM)
    for l in range(N_LAYERS):
        # --- causal self attention (fused QKV matmul, per-head score/softmax) ---
        x1 = _layernorm(h, ln1g[l], ln1b[l])
        qkv = lin(x1, wqkv[l], bqkv[l])                          # (S_TOT, 3D)
        ys = []
        for hh in range(N_HEADS):
            lo = hh * HEAD_DIM
            qh = qkv[:, lo:lo + HEAD_DIM]
            kh = qkv[:, EMBED_DIM + lo:EMBED_DIM + lo + HEAD_DIM]
            vh = qkv[:, 2 * EMBED_DIM + lo:2 * EMBED_DIM + lo + HEAD_DIM]
            att = jax.lax.dot_general(qh, kh, (((1,), (1,)), ((), ())),
                                      preferred_element_type=f32) * scale + bias
            att = att - jnp.max(att, axis=-1, keepdims=True)
            p = jnp.exp(att)
            p = p * pl.reciprocal(jnp.sum(p, axis=-1, keepdims=True), approx=True)
            ys.append(jnp.dot(p, vh, preferred_element_type=f32))
        y = jnp.concatenate(ys, axis=-1)                         # (S_TOT, D)
        h = h + lin(y, wo[l], bo[l])

        # --- MLP ---
        x2 = _layernorm(h, ln2g[l], ln2b[l])
        h = h + lin(_gelu(lin(x2, wm1[l], bm1[l])), wm2[l], bm2[l])

    # final layernorm; action-token outputs are the last B*T rows (already (b, t)-major)
    hf = _layernorm(h, lnfg[...], lnfb[...])
    a = hf[S_TOT - BATCH * OBS_SEQ_LEN:, :]                      # (B*T, D)
    mid = _gelu(lin(a, wp1[...], bp1[...]))                      # (B*T, 128) (zero-padded)
    out_ref[...] = lin(mid, wp2[...], bp2[...]).astype(out_ref.dtype)

    # TODO(synk): training-time dropout / mask_cond (bernoulli conditioning drop),
    # uncond zeroing and keep_last_actions branch are not part of the eval-mode hot path.


# ------------------------------- host wrapper ----------------------------------
def _full_spec(arr):
    nd = arr.ndim
    return pl.BlockSpec(arr.shape, lambda i, _nd=nd: (0,) * _nd)


def latent_plans_diffusion_gpt_forward(params, states, actions, goals, plan, sigma):
    """Eval-mode forward; plan is (B, latent_plan_dim), sigma is (B,)."""
    # ---- host-side layout packing (pure data movement / parameter packing) ----
    sg2 = jnp.concatenate(
        [goals.reshape(BATCH * GOAL_SEQ_LEN, STATE_DIM),
         states.reshape(BATCH * OBS_SEQ_LEN, STATE_DIM)], axis=0).astype(jnp.float32)
    act2 = actions.reshape(BATCH * OBS_SEQ_LEN, ACTION_DIM).astype(jnp.float32)
    plan2 = plan.reshape(BATCH, LATENT_PLAN_DIM).astype(jnp.float32)
    sig2 = sigma.reshape(BATCH, 1).astype(jnp.float32)
    attn_bias = _build_attn_bias()

    pos2 = params["pos"][0]                                       # (SEQ_SIZE, D)
    pos_sg = jnp.concatenate(
        [jnp.tile(pos2[:GOAL_SEQ_LEN], (BATCH, 1)),
         jnp.tile(pos2[GOAL_SEQ_LEN:GOAL_SEQ_LEN + OBS_SEQ_LEN], (BATCH, 1))], axis=0)

    # fused QKV weights / padded action head
    wqkv = jnp.concatenate([params["wq"], params["wk"], params["wv"]], axis=-1)
    bqkv = jnp.concatenate([params["bq"], params["bk"], params["bv"]], axis=-1)
    pad = HEAD_PAD - HEAD_HIDDEN
    wp1p = jnp.pad(params["wp1"], ((0, 0), (0, pad)))
    bp1p = jnp.pad(params["bp1"], ((0, 0), (0, pad)))
    wp2p = jnp.pad(params["wp2"], ((0, pad), (0, 0)))

    weights = [params["wtok"], params["btok"], params["wact"], params["bact"],
               params["wplan"], params["bplan"], params["wsig"], params["bsig"],
               params["ln1g"], params["ln1b"], wqkv, bqkv, params["wo"], params["bo"],
               params["ln2g"], params["ln2b"], params["wm1"], params["bm1"],
               params["wm2"], params["bm2"], params["lnfg"], params["lnfb"],
               wp1p, bp1p, wp2p, params["bp2"]]

    inputs = [sg2, act2, plan2, sig2, attn_bias, pos_sg] + weights

    grid_spec = pltpu.PrefetchScalarGridSpec(
        num_scalar_prefetch=0,
        grid=(1,),                                # whole batch in one invocation
        in_specs=[_full_spec(a) for a in inputs],
        out_specs=pl.BlockSpec((BATCH * OBS_SEQ_LEN, ACTION_DIM), lambda i: (0, 0)),
    )

    out2 = pl.pallas_call(
        gpt_kernel,
        out_shape=jax.ShapeDtypeStruct((BATCH * OBS_SEQ_LEN, ACTION_DIM), jnp.float32),
        grid_spec=grid_spec,
        compiler_params=pltpu.CompilerParams(dimension_semantics=("arbitrary",)),
    )(*inputs)
    return out2.reshape(BATCH, OBS_SEQ_LEN, ACTION_DIM)


# --------------------------- deterministic parameters ---------------------------
def init_params(key):
    ks = iter(jax.random.split(key, 16))

    def w(k, fan_in, fan_out):
        return 0.02 * jax.random.normal(k, (fan_in, fan_out), jnp.float32)

    def wl(k, fan_in, fan_out):
        return 0.02 * jax.random.normal(k, (N_LAYERS, fan_in, fan_out), jnp.float32)

    z = lambda *s: jnp.zeros(s, jnp.float32)
    o = lambda *s: jnp.ones(s, jnp.float32)

    p = {}
    p["wtok"], p["btok"] = w(next(ks), STATE_DIM, EMBED_DIM), z(1, EMBED_DIM)
    p["wact"], p["bact"] = w(next(ks), ACTION_DIM, EMBED_DIM), z(1, EMBED_DIM)
    p["wplan"], p["bplan"] = w(next(ks), LATENT_PLAN_DIM, EMBED_DIM), z(1, EMBED_DIM)
    p["wsig"], p["bsig"] = w(next(ks), 1, EMBED_DIM), z(1, EMBED_DIM)
    p["pos"] = 0.02 * jax.random.normal(next(ks), (1, SEQ_SIZE, EMBED_DIM), jnp.float32)

    p["ln1g"], p["ln1b"] = o(N_LAYERS, 1, EMBED_DIM), z(N_LAYERS, 1, EMBED_DIM)
    p["wq"], p["bq"] = wl(next(ks), EMBED_DIM, EMBED_DIM), z(N_LAYERS, 1, EMBED_DIM)
    p["wk"], p["bk"] = wl(next(ks), EMBED_DIM, EMBED_DIM), z(N_LAYERS, 1, EMBED_DIM)
    p["wv"], p["bv"] = wl(next(ks), EMBED_DIM, EMBED_DIM), z(N_LAYERS, 1, EMBED_DIM)
    p["wo"], p["bo"] = wl(next(ks), EMBED_DIM, EMBED_DIM), z(N_LAYERS, 1, EMBED_DIM)
    p["ln2g"], p["ln2b"] = o(N_LAYERS, 1, EMBED_DIM), z(N_LAYERS, 1, EMBED_DIM)
    p["wm1"], p["bm1"] = wl(next(ks), EMBED_DIM, MLP_DIM), z(N_LAYERS, 1, MLP_DIM)
    p["wm2"], p["bm2"] = wl(next(ks), MLP_DIM, EMBED_DIM), z(N_LAYERS, 1, EMBED_DIM)

    p["lnfg"], p["lnfb"] = o(1, EMBED_DIM), z(1, EMBED_DIM)
    p["wp1"], p["bp1"] = w(next(ks), EMBED_DIM, HEAD_HIDDEN), z(1, HEAD_HIDDEN)
    p["wp2"], p["bp2"] = w(next(ks), HEAD_HIDDEN, ACTION_DIM), z(1, ACTION_DIM)
    return p


# ------------------------------ pure-JAX reference ------------------------------
def reference_forward(params, states, actions, goals, plan, sigma):
    b, T, _ = states.shape
    D = EMBED_DIM

    def ln(x, g, b_):
        mu = jnp.mean(x, axis=-1, keepdims=True)
        xc = x - mu
        var = jnp.mean(xc * xc, axis=-1, keepdims=True)
        return xc * jax.lax.rsqrt(var + LN_EPS) * g + b_

    def gelu(x):
        return 0.5 * x * (1.0 + jax.lax.erf(x / math.sqrt(2.0)))

    sigmas = (jnp.log(sigma) / 4.0)[:, None]
    emb_t = (sigmas @ params["wsig"] + params["bsig"])[:, None, :]
    plan3 = plan[:, None, :]
    state_e = states @ params["wtok"] + params["btok"]
    goal_e = goals @ params["wtok"] + params["btok"]
    act_e = actions @ params["wact"] + params["bact"]
    plan_e = plan3 @ params["wplan"] + params["bplan"]
    pos = params["pos"][:, :T + GOAL_SEQ_LEN, :]
    goal_x = goal_e + pos[:, :GOAL_SEQ_LEN, :]
    state_x = state_e + pos[:, GOAL_SEQ_LEN:, :]
    action_x = act_e + pos[:, GOAL_SEQ_LEN:, :]
    sa = jnp.stack([state_x, action_x], axis=1).transpose(0, 2, 1, 3).reshape(b, 2 * T, D)
    x = jnp.concatenate([emb_t, plan_e, goal_x, sa], axis=1)

    S = x.shape[1]
    mask = jnp.tril(jnp.ones((S, S), dtype=bool))
    for l in range(N_LAYERS):
        x1 = ln(x, params["ln1g"][l], params["ln1b"][l])
        q = (x1 @ params["wq"][l] + params["bq"][l]).reshape(b, S, N_HEADS, HEAD_DIM).transpose(0, 2, 1, 3)
        k = (x1 @ params["wk"][l] + params["bk"][l]).reshape(b, S, N_HEADS, HEAD_DIM).transpose(0, 2, 1, 3)
        v = (x1 @ params["wv"][l] + params["bv"][l]).reshape(b, S, N_HEADS, HEAD_DIM).transpose(0, 2, 1, 3)
        att = jnp.einsum("bhqd,bhkd->bhqk", q, k) / math.sqrt(HEAD_DIM)
        att = jnp.where(mask, att, -jnp.inf)
        att = jax.nn.softmax(att, axis=-1)
        y = jnp.einsum("bhqk,bhkd->bhqd", att, v).transpose(0, 2, 1, 3).reshape(b, S, D)
        x = x + (y @ params["wo"][l] + params["bo"][l])
        x2 = ln(x, params["ln2g"][l], params["ln2b"][l])
        m = gelu(x2 @ params["wm1"][l] + params["bm1"][l])
        x = x + (m @ params["wm2"][l] + params["bm2"][l])

    x = ln(x, params["lnfg"], params["lnfb"])
    x = x[:, SECOND_HALF:, :].reshape(b, T, 2, D).transpose(0, 2, 1, 3)[:, 1]
    mid = gelu(x @ params["wp1"] + params["bp1"])
    return mid @ params["wp2"] + params["bp2"]


# --------------------------------------- main -----------------------------------
if __name__ == "__main__":
    key = jax.random.PRNGKey(0)
    kp, k1, k2, k3, k4, k5 = jax.random.split(key, 6)
    params = init_params(kp)

    states = jax.random.normal(k1, (BATCH, OBS_SEQ_LEN, STATE_DIM), jnp.float32)
    actions = jax.random.normal(k2, (BATCH, OBS_SEQ_LEN, ACTION_DIM), jnp.float32)
    goals = jax.random.normal(k3, (BATCH, GOAL_SEQ_LEN, STATE_DIM), jnp.float32)
    plan = jax.random.normal(k4, (BATCH, LATENT_PLAN_DIM), jnp.float32)
    sigma = jax.random.uniform(k5, (BATCH,), jnp.float32, 0.1, 1.0)

    out = latent_plans_diffusion_gpt_forward(params, states, actions, goals, plan, sigma)
    out = jax.block_until_ready(out)

    ref = reference_forward(params, states, actions, goals, plan, sigma)
    np.testing.assert_allclose(np.asarray(out), np.asarray(ref), rtol=1e-2, atol=1e-2)
    assert out.shape == (BATCH, OBS_SEQ_LEN, ACTION_DIM)
    print("KERNEL_OK")
</pallas_src>

<mosaic_0001>
module attributes {stable_mosaic.version = 11 : i64} {
  func.func @gpt_kernel(%arg0: i32, %arg1: memref<10x16xf32, #tpu.memory_space<vmem>>, %arg2: memref<8x8xf32, #tpu.memory_space<vmem>>, %arg3: memref<2x16xf32, #tpu.memory_space<vmem>>, %arg4: memref<2x1xf32, #tpu.memory_space<vmem>>, %arg5: memref<22x22xf32, #tpu.memory_space<vmem>>, %arg6: memref<10x64xf32, #tpu.memory_space<vmem>>, %arg7: memref<16x64xf32, #tpu.memory_space<vmem>>, %arg8: memref<1x64xf32, #tpu.memory_space<vmem>>, %arg9: memref<8x64xf32, #tpu.memory_space<vmem>>, %arg10: memref<1x64xf32, #tpu.memory_space<vmem>>, %arg11: memref<16x64xf32, #tpu.memory_space<vmem>>, %arg12: memref<1x64xf32, #tpu.memory_space<vmem>>, %arg13: memref<1x64xf32, #tpu.memory_space<vmem>>, %arg14: memref<1x64xf32, #tpu.memory_space<vmem>>, %arg15: memref<2x1x64xf32, #tpu.memory_space<vmem>>, %arg16: memref<2x1x64xf32, #tpu.memory_space<vmem>>, %arg17: memref<2x64x192xf32, #tpu.memory_space<vmem>>, %arg18: memref<2x1x192xf32, #tpu.memory_space<vmem>>, %arg19: memref<2x64x64xf32, #tpu.memory_space<vmem>>, %arg20: memref<2x1x64xf32, #tpu.memory_space<vmem>>, %arg21: memref<2x1x64xf32, #tpu.memory_space<vmem>>, %arg22: memref<2x1x64xf32, #tpu.memory_space<vmem>>, %arg23: memref<2x64x256xf32, #tpu.memory_space<vmem>>, %arg24: memref<2x1x256xf32, #tpu.memory_space<vmem>>, %arg25: memref<2x256x64xf32, #tpu.memory_space<vmem>>, %arg26: memref<2x1x64xf32, #tpu.memory_space<vmem>>, %arg27: memref<1x64xf32, #tpu.memory_space<vmem>>, %arg28: memref<1x64xf32, #tpu.memory_space<vmem>>, %arg29: memref<64x128xf32, #tpu.memory_space<vmem>>, %arg30: memref<1x128xf32, #tpu.memory_space<vmem>>, %arg31: memref<128x8xf32, #tpu.memory_space<vmem>>, %arg32: memref<1x8xf32, #tpu.memory_space<vmem>>, %arg33: memref<8x8xf32, #tpu.memory_space<vmem>>) attributes {dimension_semantics = [#tpu.dimension_semantics<arbitrary>], iteration_bounds = array<i64: 1>, scalar_prefetch = 0 : i64, scratch_operands = 0 : i64, tpu.core_type = #tpu.core_type<tc>, window_params = [{pipeline_mode = #tpu.pipeline_mode<synchronous>, transform_indices = @transform_0, window_bounds = array<i64: 10, 16>}, {pipeline_mode = #tpu.pipeline_mode<synchronous>, transform_indices = @transform_1, window_bounds = array<i64: 8, 8>}, {pipeline_mode = #tpu.pipeline_mode<synchronous>, transform_indices = @transform_2, window_bounds = array<i64: 2, 16>}, {pipeline_mode = #tpu.pipeline_mode<synchronous>, transform_indices = @transform_3, window_bounds = array<i64: 2, 1>}, {pipeline_mode = #tpu.pipeline_mode<synchronous>, transform_indices = @transform_4, window_bounds = array<i64: 22, 22>}, {pipeline_mode = #tpu.pipeline_mode<synchronous>, transform_indices = @transform_5, window_bounds = array<i64: 10, 64>}, {pipeline_mode = #tpu.pipeline_mode<synchronous>, transform_indices = @transform_6, window_bounds = array<i64: 16, 64>}, {pipeline_mode = #tpu.pipeline_mode<synchronous>, transform_indices = @transform_7, window_bounds = array<i64: 1, 64>}, {pipeline_mode = #tpu.pipeline_mode<synchronous>, transform_indices = @transform_8, window_bounds = array<i64: 8, 64>}, {pipeline_mode = #tpu.pipeline_mode<synchronous>, transform_indices = @transform_9, window_bounds = array<i64: 1, 64>}, {pipeline_mode = #tpu.pipeline_mode<synchronous>, transform_indices = @transform_10, window_bounds = array<i64: 16, 64>}, {pipeline_mode = #tpu.pipeline_mode<synchronous>, transform_indices = @transform_11, window_bounds = array<i64: 1, 64>}, {pipeline_mode = #tpu.pipeline_mode<synchronous>, transform_indices = @transform_12, window_bounds = array<i64: 1, 64>}, {pipeline_mode = #tpu.pipeline_mode<synchronous>, transform_indices = @transform_13, window_bounds = array<i64: 1, 64>}, {pipeline_mode = #tpu.pipeline_mode<synchronous>, transform_indices = @transform_14, window_bounds = array<i64: 2, 1, 64>}, {pipeline_mode = #tpu.pipeline_mode<synchronous>, transform_indices = @transform_15, window_bounds = array<i64: 2, 1, 64>}, {pipeline_mode = #tpu.pipeline_mode<synchronous>, transform_indices = @transform_16, window_bounds = array<i64: 2, 64, 192>}, {pipeline_mode = #tpu.pipeline_mode<synchronous>, transform_indices = @transform_17, window_bounds = array<i64: 2, 1, 192>}, {pipeline_mode = #tpu.pipeline_mode<synchronous>, transform_indices = @transform_18, window_bounds = array<i64: 2, 64, 64>}, {pipeline_mode = #tpu.pipeline_mode<synchronous>, transform_indices = @transform_19, window_bounds = array<i64: 2, 1, 64>}, {pipeline_mode = #tpu.pipeline_mode<synchronous>, transform_indices = @transform_20, window_bounds = array<i64: 2, 1, 64>}, {pipeline_mode = #tpu.pipeline_mode<synchronous>, transform_indices = @transform_21, window_bounds = array<i64: 2, 1, 64>}, {pipeline_mode = #tpu.pipeline_mode<synchronous>, transform_indices = @transform_22, window_bounds = array<i64: 2, 64, 256>}, {pipeline_mode = #tpu.pipeline_mode<synchronous>, transform_indices = @transform_23, window_bounds = array<i64: 2, 1, 256>}, {pipeline_mode = #tpu.pipeline_mode<synchronous>, transform_indices = @transform_24, window_bounds = array<i64: 2, 256, 64>}, {pipeline_mode = #tpu.pipeline_mode<synchronous>, transform_indices = @transform_25, window_bounds = array<i64: 2, 1, 64>}, {pipeline_mode = #tpu.pipeline_mode<synchronous>, transform_indices = @transform_26, window_bounds = array<i64: 1, 64>}, {pipeline_mode = #tpu.pipeline_mode<synchronous>, transform_indices = @transform_27, window_bounds = array<i64: 1, 64>}, {pipeline_mode = #tpu.pipeline_mode<synchronous>, transform_indices = @transform_28, window_bounds = array<i64: 64, 128>}, {pipeline_mode = #tpu.pipeline_mode<synchronous>, transform_indices = @transform_29, window_bounds = array<i64: 1, 128>}, {pipeline_mode = #tpu.pipeline_mode<synchronous>, transform_indices = @transform_30, window_bounds = array<i64: 128, 8>}, {pipeline_mode = #tpu.pipeline_mode<synchronous>, transform_indices = @transform_31, window_bounds = array<i64: 1, 8>}, {pipeline_mode = #tpu.pipeline_mode<synchronous>, transform_indices = @transform_32, window_bounds = array<i64: 8, 8>}]} {
    %c0 = arith.constant 0 : index
    %c0_0 = arith.constant 0 : index
    %0 = vector.load %arg6[%c0, %c0_0] : memref<10x64xf32, #tpu.memory_space<vmem>>, vector<10x64xf32>
    %c0_1 = arith.constant 0 : index
    %c0_2 = arith.constant 0 : index
    %1 = vector.load %arg5[%c0_1, %c0_2] : memref<22x22xf32, #tpu.memory_space<vmem>>, vector<22x22xf32>
    %c0_3 = arith.constant 0 : index
    %c0_4 = arith.constant 0 : index
    %2 = vector.load %arg4[%c0_3, %c0_4] : memref<2x1xf32, #tpu.memory_space<vmem>>, vector<2x1xf32>
    %3 = math.log %2 : vector<2x1xf32>
    %cst = arith.constant 2.500000e-01 : f32
    %4 = vector.broadcast %cst : f32 to vector<2x1xf32>
    %5 = arith.mulf %3, %4 : vector<2x1xf32>
    %c0_5 = arith.constant 0 : index
    %c0_6 = arith.constant 0 : index
    %6 = vector.load %arg13[%c0_5, %c0_6] : memref<1x64xf32, #tpu.memory_space<vmem>>, vector<1x64xf32>
    %7 = vector.broadcast %5 : vector<2x1xf32> to vector<2x64xf32>
    %8 = vector.broadcast %6 : vector<1x64xf32> to vector<2x64xf32>
    %9 = arith.mulf %7, %8 : vector<2x64xf32>
    %c0_7 = arith.constant 0 : index
    %c0_8 = arith.constant 0 : index
    %10 = vector.load %arg14[%c0_7, %c0_8] : memref<1x64xf32, #tpu.memory_space<vmem>>, vector<1x64xf32>
    %11 = vector.broadcast %10 : vector<1x64xf32> to vector<2x64xf32>
    %12 = arith.addf %9, %11 : vector<2x64xf32>
    %c0_9 = arith.constant 0 : index
    %c0_10 = arith.constant 0 : index
    %13 = vector.load %arg3[%c0_9, %c0_10] : memref<2x16xf32, #tpu.memory_space<vmem>>, vector<2x16xf32>
    %c0_11 = arith.constant 0 : index
    %c0_12 = arith.constant 0 : index
    %14 = vector.load %arg11[%c0_11, %c0_12] : memref<16x64xf32, #tpu.memory_space<vmem>>, vector<16x64xf32>
    %c0_13 = arith.constant 0 : index
    %c0_14 = arith.constant 0 : index
    %15 = vector.load %arg12[%c0_13, %c0_14] : memref<1x64xf32, #tpu.memory_space<vmem>>, vector<1x64xf32>
    %cst_15 = arith.constant dense<0.000000e+00> : vector<2x64xf32>
    %16 = tpu.matmul %13, %14, %cst_15 {dimension_numbers = #tpu.dot_dimension_numbers<[1], [0], [0], [1], [0, 0, 1, 1], [], []>} : vector<2x16xf32>, vector<16x64xf32>, vector<2x64xf32> -> vector<2x64xf32>
    %17 = vector.broadcast %15 : vector<1x64xf32> to vector<2x64xf32>
    %18 = arith.addf %16, %17 : vector<2x64xf32>
    %c0_16 = arith.constant 0 : index
    %c0_17 = arith.constant 0 : index
    %19 = vector.load %arg1[%c0_16, %c0_17] : memref<10x16xf32, #tpu.memory_space<vmem>>, vector<10x16xf32>
    %c0_18 = arith.constant 0 : index
    %c0_19 = arith.constant 0 : index
    %20 = vector.load %arg7[%c0_18, %c0_19] : memref<16x64xf32, #tpu.memory_space<vmem>>, vector<16x64xf32>
    %c0_20 = arith.constant 0 : index
    %c0_21 = arith.constant 0 : index
    %21 = vector.load %arg8[%c0_20, %c0_21] : memref<1x64xf32, #tpu.memory_space<vmem>>, vector<1x64xf32>
    %cst_22 = arith.constant dense<0.000000e+00> : vector<10x64xf32>
    %22 = tpu.matmul %19, %20, %cst_22 {dimension_numbers = #tpu.dot_dimension_numbers<[1], [0], [0], [1], [0, 0, 1, 1], [], []>} : vector<10x16xf32>, vector<16x64xf32>, vector<10x64xf32> -> vector<10x64xf32>
    %23 = vector.broadcast %21 : vector<1x64xf32> to vector<10x64xf32>
    %24 = arith.addf %22, %23 : vector<10x64xf32>
    %25 = arith.addf %24, %0 : vector<10x64xf32>
    %c0_23 = arith.constant 0 : index
    %c0_24 = arith.constant 0 : index
    %26 = vector.load %arg2[%c0_23, %c0_24] : memref<8x8xf32, #tpu.memory_space<vmem>>, vector<8x8xf32>
    %c0_25 = arith.constant 0 : index
    %c0_26 = arith.constant 0 : index
    %27 = vector.load %arg9[%c0_25, %c0_26] : memref<8x64xf32, #tpu.memory_space<vmem>>, vector<8x64xf32>
    %c0_27 = arith.constant 0 : index
    %c0_28 = arith.constant 0 : index
    %28 = vector.load %arg10[%c0_27, %c0_28] : memref<1x64xf32, #tpu.memory_space<vmem>>, vector<1x64xf32>
    %cst_29 = arith.constant dense<0.000000e+00> : vector<8x64xf32>
    %29 = tpu.matmul %26, %27, %cst_29 {dimension_numbers = #tpu.dot_dimension_numbers<[1], [0], [0], [1], [0, 0, 1, 1], [], []>} : vector<8x8xf32>, vector<8x64xf32>, vector<8x64xf32> -> vector<8x64xf32>
    %30 = vector.broadcast %28 : vector<1x64xf32> to vector<8x64xf32>
    %31 = arith.addf %29, %30 : vector<8x64xf32>
    %32 = vector.extract_strided_slice %0 {offsets = [2, 0], sizes = [8, 64], strides = [1, 1]} : vector<10x64xf32> to vector<8x64xf32>
    %33 = arith.addf %31, %32 : vector<8x64xf32>
    %34 = tpu.concatenate %12, %18, %25, %33 in 0 : vector<2x64xf32>, vector<2x64xf32>, vector<10x64xf32>, vector<8x64xf32> -> vector<22x64xf32>
    %c0_30 = arith.constant 0 : index
    %c0_31 = arith.constant 0 : index
    %c0_32 = arith.constant 0 : index
    %35 = vector.load %arg15[%c0_30, %c0_31, %c0_32] : memref<2x1x64xf32, #tpu.memory_space<vmem>>, vector<1x1x64xf32>
    %36 = vector.shape_cast %35 : vector<1x1x64xf32> to vector<1x64xf32>
    %c0_33 = arith.constant 0 : index
    %c0_34 = arith.constant 0 : index
    %c0_35 = arith.constant 0 : index
    %37 = vector.load %arg16[%c0_33, %c0_34, %c0_35] : memref<2x1x64xf32, #tpu.memory_space<vmem>>, vector<1x1x64xf32>
    %38 = vector.shape_cast %37 : vector<1x1x64xf32> to vector<1x64xf32>
    %cst_36 = arith.constant dense<0.000000e+00> : vector<22xf32>
    %39 = vector.multi_reduction <add>, %34, %cst_36 [1] : vector<22x64xf32> to vector<22xf32>
    %40 = vector.shape_cast %39 : vector<22xf32> to vector<22x1xf32>
    %cst_37 = arith.constant 6.400000e+01 : f32
    %41 = vector.broadcast %cst_37 : f32 to vector<22x1xf32>
    %42 = arith.divf %40, %41 : vector<22x1xf32>
    %43 = vector.broadcast %42 : vector<22x1xf32> to vector<22x64xf32>
    %44 = arith.subf %34, %43 : vector<22x64xf32>
    %45 = arith.mulf %44, %44 : vector<22x64xf32>
    %cst_38 = arith.constant dense<0.000000e+00> : vector<22xf32>
    %46 = vector.multi_reduction <add>, %45, %cst_38 [1] : vector<22x64xf32> to vector<22xf32>
    %47 = vector.shape_cast %46 : vector<22xf32> to vector<22x1xf32>
    %cst_39 = arith.constant 6.400000e+01 : f32
    %48 = vector.broadcast %cst_39 : f32 to vector<22x1xf32>
    %49 = arith.divf %47, %48 : vector<22x1xf32>
    %cst_40 = arith.constant 9.99999974E-6 : f32
    %50 = vector.broadcast %cst_40 : f32 to vector<22x1xf32>
    %51 = arith.addf %49, %50 : vector<22x1xf32>
    %52 = math.rsqrt %51 : vector<22x1xf32>
    %53 = vector.broadcast %52 : vector<22x1xf32> to vector<22x64xf32>
    %54 = arith.mulf %44, %53 : vector<22x64xf32>
    %55 = vector.broadcast %36 : vector<1x64xf32> to vector<22x64xf32>
    %56 = arith.mulf %54, %55 : vector<22x64xf32>
    %57 = vector.broadcast %38 : vector<1x64xf32> to vector<22x64xf32>
    %58 = arith.addf %56, %57 : vector<22x64xf32>
    %c0_41 = arith.constant 0 : index
    %c0_42 = arith.constant 0 : index
    %c0_43 = arith.constant 0 : index
    %59 = vector.load %arg17[%c0_41, %c0_42, %c0_43] : memref<2x64x192xf32, #tpu.memory_space<vmem>>, vector<1x64x192xf32>
    %60 = vector.shape_cast %59 : vector<1x64x192xf32> to vector<64x192xf32>
    %c0_44 = arith.constant 0 : index
    %c0_45 = arith.constant 0 : index
    %c0_46 = arith.constant 0 : index
    %61 = vector.load %arg18[%c0_44, %c0_45, %c0_46] : memref<2x1x192xf32, #tpu.memory_space<vmem>>, vector<1x1x192xf32>
    %62 = vector.shape_cast %61 : vector<1x1x192xf32> to vector<1x192xf32>
    %cst_47 = arith.constant dense<0.000000e+00> : vector<22x192xf32>
    %63 = tpu.matmul %58, %60, %cst_47 {dimension_numbers = #tpu.dot_dimension_numbers<[1], [0], [0], [1], [0, 0, 1, 1], [], []>} : vector<22x64xf32>, vector<64x192xf32>, vector<22x192xf32> -> vector<22x192xf32>
    %64 = vector.broadcast %62 : vector<1x192xf32> to vector<22x192xf32>
    %65 = arith.addf %63, %64 : vector<22x192xf32>
    %66 = vector.extract_strided_slice %65 {offsets = [0, 0], sizes = [22, 16], strides = [1, 1]} : vector<22x192xf32> to vector<22x16xf32>
    %67 = vector.extract_strided_slice %65 {offsets = [0, 64], sizes = [22, 16], strides = [1, 1]} : vector<22x192xf32> to vector<22x16xf32>
    %68 = vector.extract_strided_slice %65 {offsets = [0, 128], sizes = [22, 16], strides = [1, 1]} : vector<22x192xf32> to vector<22x16xf32>
    %cst_48 = arith.constant dense<0.000000e+00> : vector<22x22xf32>
    %69 = tpu.matmul %66, %67, %cst_48 {dimension_numbers = #tpu.dot_dimension_numbers<[1], [1], [0], [0], [0, 0, 1, 0], [], []>} : vector<22x16xf32>, vector<22x16xf32>, vector<22x22xf32> -> vector<22x22xf32>
    %cst_49 = arith.constant 2.500000e-01 : f32
    %70 = vector.broadcast %cst_49 : f32 to vector<22x22xf32>
    %71 = arith.mulf %69, %70 : vector<22x22xf32>
    %72 = arith.addf %71, %1 : vector<22x22xf32>
    %cst_50 = arith.constant dense<0xFF800000> : vector<22xf32>
    %73 = vector.multi_reduction <maximumf>, %72, %cst_50 [1] : vector<22x22xf32> to vector<22xf32>
    %74 = vector.shape_cast %73 : vector<22xf32> to vector<22x1xf32>
    %75 = vector.broadcast %74 : vector<22x1xf32> to vector<22x22xf32>
    %76 = arith.subf %72, %75 : vector<22x22xf32>
    %77 = math.exp %76 : vector<22x22xf32>
    %cst_51 = arith.constant dense<0.000000e+00> : vector<22xf32>
    %78 = vector.multi_reduction <add>, %77, %cst_51 [1] : vector<22x22xf32> to vector<22xf32>
    %79 = vector.shape_cast %78 : vector<22xf32> to vector<22x1xf32>
    %80 = tpu.reciprocal %79 {approx = true} : vector<22x1xf32> -> vector<22x1xf32>
    %81 = vector.broadcast %80 : vector<22x1xf32> to vector<22x22xf32>
    %82 = arith.mulf %77, %81 : vector<22x22xf32>
    %cst_52 = arith.constant dense<0.000000e+00> : vector<22x16xf32>
    %83 = tpu.matmul %82, %68, %cst_52 {dimension_numbers = #tpu.dot_dimension_numbers<[1], [0], [0], [1], [0, 0, 1, 1], [], []>} : vector<22x22xf32>, vector<22x16xf32>, vector<22x16xf32> -> vector<22x16xf32>
    %84 = vector.extract_strided_slice %65 {offsets = [0, 16], sizes = [22, 16], strides = [1, 1]} : vector<22x192xf32> to vector<22x16xf32>
    %85 = vector.extract_strided_slice %65 {offsets = [0, 80], sizes = [22, 16], strides = [1, 1]} : vector<22x192xf32> to vector<22x16xf32>
    %86 = vector.extract_strided_slice %65 {offsets = [0, 144], sizes = [22, 16], strides = [1, 1]} : vector<22x192xf32> to vector<22x16xf32>
    %cst_53 = arith.constant dense<0.000000e+00> : vector<22x22xf32>
    %87 = tpu.matmul %84, %85, %cst_53 {dimension_numbers = #tpu.dot_dimension_numbers<[1], [1], [0], [0], [0, 0, 1, 0], [], []>} : vector<22x16xf32>, vector<22x16xf32>, vector<22x22xf32> -> vector<22x22xf32>
    %cst_54 = arith.constant 2.500000e-01 : f32
    %88 = vector.broadcast %cst_54 : f32 to vector<22x22xf32>
    %89 = arith.mulf %87, %88 : vector<22x22xf32>
    %90 = arith.addf %89, %1 : vector<22x22xf32>
    %cst_55 = arith.constant dense<0xFF800000> : vector<22xf32>
    %91 = vector.multi_reduction <maximumf>, %90, %cst_55 [1] : vector<22x22xf32> to vector<22xf32>
    %92 = vector.shape_cast %91 : vector<22xf32> to vector<22x1xf32>
    %93 = vector.broadcast %92 : vector<22x1xf32> to vector<22x22xf32>
    %94 = arith.subf %90, %93 : vector<22x22xf32>
    %95 = math.exp %94 : vector<22x22xf32>
    %cst_56 = arith.constant dense<0.000000e+00> : vector<22xf32>
    %96 = vector.multi_reduction <add>, %95, %cst_56 [1] : vector<22x22xf32> to vector<22xf32>
    %97 = vector.shape_cast %96 : vector<22xf32> to vector<22x1xf32>
    %98 = tpu.reciprocal %97 {approx = true} : vector<22x1xf32> -> vector<22x1xf32>
    %99 = vector.broadcast %98 : vector<22x1xf32> to vector<22x22xf32>
    %100 = arith.mulf %95, %99 : vector<22x22xf32>
    %cst_57 = arith.constant dense<0.000000e+00> : vector<22x16xf32>
    %101 = tpu.matmul %100, %86, %cst_57 {dimension_numbers = #tpu.dot_dimension_numbers<[1], [0], [0], [1], [0, 0, 1, 1], [], []>} : vector<22x22xf32>, vector<22x16xf32>, vector<22x16xf32> -> vector<22x16xf32>
    %102 = vector.extract_strided_slice %65 {offsets = [0, 32], sizes = [22, 16], strides = [1, 1]} : vector<22x192xf32> to vector<22x16xf32>
    %103 = vector.extract_strided_slice %65 {offsets = [0, 96], sizes = [22, 16], strides = [1, 1]} : vector<22x192xf32> to vector<22x16xf32>
    %104 = vector.extract_strided_slice %65 {offsets = [0, 160], sizes = [22, 16], strides = [1, 1]} : vector<22x192xf32> to vector<22x16xf32>
    %cst_58 = arith.constant dense<0.000000e+00> : vector<22x22xf32>
    %105 = tpu.matmul %102, %103, %cst_58 {dimension_numbers = #tpu.dot_dimension_numbers<[1], [1], [0], [0], [0, 0, 1, 0], [], []>} : vector<22x16xf32>, vector<22x16xf32>, vector<22x22xf32> -> vector<22x22xf32>
    %cst_59 = arith.constant 2.500000e-01 : f32
    %106 = vector.broadcast %cst_59 : f32 to vector<22x22xf32>
    %107 = arith.mulf %105, %106 : vector<22x22xf32>
    %108 = arith.addf %107, %1 : vector<22x22xf32>
    %cst_60 = arith.constant dense<0xFF800000> : vector<22xf32>
    %109 = vector.multi_reduction <maximumf>, %108, %cst_60 [1] : vector<22x22xf32> to vector<22xf32>
    %110 = vector.shape_cast %109 : vector<22xf32> to vector<22x1xf32>
    %111 = vector.broadcast %110 : vector<22x1xf32> to vector<22x22xf32>
    %112 = arith.subf %108, %111 : vector<22x22xf32>
    %113 = math.exp %112 : vector<22x22xf32>
    %cst_61 = arith.constant dense<0.000000e+00> : vector<22xf32>
    %114 = vector.multi_reduction <add>, %113, %cst_61 [1] : vector<22x22xf32> to vector<22xf32>
    %115 = vector.shape_cast %114 : vector<22xf32> to vector<22x1xf32>
    %116 = tpu.reciprocal %115 {approx = true} : vector<22x1xf32> -> vector<22x1xf32>
    %117 = vector.broadcast %116 : vector<22x1xf32> to vector<22x22xf32>
    %118 = arith.mulf %113, %117 : vector<22x22xf32>
    %cst_62 = arith.constant dense<0.000000e+00> : vector<22x16xf32>
    %119 = tpu.matmul %118, %104, %cst_62 {dimension_numbers = #tpu.dot_dimension_numbers<[1], [0], [0], [1], [0, 0, 1, 1], [], []>} : vector<22x22xf32>, vector<22x16xf32>, vector<22x16xf32> -> vector<22x16xf32>
    %120 = vector.extract_strided_slice %65 {offsets = [0, 48], sizes = [22, 16], strides = [1, 1]} : vector<22x192xf32> to vector<22x16xf32>
    %121 = vector.extract_strided_slice %65 {offsets = [0, 112], sizes = [22, 16], strides = [1, 1]} : vector<22x192xf32> to vector<22x16xf32>
    %122 = vector.extract_strided_slice %65 {offsets = [0, 176], sizes = [22, 16], strides = [1, 1]} : vector<22x192xf32> to vector<22x16xf32>
    %cst_63 = arith.constant dense<0.000000e+00> : vector<22x22xf32>
    %123 = tpu.matmul %120, %121, %cst_63 {dimension_numbers = #tpu.dot_dimension_numbers<[1], [1], [0], [0], [0, 0, 1, 0], [], []>} : vector<22x16xf32>, vector<22x16xf32>, vector<22x22xf32> -> vector<22x22xf32>
    %cst_64 = arith.constant 2.500000e-01 : f32
    %124 = vector.broadcast %cst_64 : f32 to vector<22x22xf32>
    %125 = arith.mulf %123, %124 : vector<22x22xf32>
    %126 = arith.addf %125, %1 : vector<22x22xf32>
    %cst_65 = arith.constant dense<0xFF800000> : vector<22xf32>
    %127 = vector.multi_reduction <maximumf>, %126, %cst_65 [1] : vector<22x22xf32> to vector<22xf32>
    %128 = vector.shape_cast %127 : vector<22xf32> to vector<22x1xf32>
    %129 = vector.broadcast %128 : vector<22x1xf32> to vector<22x22xf32>
    %130 = arith.subf %126, %129 : vector<22x22xf32>
    %131 = math.exp %130 : vector<22x22xf32>
    %cst_66 = arith.constant dense<0.000000e+00> : vector<22xf32>
    %132 = vector.multi_reduction <add>, %131, %cst_66 [1] : vector<22x22xf32> to vector<22xf32>
    %133 = vector.shape_cast %132 : vector<22xf32> to vector<22x1xf32>
    %134 = tpu.reciprocal %133 {approx = true} : vector<22x1xf32> -> vector<22x1xf32>
    %135 = vector.broadcast %134 : vector<22x1xf32> to vector<22x22xf32>
    %136 = arith.mulf %131, %135 : vector<22x22xf32>
    %cst_67 = arith.constant dense<0.000000e+00> : vector<22x16xf32>
    %137 = tpu.matmul %136, %122, %cst_67 {dimension_numbers = #tpu.dot_dimension_numbers<[1], [0], [0], [1], [0, 0, 1, 1], [], []>} : vector<22x22xf32>, vector<22x16xf32>, vector<22x16xf32> -> vector<22x16xf32>
    %138 = tpu.concatenate %83, %101, %119, %137 in 1 : vector<22x16xf32>, vector<22x16xf32>, vector<22x16xf32>, vector<22x16xf32> -> vector<22x64xf32>
    %c0_68 = arith.constant 0 : index
    %c0_69 = arith.constant 0 : index
    %c0_70 = arith.constant 0 : index
    %139 = vector.load %arg19[%c0_68, %c0_69, %c0_70] : memref<2x64x64xf32, #tpu.memory_space<vmem>>, vector<1x64x64xf32>
    %140 = vector.shape_cast %139 : vector<1x64x64xf32> to vector<64x64xf32>
    %c0_71 = arith.constant 0 : index
    %c0_72 = arith.constant 0 : index
    %c0_73 = arith.constant 0 : index
    %141 = vector.load %arg20[%c0_71, %c0_72, %c0_73] : memref<2x1x64xf32, #tpu.memory_space<vmem>>, vector<1x1x64xf32>
    %142 = vector.shape_cast %141 : vector<1x1x64xf32> to vector<1x64xf32>
    %cst_74 = arith.constant dense<0.000000e+00> : vector<22x64xf32>
    %143 = tpu.matmul %138, %140, %cst_74 {dimension_numbers = #tpu.dot_dimension_numbers<[1], [0], [0], [1], [0, 0, 1, 1], [], []>} : vector<22x64xf32>, vector<64x64xf32>, vector<22x64xf32> -> vector<22x64xf32>
    %144 = vector.broadcast %142 : vector<1x64xf32> to vector<22x64xf32>
    %145 = arith.addf %143, %144 : vector<22x64xf32>
    %146 = arith.addf %34, %145 : vector<22x64xf32>
    %c0_75 = arith.constant 0 : index
    %c0_76 = arith.constant 0 : index
    %c0_77 = arith.constant 0 : index
    %147 = vector.load %arg21[%c0_75, %c0_76, %c0_77] : memref<2x1x64xf32, #tpu.memory_space<vmem>>, vector<1x1x64xf32>
    %148 = vector.shape_cast %147 : vector<1x1x64xf32> to vector<1x64xf32>
    %c0_78 = arith.constant 0 : index
    %c0_79 = arith.constant 0 : index
    %c0_80 = arith.constant 0 : index
    %149 = vector.load %arg22[%c0_78, %c0_79, %c0_80] : memref<2x1x64xf32, #tpu.memory_space<vmem>>, vector<1x1x64xf32>
    %150 = vector.shape_cast %149 : vector<1x1x64xf32> to vector<1x64xf32>
    %cst_81 = arith.constant dense<0.000000e+00> : vector<22xf32>
    %151 = vector.multi_reduction <add>, %146, %cst_81 [1] : vector<22x64xf32> to vector<22xf32>
    %152 = vector.shape_cast %151 : vector<22xf32> to vector<22x1xf32>
    %cst_82 = arith.constant 6.400000e+01 : f32
    %153 = vector.broadcast %cst_82 : f32 to vector<22x1xf32>
    %154 = arith.divf %152, %153 : vector<22x1xf32>
    %155 = vector.broadcast %154 : vector<22x1xf32> to vector<22x64xf32>
    %156 = arith.subf %146, %155 : vector<22x64xf32>
    %157 = arith.mulf %156, %156 : vector<22x64xf32>
    %cst_83 = arith.constant dense<0.000000e+00> : vector<22xf32>
    %158 = vector.multi_reduction <add>, %157, %cst_83 [1] : vector<22x64xf32> to vector<22xf32>
    %159 = vector.shape_cast %158 : vector<22xf32> to vector<22x1xf32>
    %cst_84 = arith.constant 6.400000e+01 : f32
    %160 = vector.broadcast %cst_84 : f32 to vector<22x1xf32>
    %161 = arith.divf %159, %160 : vector<22x1xf32>
    %cst_85 = arith.constant 9.99999974E-6 : f32
    %162 = vector.broadcast %cst_85 : f32 to vector<22x1xf32>
    %163 = arith.addf %161, %162 : vector<22x1xf32>
    %164 = math.rsqrt %163 : vector<22x1xf32>
    %165 = vector.broadcast %164 : vector<22x1xf32> to vector<22x64xf32>
    %166 = arith.mulf %156, %165 : vector<22x64xf32>
    %167 = vector.broadcast %148 : vector<1x64xf32> to vector<22x64xf32>
    %168 = arith.mulf %166, %167 : vector<22x64xf32>
    %169 = vector.broadcast %150 : vector<1x64xf32> to vector<22x64xf32>
    %170 = arith.addf %168, %169 : vector<22x64xf32>
    %c0_86 = arith.constant 0 : index
    %c0_87 = arith.constant 0 : index
    %c0_88 = arith.constant 0 : index
    %171 = vector.load %arg23[%c0_86, %c0_87, %c0_88] : memref<2x64x256xf32, #tpu.memory_space<vmem>>, vector<1x64x256xf32>
    %172 = vector.shape_cast %171 : vector<1x64x256xf32> to vector<64x256xf32>
    %c0_89 = arith.constant 0 : index
    %c0_90 = arith.constant 0 : index
    %c0_91 = arith.constant 0 : index
    %173 = vector.load %arg24[%c0_89, %c0_90, %c0_91] : memref<2x1x256xf32, #tpu.memory_space<vmem>>, vector<1x1x256xf32>
    %174 = vector.shape_cast %173 : vector<1x1x256xf32> to vector<1x256xf32>
    %cst_92 = arith.constant dense<0.000000e+00> : vector<22x256xf32>
    %175 = tpu.matmul %170, %172, %cst_92 {dimension_numbers = #tpu.dot_dimension_numbers<[1], [0], [0], [1], [0, 0, 1, 1], [], []>} : vector<22x64xf32>, vector<64x256xf32>, vector<22x256xf32> -> vector<22x256xf32>
    %176 = vector.broadcast %174 : vector<1x256xf32> to vector<22x256xf32>
    %177 = arith.addf %175, %176 : vector<22x256xf32>
    %cst_93 = arith.constant 5.000000e-01 : f32
    %178 = vector.broadcast %cst_93 : f32 to vector<22x256xf32>
    %179 = arith.mulf %178, %177 : vector<22x256xf32>
    %cst_94 = arith.constant 0.707106769 : f32
    %180 = vector.broadcast %cst_94 : f32 to vector<22x256xf32>
    %181 = arith.mulf %177, %180 : vector<22x256xf32>
    %182 = math.erf %181 : vector<22x256xf32>
    %cst_95 = arith.constant 1.000000e+00 : f32
    %183 = vector.broadcast %cst_95 : f32 to vector<22x256xf32>
    %184 = arith.addf %183, %182 : vector<22x256xf32>
    %185 = arith.mulf %179, %184 : vector<22x256xf32>
    %c0_96 = arith.constant 0 : index
    %c0_97 = arith.constant 0 : index
    %c0_98 = arith.constant 0 : index
    %186 = vector.load %arg25[%c0_96, %c0_97, %c0_98] : memref<2x256x64xf32, #tpu.memory_space<vmem>>, vector<1x256x64xf32>
    %187 = vector.shape_cast %186 : vector<1x256x64xf32> to vector<256x64xf32>
    %c0_99 = arith.constant 0 : index
    %c0_100 = arith.constant 0 : index
    %c0_101 = arith.constant 0 : index
    %188 = vector.load %arg26[%c0_99, %c0_100, %c0_101] : memref<2x1x64xf32, #tpu.memory_space<vmem>>, vector<1x1x64xf32>
    %189 = vector.shape_cast %188 : vector<1x1x64xf32> to vector<1x64xf32>
    %cst_102 = arith.constant dense<0.000000e+00> : vector<22x64xf32>
    %190 = tpu.matmul %185, %187, %cst_102 {dimension_numbers = #tpu.dot_dimension_numbers<[1], [0], [0], [1], [0, 0, 1, 1], [], []>} : vector<22x256xf32>, vector<256x64xf32>, vector<22x64xf32> -> vector<22x64xf32>
    %191 = vector.broadcast %189 : vector<1x64xf32> to vector<22x64xf32>
    %192 = arith.addf %190, %191 : vector<22x64xf32>
    %193 = arith.addf %146, %192 : vector<22x64xf32>
    %c1 = arith.constant 1 : index
    %c0_103 = arith.constant 0 : index
    %c0_104 = arith.constant 0 : index
    %194 = vector.load %arg15[%c1, %c0_103, %c0_104] : memref<2x1x64xf32, #tpu.memory_space<vmem>>, vector<1x1x64xf32>
    %195 = vector.shape_cast %194 : vector<1x1x64xf32> to vector<1x64xf32>
    %c1_105 = arith.constant 1 : index
    %c0_106 = arith.constant 0 : index
    %c0_107 = arith.constant 0 : index
    %196 = vector.load %arg16[%c1_105, %c0_106, %c0_107] : memref<2x1x64xf32, #tpu.memory_space<vmem>>, vector<1x1x64xf32>
    %197 = vector.shape_cast %196 : vector<1x1x64xf32> to vector<1x64xf32>
    %cst_108 = arith.constant dense<0.000000e+00> : vector<22xf32>
    %198 = vector.multi_reduction <add>, %193, %cst_108 [1] : vector<22x64xf32> to vector<22xf32>
    %199 = vector.shape_cast %198 : vector<22xf32> to vector<22x1xf32>
    %cst_109 = arith.constant 6.400000e+01 : f32
    %200 = vector.broadcast %cst_109 : f32 to vector<22x1xf32>
    %201 = arith.divf %199, %200 : vector<22x1xf32>
    %202 = vector.broadcast %201 : vector<22x1xf32> to vector<22x64xf32>
    %203 = arith.subf %193, %202 : vector<22x64xf32>
    %204 = arith.mulf %203, %203 : vector<22x64xf32>
    %cst_110 = arith.constant dense<0.000000e+00> : vector<22xf32>
    %205 = vector.multi_reduction <add>, %204, %cst_110 [1] : vector<22x64xf32> to vector<22xf32>
    %206 = vector.shape_cast %205 : vector<22xf32> to vector<22x1xf32>
    %cst_111 = arith.constant 6.400000e+01 : f32
    %207 = vector.broadcast %cst_111 : f32 to vector<22x1xf32>
    %208 = arith.divf %206, %207 : vector<22x1xf32>
    %cst_112 = arith.constant 9.99999974E-6 : f32
    %209 = vector.broadcast %cst_112 : f32 to vector<22x1xf32>
    %210 = arith.addf %208, %209 : vector<22x1xf32>
    %211 = math.rsqrt %210 : vector<22x1xf32>
    %212 = vector.broadcast %211 : vector<22x1xf32> to vector<22x64xf32>
    %213 = arith.mulf %203, %212 : vector<22x64xf32>
    %214 = vector.broadcast %195 : vector<1x64xf32> to vector<22x64xf32>
    %215 = arith.mulf %213, %214 : vector<22x64xf32>
    %216 = vector.broadcast %197 : vector<1x64xf32> to vector<22x64xf32>
    %217 = arith.addf %215, %216 : vector<22x64xf32>
    %c1_113 = arith.constant 1 : index
    %c0_114 = arith.constant 0 : index
    %c0_115 = arith.constant 0 : index
    %218 = vector.load %arg17[%c1_113, %c0_114, %c0_115] : memref<2x64x192xf32, #tpu.memory_space<vmem>>, vector<1x64x192xf32>
    %219 = vector.shape_cast %218 : vector<1x64x192xf32> to vector<64x192xf32>
    %c1_116 = arith.constant 1 : index
    %c0_117 = arith.constant 0 : index
    %c0_118 = arith.constant 0 : index
    %220 = vector.load %arg18[%c1_116, %c0_117, %c0_118] : memref<2x1x192xf32, #tpu.memory_space<vmem>>, vector<1x1x192xf32>
    %221 = vector.shape_cast %220 : vector<1x1x192xf32> to vector<1x192xf32>
    %cst_119 = arith.constant dense<0.000000e+00> : vector<22x192xf32>
    %222 = tpu.matmul %217, %219, %cst_119 {dimension_numbers = #tpu.dot_dimension_numbers<[1], [0], [0], [1], [0, 0, 1, 1], [], []>} : vector<22x64xf32>, vector<64x192xf32>, vector<22x192xf32> -> vector<22x192xf32>
    %223 = vector.broadcast %221 : vector<1x192xf32> to vector<22x192xf32>
    %224 = arith.addf %222, %223 : vector<22x192xf32>
    %225 = vector.extract_strided_slice %224 {offsets = [0, 0], sizes = [22, 16], strides = [1, 1]} : vector<22x192xf32> to vector<22x16xf32>
    %226 = vector.extract_strided_slice %224 {offsets = [0, 64], sizes = [22, 16], strides = [1, 1]} : vector<22x192xf32> to vector<22x16xf32>
    %227 = vector.extract_strided_slice %224 {offsets = [0, 128], sizes = [22, 16], strides = [1, 1]} : vector<22x192xf32> to vector<22x16xf32>
    %cst_120 = arith.constant dense<0.000000e+00> : vector<22x22xf32>
    %228 = tpu.matmul %225, %226, %cst_120 {dimension_numbers = #tpu.dot_dimension_numbers<[1], [1], [0], [0], [0, 0, 1, 0], [], []>} : vector<22x16xf32>, vector<22x16xf32>, vector<22x22xf32> -> vector<22x22xf32>
    %cst_121 = arith.constant 2.500000e-01 : f32
    %229 = vector.broadcast %cst_121 : f32 to vector<22x22xf32>
    %230 = arith.mulf %228, %229 : vector<22x22xf32>
    %231 = arith.addf %230, %1 : vector<22x22xf32>
    %cst_122 = arith.constant dense<0xFF800000> : vector<22xf32>
    %232 = vector.multi_reduction <maximumf>, %231, %cst_122 [1] : vector<22x22xf32> to vector<22xf32>
    %233 = vector.shape_cast %232 : vector<22xf32> to vector<22x1xf32>
    %234 = vector.broadcast %233 : vector<22x1xf32> to vector<22x22xf32>
    %235 = arith.subf %231, %234 : vector<22x22xf32>
    %236 = math.exp %235 : vector<22x22xf32>
    %cst_123 = arith.constant dense<0.000000e+00> : vector<22xf32>
    %237 = vector.multi_reduction <add>, %236, %cst_123 [1] : vector<22x22xf32> to vector<22xf32>
    %238 = vector.shape_cast %237 : vector<22xf32> to vector<22x1xf32>
    %239 = tpu.reciprocal %238 {approx = true} : vector<22x1xf32> -> vector<22x1xf32>
    %240 = vector.broadcast %239 : vector<22x1xf32> to vector<22x22xf32>
    %241 = arith.mulf %236, %240 : vector<22x22xf32>
    %cst_124 = arith.constant dense<0.000000e+00> : vector<22x16xf32>
    %242 = tpu.matmul %241, %227, %cst_124 {dimension_numbers = #tpu.dot_dimension_numbers<[1], [0], [0], [1], [0, 0, 1, 1], [], []>} : vector<22x22xf32>, vector<22x16xf32>, vector<22x16xf32> -> vector<22x16xf32>
    %243 = vector.extract_strided_slice %224 {offsets = [0, 16], sizes = [22, 16], strides = [1, 1]} : vector<22x192xf32> to vector<22x16xf32>
    %244 = vector.extract_strided_slice %224 {offsets = [0, 80], sizes = [22, 16], strides = [1, 1]} : vector<22x192xf32> to vector<22x16xf32>
    %245 = vector.extract_strided_slice %224 {offsets = [0, 144], sizes = [22, 16], strides = [1, 1]} : vector<22x192xf32> to vector<22x16xf32>
    %cst_125 = arith.constant dense<0.000000e+00> : vector<22x22xf32>
    %246 = tpu.matmul %243, %244, %cst_125 {dimension_numbers = #tpu.dot_dimension_numbers<[1], [1], [0], [0], [0, 0, 1, 0], [], []>} : vector<22x16xf32>, vector<22x16xf32>, vector<22x22xf32> -> vector<22x22xf32>
    %cst_126 = arith.constant 2.500000e-01 : f32
    %247 = vector.broadcast %cst_126 : f32 to vector<22x22xf32>
    %248 = arith.mulf %246, %247 : vector<22x22xf32>
    %249 = arith.addf %248, %1 : vector<22x22xf32>
    %cst_127 = arith.constant dense<0xFF800000> : vector<22xf32>
    %250 = vector.multi_reduction <maximumf>, %249, %cst_127 [1] : vector<22x22xf32> to vector<22xf32>
    %251 = vector.shape_cast %250 : vector<22xf32> to vector<22x1xf32>
    %252 = vector.broadcast %251 : vector<22x1xf32> to vector<22x22xf32>
    %253 = arith.subf %249, %252 : vector<22x22xf32>
    %254 = math.exp %253 : vector<22x22xf32>
    %cst_128 = arith.constant dense<0.000000e+00> : vector<22xf32>
    %255 = vector.multi_reduction <add>, %254, %cst_128 [1] : vector<22x22xf32> to vector<22xf32>
    %256 = vector.shape_cast %255 : vector<22xf32> to vector<22x1xf32>
    %257 = tpu.reciprocal %256 {approx = true} : vector<22x1xf32> -> vector<22x1xf32>
    %258 = vector.broadcast %257 : vector<22x1xf32> to vector<22x22xf32>
    %259 = arith.mulf %254, %258 : vector<22x22xf32>
    %cst_129 = arith.constant dense<0.000000e+00> : vector<22x16xf32>
    %260 = tpu.matmul %259, %245, %cst_129 {dimension_numbers = #tpu.dot_dimension_numbers<[1], [0], [0], [1], [0, 0, 1, 1], [], []>} : vector<22x22xf32>, vector<22x16xf32>, vector<22x16xf32> -> vector<22x16xf32>
    %261 = vector.extract_strided_slice %224 {offsets = [0, 32], sizes = [22, 16], strides = [1, 1]} : vector<22x192xf32> to vector<22x16xf32>
    %262 = vector.extract_strided_slice %224 {offsets = [0, 96], sizes = [22, 16], strides = [1, 1]} : vector<22x192xf32> to vector<22x16xf32>
    %263 = vector.extract_strided_slice %224 {offsets = [0, 160], sizes = [22, 16], strides = [1, 1]} : vector<22x192xf32> to vector<22x16xf32>
    %cst_130 = arith.constant dense<0.000000e+00> : vector<22x22xf32>
    %264 = tpu.matmul %261, %262, %cst_130 {dimension_numbers = #tpu.dot_dimension_numbers<[1], [1], [0], [0], [0, 0, 1, 0], [], []>} : vector<22x16xf32>, vector<22x16xf32>, vector<22x22xf32> -> vector<22x22xf32>
    %cst_131 = arith.constant 2.500000e-01 : f32
    %265 = vector.broadcast %cst_131 : f32 to vector<22x22xf32>
    %266 = arith.mulf %264, %265 : vector<22x22xf32>
    %267 = arith.addf %266, %1 : vector<22x22xf32>
    %cst_132 = arith.constant dense<0xFF800000> : vector<22xf32>
    %268 = vector.multi_reduction <maximumf>, %267, %cst_132 [1] : vector<22x22xf32> to vector<22xf32>
    %269 = vector.shape_cast %268 : vector<22xf32> to vector<22x1xf32>
    %270 = vector.broadcast %269 : vector<22x1xf32> to vector<22x22xf32>
    %271 = arith.subf %267, %270 : vector<22x22xf32>
    %272 = math.exp %271 : vector<22x22xf32>
    %cst_133 = arith.constant dense<0.000000e+00> : vector<22xf32>
    %273 = vector.multi_reduction <add>, %272, %cst_133 [1] : vector<22x22xf32> to vector<22xf32>
    %274 = vector.shape_cast %273 : vector<22xf32> to vector<22x1xf32>
    %275 = tpu.reciprocal %274 {approx = true} : vector<22x1xf32> -> vector<22x1xf32>
    %276 = vector.broadcast %275 : vector<22x1xf32> to vector<22x22xf32>
    %277 = arith.mulf %272, %276 : vector<22x22xf32>
    %cst_134 = arith.constant dense<0.000000e+00> : vector<22x16xf32>
    %278 = tpu.matmul %277, %263, %cst_134 {dimension_numbers = #tpu.dot_dimension_numbers<[1], [0], [0], [1], [0, 0, 1, 1], [], []>} : vector<22x22xf32>, vector<22x16xf32>, vector<22x16xf32> -> vector<22x16xf32>
    %279 = vector.extract_strided_slice %224 {offsets = [0, 48], sizes = [22, 16], strides = [1, 1]} : vector<22x192xf32> to vector<22x16xf32>
    %280 = vector.extract_strided_slice %224 {offsets = [0, 112], sizes = [22, 16], strides = [1, 1]} : vector<22x192xf32> to vector<22x16xf32>
    %281 = vector.extract_strided_slice %224 {offsets = [0, 176], sizes = [22, 16], strides = [1, 1]} : vector<22x192xf32> to vector<22x16xf32>
    %cst_135 = arith.constant dense<0.000000e+00> : vector<22x22xf32>
    %282 = tpu.matmul %279, %280, %cst_135 {dimension_numbers = #tpu.dot_dimension_numbers<[1], [1], [0], [0], [0, 0, 1, 0], [], []>} : vector<22x16xf32>, vector<22x16xf32>, vector<22x22xf32> -> vector<22x22xf32>
    %cst_136 = arith.constant 2.500000e-01 : f32
    %283 = vector.broadcast %cst_136 : f32 to vector<22x22xf32>
    %284 = arith.mulf %282, %283 : vector<22x22xf32>
    %285 = arith.addf %284, %1 : vector<22x22xf32>
    %cst_137 = arith.constant dense<0xFF800000> : vector<22xf32>
    %286 = vector.multi_reduction <maximumf>, %285, %cst_137 [1] : vector<22x22xf32> to vector<22xf32>
    %287 = vector.shape_cast %286 : vector<22xf32> to vector<22x1xf32>
    %288 = vector.broadcast %287 : vector<22x1xf32> to vector<22x22xf32>
    %289 = arith.subf %285, %288 : vector<22x22xf32>
    %290 = math.exp %289 : vector<22x22xf32>
    %cst_138 = arith.constant dense<0.000000e+00> : vector<22xf32>
    %291 = vector.multi_reduction <add>, %290, %cst_138 [1] : vector<22x22xf32> to vector<22xf32>
    %292 = vector.shape_cast %291 : vector<22xf32> to vector<22x1xf32>
    %293 = tpu.reciprocal %292 {approx = true} : vector<22x1xf32> -> vector<22x1xf32>
    %294 = vector.broadcast %293 : vector<22x1xf32> to vector<22x22xf32>
    %295 = arith.mulf %290, %294 : vector<22x22xf32>
    %cst_139 = arith.constant dense<0.000000e+00> : vector<22x16xf32>
    %296 = tpu.matmul %295, %281, %cst_139 {dimension_numbers = #tpu.dot_dimension_numbers<[1], [0], [0], [1], [0, 0, 1, 1], [], []>} : vector<22x22xf32>, vector<22x16xf32>, vector<22x16xf32> -> vector<22x16xf32>
    %297 = tpu.concatenate %242, %260, %278, %296 in 1 : vector<22x16xf32>, vector<22x16xf32>, vector<22x16xf32>, vector<22x16xf32> -> vector<22x64xf32>
    %c1_140 = arith.constant 1 : index
    %c0_141 = arith.constant 0 : index
    %c0_142 = arith.constant 0 : index
    %298 = vector.load %arg19[%c1_140, %c0_141, %c0_142] : memref<2x64x64xf32, #tpu.memory_space<vmem>>, vector<1x64x64xf32>
    %299 = vector.shape_cast %298 : vector<1x64x64xf32> to vector<64x64xf32>
    %c1_143 = arith.constant 1 : index
    %c0_144 = arith.constant 0 : index
    %c0_145 = arith.constant 0 : index
    %300 = vector.load %arg20[%c1_143, %c0_144, %c0_145] : memref<2x1x64xf32, #tpu.memory_space<vmem>>, vector<1x1x64xf32>
    %301 = vector.shape_cast %300 : vector<1x1x64xf32> to vector<1x64xf32>
    %cst_146 = arith.constant dense<0.000000e+00> : vector<22x64xf32>
    %302 = tpu.matmul %297, %299, %cst_146 {dimension_numbers = #tpu.dot_dimension_numbers<[1], [0], [0], [1], [0, 0, 1, 1], [], []>} : vector<22x64xf32>, vector<64x64xf32>, vector<22x64xf32> -> vector<22x64xf32>
    %303 = vector.broadcast %301 : vector<1x64xf32> to vector<22x64xf32>
    %304 = arith.addf %302, %303 : vector<22x64xf32>
    %305 = arith.addf %193, %304 : vector<22x64xf32>
    %c1_147 = arith.constant 1 : index
    %c0_148 = arith.constant 0 : index
    %c0_149 = arith.constant 0 : index
    %306 = vector.load %arg21[%c1_147, %c0_148, %c0_149] : memref<2x1x64xf32, #tpu.memory_space<vmem>>, vector<1x1x64xf32>
    %307 = vector.shape_cast %306 : vector<1x1x64xf32> to vector<1x64xf32>
    %c1_150 = arith.constant 1 : index
    %c0_151 = arith.constant 0 : index
    %c0_152 = arith.constant 0 : index
    %308 = vector.load %arg22[%c1_150, %c0_151, %c0_152] : memref<2x1x64xf32, #tpu.memory_space<vmem>>, vector<1x1x64xf32>
    %309 = vector.shape_cast %308 : vector<1x1x64xf32> to vector<1x64xf32>
    %cst_153 = arith.constant dense<0.000000e+00> : vector<22xf32>
    %310 = vector.multi_reduction <add>, %305, %cst_153 [1] : vector<22x64xf32> to vector<22xf32>
    %311 = vector.shape_cast %310 : vector<22xf32> to vector<22x1xf32>
    %cst_154 = arith.constant 6.400000e+01 : f32
    %312 = vector.broadcast %cst_154 : f32 to vector<22x1xf32>
    %313 = arith.divf %311, %312 : vector<22x1xf32>
    %314 = vector.broadcast %313 : vector<22x1xf32> to vector<22x64xf32>
    %315 = arith.subf %305, %314 : vector<22x64xf32>
    %316 = arith.mulf %315, %315 : vector<22x64xf32>
    %cst_155 = arith.constant dense<0.000000e+00> : vector<22xf32>
    %317 = vector.multi_reduction <add>, %316, %cst_155 [1] : vector<22x64xf32> to vector<22xf32>
    %318 = vector.shape_cast %317 : vector<22xf32> to vector<22x1xf32>
    %cst_156 = arith.constant 6.400000e+01 : f32
    %319 = vector.broadcast %cst_156 : f32 to vector<22x1xf32>
    %320 = arith.divf %318, %319 : vector<22x1xf32>
    %cst_157 = arith.constant 9.99999974E-6 : f32
    %321 = vector.broadcast %cst_157 : f32 to vector<22x1xf32>
    %322 = arith.addf %320, %321 : vector<22x1xf32>
    %323 = math.rsqrt %322 : vector<22x1xf32>
    %324 = vector.broadcast %323 : vector<22x1xf32> to vector<22x64xf32>
    %325 = arith.mulf %315, %324 : vector<22x64xf32>
    %326 = vector.broadcast %307 : vector<1x64xf32> to vector<22x64xf32>
    %327 = arith.mulf %325, %326 : vector<22x64xf32>
    %328 = vector.broadcast %309 : vector<1x64xf32> to vector<22x64xf32>
    %329 = arith.addf %327, %328 : vector<22x64xf32>
    %c1_158 = arith.constant 1 : index
    %c0_159 = arith.constant 0 : index
    %c0_160 = arith.constant 0 : index
    %330 = vector.load %arg23[%c1_158, %c0_159, %c0_160] : memref<2x64x256xf32, #tpu.memory_space<vmem>>, vector<1x64x256xf32>
    %331 = vector.shape_cast %330 : vector<1x64x256xf32> to vector<64x256xf32>
    %c1_161 = arith.constant 1 : index
    %c0_162 = arith.constant 0 : index
    %c0_163 = arith.constant 0 : index
    %332 = vector.load %arg24[%c1_161, %c0_162, %c0_163] : memref<2x1x256xf32, #tpu.memory_space<vmem>>, vector<1x1x256xf32>
    %333 = vector.shape_cast %332 : vector<1x1x256xf32> to vector<1x256xf32>
    %cst_164 = arith.constant dense<0.000000e+00> : vector<22x256xf32>
    %334 = tpu.matmul %329, %331, %cst_164 {dimension_numbers = #tpu.dot_dimension_numbers<[1], [0], [0], [1], [0, 0, 1, 1], [], []>} : vector<22x64xf32>, vector<64x256xf32>, vector<22x256xf32> -> vector<22x256xf32>
    %335 = vector.broadcast %333 : vector<1x256xf32> to vector<22x256xf32>
    %336 = arith.addf %334, %335 : vector<22x256xf32>
    %cst_165 = arith.constant 5.000000e-01 : f32
    %337 = vector.broadcast %cst_165 : f32 to vector<22x256xf32>
    %338 = arith.mulf %337, %336 : vector<22x256xf32>
    %cst_166 = arith.constant 0.707106769 : f32
    %339 = vector.broadcast %cst_166 : f32 to vector<22x256xf32>
    %340 = arith.mulf %336, %339 : vector<22x256xf32>
    %341 = math.erf %340 : vector<22x256xf32>
    %cst_167 = arith.constant 1.000000e+00 : f32
    %342 = vector.broadcast %cst_167 : f32 to vector<22x256xf32>
    %343 = arith.addf %342, %341 : vector<22x256xf32>
    %344 = arith.mulf %338, %343 : vector<22x256xf32>
    %c1_168 = arith.constant 1 : index
    %c0_169 = arith.constant 0 : index
    %c0_170 = arith.constant 0 : index
    %345 = vector.load %arg25[%c1_168, %c0_169, %c0_170] : memref<2x256x64xf32, #tpu.memory_space<vmem>>, vector<1x256x64xf32>
    %346 = vector.shape_cast %345 : vector<1x256x64xf32> to vector<256x64xf32>
    %c1_171 = arith.constant 1 : index
    %c0_172 = arith.constant 0 : index
    %c0_173 = arith.constant 0 : index
    %347 = vector.load %arg26[%c1_171, %c0_172, %c0_173] : memref<2x1x64xf32, #tpu.memory_space<vmem>>, vector<1x1x64xf32>
    %348 = vector.shape_cast %347 : vector<1x1x64xf32> to vector<1x64xf32>
    %cst_174 = arith.constant dense<0.000000e+00> : vector<22x64xf32>
    %349 = tpu.matmul %344, %346, %cst_174 {dimension_numbers = #tpu.dot_dimension_numbers<[1], [0], [0], [1], [0, 0, 1, 1], [], []>} : vector<22x256xf32>, vector<256x64xf32>, vector<22x64xf32> -> vector<22x64xf32>
    %350 = vector.broadcast %348 : vector<1x64xf32> to vector<22x64xf32>
    %351 = arith.addf %349, %350 : vector<22x64xf32>
    %352 = arith.addf %305, %351 : vector<22x64xf32>
    %c0_175 = arith.constant 0 : index
    %c0_176 = arith.constant 0 : index
    %353 = vector.load %arg27[%c0_175, %c0_176] : memref<1x64xf32, #tpu.memory_space<vmem>>, vector<1x64xf32>
    %c0_177 = arith.constant 0 : index
    %c0_178 = arith.constant 0 : index
    %354 = vector.load %arg28[%c0_177, %c0_178] : memref<1x64xf32, #tpu.memory_space<vmem>>, vector<1x64xf32>
    %cst_179 = arith.constant dense<0.000000e+00> : vector<22xf32>
    %355 = vector.multi_reduction <add>, %352, %cst_179 [1] : vector<22x64xf32> to vector<22xf32>
    %356 = vector.shape_cast %355 : vector<22xf32> to vector<22x1xf32>
    %cst_180 = arith.constant 6.400000e+01 : f32
    %357 = vector.broadcast %cst_180 : f32 to vector<22x1xf32>
    %358 = arith.divf %356, %357 : vector<22x1xf32>
    %359 = vector.broadcast %358 : vector<22x1xf32> to vector<22x64xf32>
    %360 = arith.subf %352, %359 : vector<22x64xf32>
    %361 = arith.mulf %360, %360 : vector<22x64xf32>
    %cst_181 = arith.constant dense<0.000000e+00> : vector<22xf32>
    %362 = vector.multi_reduction <add>, %361, %cst_181 [1] : vector<22x64xf32> to vector<22xf32>
    %363 = vector.shape_cast %362 : vector<22xf32> to vector<22x1xf32>
    %cst_182 = arith.constant 6.400000e+01 : f32
    %364 = vector.broadcast %cst_182 : f32 to vector<22x1xf32>
    %365 = arith.divf %363, %364 : vector<22x1xf32>
    %cst_183 = arith.constant 9.99999974E-6 : f32
    %366 = vector.broadcast %cst_183 : f32 to vector<22x1xf32>
    %367 = arith.addf %365, %366 : vector<22x1xf32>
    %368 = math.rsqrt %367 : vector<22x1xf32>
    %369 = vector.broadcast %368 : vector<22x1xf32> to vector<22x64xf32>
    %370 = arith.mulf %360, %369 : vector<22x64xf32>
    %371 = vector.broadcast %353 : vector<1x64xf32> to vector<22x64xf32>
    %372 = arith.mulf %370, %371 : vector<22x64xf32>
    %373 = vector.broadcast %354 : vector<1x64xf32> to vector<22x64xf32>
    %374 = arith.addf %372, %373 : vector<22x64xf32>
    %375 = vector.extract_strided_slice %374 {offsets = [14, 0], sizes = [8, 64], strides = [1, 1]} : vector<22x64xf32> to vector<8x64xf32>
    %c0_184 = arith.constant 0 : index
    %c0_185 = arith.constant 0 : index
    %376 = vector.load %arg29[%c0_184, %c0_185] : memref<64x128xf32, #tpu.memory_space<vmem>>, vector<64x128xf32>
    %c0_186 = arith.constant 0 : index
    %c0_187 = arith.constant 0 : index
    %377 = vector.load %arg30[%c0_186, %c0_187] : memref<1x128xf32, #tpu.memory_space<vmem>>, vector<1x128xf32>
    %cst_188 = arith.constant dense<0.000000e+00> : vector<8x128xf32>
    %378 = tpu.matmul %375, %376, %cst_188 {dimension_numbers = #tpu.dot_dimension_numbers<[1], [0], [0], [1], [0, 0, 1, 1], [], []>} : vector<8x64xf32>, vector<64x128xf32>, vector<8x128xf32> -> vector<8x128xf32>
    %379 = vector.broadcast %377 : vector<1x128xf32> to vector<8x128xf32>
    %380 = arith.addf %378, %379 : vector<8x128xf32>
    %cst_189 = arith.constant 5.000000e-01 : f32
    %381 = vector.broadcast %cst_189 : f32 to vector<8x128xf32>
    %382 = arith.mulf %381, %380 : vector<8x128xf32>
    %cst_190 = arith.constant 0.707106769 : f32
    %383 = vector.broadcast %cst_190 : f32 to vector<8x128xf32>
    %384 = arith.mulf %380, %383 : vector<8x128xf32>
    %385 = math.erf %384 : vector<8x128xf32>
    %cst_191 = arith.constant 1.000000e+00 : f32
    %386 = vector.broadcast %cst_191 : f32 to vector<8x128xf32>
    %387 = arith.addf %386, %385 : vector<8x128xf32>
    %388 = arith.mulf %382, %387 : vector<8x128xf32>
    %c0_192 = arith.constant 0 : index
    %c0_193 = arith.constant 0 : index
    %389 = vector.load %arg31[%c0_192, %c0_193] : memref<128x8xf32, #tpu.memory_space<vmem>>, vector<128x8xf32>
    %c0_194 = arith.constant 0 : index
    %c0_195 = arith.constant 0 : index
    %390 = vector.load %arg32[%c0_194, %c0_195] : memref<1x8xf32, #tpu.memory_space<vmem>>, vector<1x8xf32>
    %cst_196 = arith.constant dense<0.000000e+00> : vector<8x8xf32>
    %391 = tpu.matmul %388, %389, %cst_196 {dimension_numbers = #tpu.dot_dimension_numbers<[1], [0], [0], [1], [0, 0, 1, 1], [], []>} : vector<8x128xf32>, vector<128x8xf32>, vector<8x8xf32> -> vector<8x8xf32>
    %392 = vector.broadcast %390 : vector<1x8xf32> to vector<8x8xf32>
    %393 = arith.addf %391, %392 : vector<8x8xf32>
    %c0_197 = arith.constant 0 : index
    %c0_198 = arith.constant 0 : index
    %394 = vector.load %arg33[%c0_197, %c0_198] : memref<8x8xf32, #tpu.memory_space<vmem>>, vector<8x8xf32>
    tpu.vector_store %arg33[%c0_197, %c0_198], %393 {strides = array<i32>} : memref<8x8xf32, #tpu.memory_space<vmem>>, vector<8x8xf32>,
    return
  }
  func.func @transform_0(%arg0: i32) -> (i32, i32) {
    %c0_i32 = arith.constant 0 : i32
    %c0_i32_0 = arith.constant 0 : i32
    %c0_i32_1 = arith.constant 0 : i32
    return %c0_i32, %c0_i32_0 : i32, i32
  }
  func.func @transform_1(%arg0: i32) -> (i32, i32) {
    %c0_i32 = arith.constant 0 : i32
    %c0_i32_0 = arith.constant 0 : i32
    %c0_i32_1 = arith.constant 0 : i32
    return %c0_i32, %c0_i32_0 : i32, i32
  }
  func.func @transform_2(%arg0: i32) -> (i32, i32) {
    %c0_i32 = arith.constant 0 : i32
    %c0_i32_0 = arith.constant 0 : i32
    %c0_i32_1 = arith.constant 0 : i32
    return %c0_i32, %c0_i32_0 : i32, i32
  }
  func.func @transform_3(%arg0: i32) -> (i32, i32) {
    %c0_i32 = arith.constant 0 : i32
    %c0_i32_0 = arith.constant 0 : i32
    %c0_i32_1 = arith.constant 0 : i32
    return %c0_i32, %c0_i32_0 : i32, i32
  }
  func.func @transform_4(%arg0: i32) -> (i32, i32) {
    %c0_i32 = arith.constant 0 : i32
    %c0_i32_0 = arith.constant 0 : i32
    %c0_i32_1 = arith.constant 0 : i32
    return %c0_i32, %c0_i32_0 : i32, i32
  }
  func.func @transform_5(%arg0: i32) -> (i32, i32) {
    %c0_i32 = arith.constant 0 : i32
    %c0_i32_0 = arith.constant 0 : i32
    %c0_i32_1 = arith.constant 0 : i32
    return %c0_i32, %c0_i32_0 : i32, i32
  }
  func.func @transform_6(%arg0: i32) -> (i32, i32) {
    %c0_i32 = arith.constant 0 : i32
    %c0_i32_0 = arith.constant 0 : i32
    %c0_i32_1 = arith.constant 0 : i32
    return %c0_i32, %c0_i32_0 : i32, i32
  }
  func.func @transform_7(%arg0: i32) -> (i32, i32) {
    %c0_i32 = arith.constant 0 : i32
    %c0_i32_0 = arith.constant 0 : i32
    %c0_i32_1 = arith.constant 0 : i32
    return %c0_i32, %c0_i32_0 : i32, i32
  }
  func.func @transform_8(%arg0: i32) -> (i32, i32) {
    %c0_i32 = arith.constant 0 : i32
    %c0_i32_0 = arith.constant 0 : i32
    %c0_i32_1 = arith.constant 0 : i32
    return %c0_i32, %c0_i32_0 : i32, i32
  }
  func.func @transform_9(%arg0: i32) -> (i32, i32) {
    %c0_i32 = arith.constant 0 : i32
    %c0_i32_0 = arith.constant 0 : i32
    %c0_i32_1 = arith.constant 0 : i32
    return %c0_i32, %c0_i32_0 : i32, i32
  }
  func.func @transform_10(%arg0: i32) -> (i32, i32) {
    %c0_i32 = arith.constant 0 : i32
    %c0_i32_0 = arith.constant 0 : i32
    %c0_i32_1 = arith.constant 0 : i32
    return %c0_i32, %c0_i32_0 : i32, i32
  }
  func.func @transform_11(%arg0: i32) -> (i32, i32) {
    %c0_i32 = arith.constant 0 : i32
    %c0_i32_0 = arith.constant 0 : i32
    %c0_i32_1 = arith.constant 0 : i32
    return %c0_i32, %c0_i32_0 : i32, i32
  }
  func.func @transform_12(%arg0: i32) -> (i32, i32) {
    %c0_i32 = arith.constant 0 : i32
    %c0_i32_0 = arith.constant 0 : i32
    %c0_i32_1 = arith.constant 0 : i32
    return %c0_i32, %c0_i32_0 : i32, i32
  }
  func.func @transform_13(%arg0: i32) -> (i32, i32) {
    %c0_i32 = arith.constant 0 : i32
    %c0_i32_0 = arith.constant 0 : i32
    %c0_i32_1 = arith.constant 0 : i32
    return %c0_i32, %c0_i32_0 : i32, i32
  }
  func.func @transform_14(%arg0: i32) -> (i32, i32, i32) {
    %c0_i32 = arith.constant 0 : i32
    %c0_i32_0 = arith.constant 0 : i32
    %c0_i32_1 = arith.constant 0 : i32
    %c0_i32_2 = arith.constant 0 : i32
    return %c0_i32, %c0_i32_0, %c0_i32_1 : i32, i32, i32
  }
  func.func @transform_15(%arg0: i32) -> (i32, i32, i32) {
    %c0_i32 = arith.constant 0 : i32
    %c0_i32_0 = arith.constant 0 : i32
    %c0_i32_1 = arith.constant 0 : i32
    %c0_i32_2 = arith.constant 0 : i32
    return %c0_i32, %c0_i32_0, %c0_i32_1 : i32, i32, i32
  }
  func.func @transform_16(%arg0: i32) -> (i32, i32, i32) {
    %c0_i32 = arith.constant 0 : i32
    %c0_i32_0 = arith.constant 0 : i32
    %c0_i32_1 = arith.constant 0 : i32
    %c0_i32_2 = arith.constant 0 : i32
    return %c0_i32, %c0_i32_0, %c0_i32_1 : i32, i32, i32
  }
  func.func @transform_17(%arg0: i32) -> (i32, i32, i32) {
    %c0_i32 = arith.constant 0 : i32
    %c0_i32_0 = arith.constant 0 : i32
    %c0_i32_1 = arith.constant 0 : i32
    %c0_i32_2 = arith.constant 0 : i32
    return %c0_i32, %c0_i32_0, %c0_i32_1 : i32, i32, i32
  }
  func.func @transform_18(%arg0: i32) -> (i32, i32, i32) {
    %c0_i32 = arith.constant 0 : i32
    %c0_i32_0 = arith.constant 0 : i32
    %c0_i32_1 = arith.constant 0 : i32
    %c0_i32_2 = arith.constant 0 : i32
    return %c0_i32, %c0_i32_0, %c0_i32_1 : i32, i32, i32
  }
  func.func @transform_19(%arg0: i32) -> (i32, i32, i32) {
    %c0_i32 = arith.constant 0 : i32
    %c0_i32_0 = arith.constant 0 : i32
    %c0_i32_1 = arith.constant 0 : i32
    %c0_i32_2 = arith.constant 0 : i32
    return %c0_i32, %c0_i32_0, %c0_i32_1 : i32, i32, i32
  }
  func.func @transform_20(%arg0: i32) -> (i32, i32, i32) {
    %c0_i32 = arith.constant 0 : i32
    %c0_i32_0 = arith.constant 0 : i32
    %c0_i32_1 = arith.constant 0 : i32
    %c0_i32_2 = arith.constant 0 : i32
    return %c0_i32, %c0_i32_0, %c0_i32_1 : i32, i32, i32
  }
  func.func @transform_21(%arg0: i32) -> (i32, i32, i32) {
    %c0_i32 = arith.constant 0 : i32
    %c0_i32_0 = arith.constant 0 : i32
    %c0_i32_1 = arith.constant 0 : i32
    %c0_i32_2 = arith.constant 0 : i32
    return %c0_i32, %c0_i32_0, %c0_i32_1 : i32, i32, i32
  }
  func.func @transform_22(%arg0: i32) -> (i32, i32, i32) {
    %c0_i32 = arith.constant 0 : i32
    %c0_i32_0 = arith.constant 0 : i32
    %c0_i32_1 = arith.constant 0 : i32
    %c0_i32_2 = arith.constant 0 : i32
    return %c0_i32, %c0_i32_0, %c0_i32_1 : i32, i32, i32
  }
  func.func @transform_23(%arg0: i32) -> (i32, i32, i32) {
    %c0_i32 = arith.constant 0 : i32
    %c0_i32_0 = arith.constant 0 : i32
    %c0_i32_1 = arith.constant 0 : i32
    %c0_i32_2 = arith.constant 0 : i32
    return %c0_i32, %c0_i32_0, %c0_i32_1 : i32, i32, i32
  }
  func.func @transform_24(%arg0: i32) -> (i32, i32, i32) {
    %c0_i32 = arith.constant 0 : i32
    %c0_i32_0 = arith.constant 0 : i32
    %c0_i32_1 = arith.constant 0 : i32
    %c0_i32_2 = arith.constant 0 : i32
    return %c0_i32, %c0_i32_0, %c0_i32_1 : i32, i32, i32
  }
  func.func @transform_25(%arg0: i32) -> (i32, i32, i32) {
    %c0_i32 = arith.constant 0 : i32
    %c0_i32_0 = arith.constant 0 : i32
    %c0_i32_1 = arith.constant 0 : i32
    %c0_i32_2 = arith.constant 0 : i32
    return %c0_i32, %c0_i32_0, %c0_i32_1 : i32, i32, i32
  }
  func.func @transform_26(%arg0: i32) -> (i32, i32) {
    %c0_i32 = arith.constant 0 : i32
    %c0_i32_0 = arith.constant 0 : i32
    %c0_i32_1 = arith.constant 0 : i32
    return %c0_i32, %c0_i32_0 : i32, i32
  }
  func.func @transform_27(%arg0: i32) -> (i32, i32) {
    %c0_i32 = arith.constant 0 : i32
    %c0_i32_0 = arith.constant 0 : i32
    %c0_i32_1 = arith.constant 0 : i32
    return %c0_i32, %c0_i32_0 : i32, i32
  }
  func.func @transform_28(%arg0: i32) -> (i32, i32) {
    %c0_i32 = arith.constant 0 : i32
    %c0_i32_0 = arith.constant 0 : i32
    %c0_i32_1 = arith.constant 0 : i32
    return %c0_i32, %c0_i32_0 : i32, i32
  }
  func.func @transform_29(%arg0: i32) -> (i32, i32) {
    %c0_i32 = arith.constant 0 : i32
    %c0_i32_0 = arith.constant 0 : i32
    %c0_i32_1 = arith.constant 0 : i32
    return %c0_i32, %c0_i32_0 : i32, i32
  }
  func.func @transform_30(%arg0: i32) -> (i32, i32) {
    %c0_i32 = arith.constant 0 : i32
    %c0_i32_0 = arith.constant 0 : i32
    %c0_i32_1 = arith.constant 0 : i32
    return %c0_i32, %c0_i32_0 : i32, i32
  }
  func.func @transform_31(%arg0: i32) -> (i32, i32) {
    %c0_i32 = arith.constant 0 : i32
    %c0_i32_0 = arith.constant 0 : i32
    %c0_i32_1 = arith.constant 0 : i32
    return %c0_i32, %c0_i32_0 : i32, i32
  }
  func.func @transform_32(%arg0: i32) -> (i32, i32) {
    %c0_i32 = arith.constant 0 : i32
    %c0_i32_0 = arith.constant 0 : i32
    %c0_i32_1 = arith.constant 0 : i32
    return %c0_i32, %c0_i32_0 : i32, i32
  }
}

</mosaic_0001>

<llo_original>
// kernel: tpu_custom_call.1
$region0: #{tpu_custom_call.1}
  #allocation0 [shape = 'u32[]', space=smem, size = 0x4, offset = 0x4, fixed_abs, tag = 'smem constant byte address 0x4 - core index']
  #allocation1 [shape = 'u32[144,128]{1,0:T(1,128)}', space=vmem, size = 0x12000, scoped, tag = 'internal scratch']
  %s0 = inlined_call_operand.smem [shape: u32[33], index: -1, kind: input, shape index: {}]
  %s1 = sld [smem:[%s0]]
  %s2 = scalar_lea.smem %s0, 1
  %s3 = sld [smem:[%s2]]
  %s4 = scalar_lea.smem %s0, 2
  %s5 = sld [smem:[%s4]]
  %s6 = scalar_lea.smem %s0, 3
  %s7 = sld [smem:[%s6]]
  %s8 = scalar_lea.smem %s0, 4
  %s9 = sld [smem:[%s8]]
  %s10 = scalar_lea.smem %s0, 5
  %s11 = sld [smem:[%s10]]
  %s12 = scalar_lea.smem %s0, 6
  %s13 = sld [smem:[%s12]]
  %s14 = scalar_lea.smem %s0, 7
  %s15 = sld [smem:[%s14]]
  %s16 = scalar_lea.smem %s0, 8
  %s17 = sld [smem:[%s16]]
  %s18 = scalar_lea.smem %s0, 9
  %s19 = sld [smem:[%s18]]
  %s20 = scalar_lea.smem %s0, 10
  %s21 = sld [smem:[%s20]]
  %s22 = scalar_lea.smem %s0, 11
  %s23 = sld [smem:[%s22]]
  %s24 = scalar_lea.smem %s0, 12
  %s25 = sld [smem:[%s24]]
  %s26 = scalar_lea.smem %s0, 13
  %s27 = sld [smem:[%s26]]
  %s28 = scalar_lea.smem %s0, 14
  %s29 = sld [smem:[%s28]]
  %s30 = scalar_lea.smem %s0, 15
  %s31 = sld [smem:[%s30]]
  %s32 = scalar_lea.smem %s0, 16
  %s33 = sld [smem:[%s32]]
  %s34 = scalar_lea.smem %s0, 17
  %s35 = sld [smem:[%s34]]
  %s36 = scalar_lea.smem %s0, 18
  %s37 = sld [smem:[%s36]]
  %s38 = scalar_lea.smem %s0, 19
  %s39 = sld [smem:[%s38]]
  %s40 = scalar_lea.smem %s0, 20
  %s41 = sld [smem:[%s40]]
  %s42 = scalar_lea.smem %s0, 21
  %s43 = sld [smem:[%s42]]
  %s44 = scalar_lea.smem %s0, 22
  %s45 = sld [smem:[%s44]]
  %s46 = scalar_lea.smem %s0, 23
  %s47 = sld [smem:[%s46]]
  %s48 = scalar_lea.smem %s0, 24
  %s49 = sld [smem:[%s48]]
  %s50 = scalar_lea.smem %s0, 25
  %s51 = sld [smem:[%s50]]
  %s52 = scalar_lea.smem %s0, 26
  %s53 = sld [smem:[%s52]]
  %s54 = scalar_lea.smem %s0, 27
  %s55 = sld [smem:[%s54]]
  %s56 = scalar_lea.smem %s0, 28
  %s57 = sld [smem:[%s56]]
  %s58 = scalar_lea.smem %s0, 29
  %s59 = sld [smem:[%s58]]
  %s60 = scalar_lea.smem %s0, 30
  %s61 = sld [smem:[%s60]]
  %s62 = scalar_lea.smem %s0, 31
  %s63 = sld [smem:[%s62]]
  %s64 = scalar_lea.smem %s0, 32
  %s65 = sld [smem:[%s64]]
  %s66 = sld [smem:[#allocation0]]
  $region138: #{tpu_custom_call.1} parent=0
    _
  %s68 = ssub.s32 1, %s66
  %s69 = scalar_select 0, %s68, %s66
  $region1: #{tpu_custom_call.1} parent=0
    #allocation2 [shape = 'u8[4096]{0}', space=vmem, size = 0x1000, scoped, tag = 'output window, operand 0, single buffered']
    #allocation3 [shape = 's32[1]{0}', space=sflag, size = 0x4, scoped, tag = 'scoped memory for tpu_custom_call.1']
    %70 = vsyncpa [#allocation3], 0
    // Predicated region
    $region2: #{tpu_custom_call.1} parent=1 // pred_check
      _
    $region3: #{tpu_custom_call.1} parent=1 // pred_check_branch
      %72 = sbr.rel (0) target = $region5
    $region4: #{tpu_custom_call.1} parent=1 // pred_region
      _
    $region5: #{tpu_custom_call.1} parent=1 // pred_fallthru
      _
    // Predicated region
    $region6: #{tpu_custom_call.1} parent=1 // pred_check
      _
    $region7: #{tpu_custom_call.1} parent=1 // pred_check_branch
      %74 = sbr.rel (0) target = $region9
    $region8: #{tpu_custom_call.1} parent=1 // pred_region
      _
    $region9: #{tpu_custom_call.1} parent=1 // pred_fallthru
      _
    // Predicated region
    $region10: #{tpu_custom_call.1} parent=1 // pred_check
      _
    $region11: #{tpu_custom_call.1} parent=1 // pred_check_branch
      %76 = sbr.rel (0) target = $region13
    $region12: #{tpu_custom_call.1} parent=1 // pred_region
      _
    $region13: #{tpu_custom_call.1} parent=1 // pred_fallthru
      _
    // Predicated region
    $region14: #{tpu_custom_call.1} parent=1 // pred_check
      _
    $region15: #{tpu_custom_call.1} parent=1 // pred_check_branch
      %78 = sbr.rel (0) target = $region17
    $region16: #{tpu_custom_call.1} parent=1 // pred_region
      _
    $region17: #{tpu_custom_call.1} parent=1 // pred_fallthru
      _
    // Predicated region
    $region18: #{tpu_custom_call.1} parent=1 // pred_check
      _
    $region19: #{tpu_custom_call.1} parent=1 // pred_check_branch
      %80 = sbr.rel (0) target = $region21
    $region20: #{tpu_custom_call.1} parent=1 // pred_region
      _
    $region21: #{tpu_custom_call.1} parent=1 // pred_fallthru
      _
    // Predicated region
    $region22: #{tpu_custom_call.1} parent=1 // pred_check
      _
    $region23: #{tpu_custom_call.1} parent=1 // pred_check_branch
      %82 = sbr.rel (0) target = $region25
    $region24: #{tpu_custom_call.1} parent=1 // pred_region
      _
    $region25: #{tpu_custom_call.1} parent=1 // pred_fallthru
      _
    // Predicated region
    $region26: #{tpu_custom_call.1} parent=1 // pred_check
      _
    $region27: #{tpu_custom_call.1} parent=1 // pred_check_branch
      %84 = sbr.rel (0) target = $region29
    $region28: #{tpu_custom_call.1} parent=1 // pred_region
      _
    $region29: #{tpu_custom_call.1} parent=1 // pred_fallthru
      _
    // Predicated region
    $region30: #{tpu_custom_call.1} parent=1 // pred_check
      _
    $region31: #{tpu_custom_call.1} parent=1 // pred_check_branch
      %86 = sbr.rel (0) target = $region33
    $region32: #{tpu_custom_call.1} parent=1 // pred_region
      _
    $region33: #{tpu_custom_call.1} parent=1 // pred_fallthru
      _
    // Predicated region
    $region34: #{tpu_custom_call.1} parent=1 // pred_check
      _
    $region35: #{tpu_custom_call.1} parent=1 // pred_check_branch
      %88 = sbr.rel (0) target = $region37
    $region36: #{tpu_custom_call.1} parent=1 // pred_region
      _
    $region37: #{tpu_custom_call.1} parent=1 // pred_fallthru
      _
    // Predicated region
    $region38: #{tpu_custom_call.1} parent=1 // pred_check
      _
    $region39: #{tpu_custom_call.1} parent=1 // pred_check_branch
      %90 = sbr.rel (0) target = $region41
    $region40: #{tpu_custom_call.1} parent=1 // pred_region
      _
    $region41: #{tpu_custom_call.1} parent=1 // pred_fallthru
      _
    // Predicated region
    $region42: #{tpu_custom_call.1} parent=1 // pred_check
      _
    $region43: #{tpu_custom_call.1} parent=1 // pred_check_branch
      %92 = sbr.rel (0) target = $region45
    $region44: #{tpu_custom_call.1} parent=1 // pred_region
      _
    $region45: #{tpu_custom_call.1} parent=1 // pred_fallthru
      _
    // Predicated region
    $region46: #{tpu_custom_call.1} parent=1 // pred_check
      _
    $region47: #{tpu_custom_call.1} parent=1 // pred_check_branch
      %94 = sbr.rel (0) target = $region49
    $region48: #{tpu_custom_call.1} parent=1 // pred_region
      _
    $region49: #{tpu_custom_call.1} parent=1 // pred_fallthru
      _
    // Predicated region
    $region50: #{tpu_custom_call.1} parent=1 // pred_check
      _
    $region51: #{tpu_custom_call.1} parent=1 // pred_check_branch
      %96 = sbr.rel (0) target = $region53
    $region52: #{tpu_custom_call.1} parent=1 // pred_region
      _
    $region53: #{tpu_custom_call.1} parent=1 // pred_fallthru
      _
    // Predicated region
    $region54: #{tpu_custom_call.1} parent=1 // pred_check
      _
    $region55: #{tpu_custom_call.1} parent=1 // pred_check_branch
      %98 = sbr.rel (0) target = $region57
    $region56: #{tpu_custom_call.1} parent=1 // pred_region
      _
    $region57: #{tpu_custom_call.1} parent=1 // pred_fallthru
      _
    // Predicated region
    $region58: #{tpu_custom_call.1} parent=1 // pred_check
      _
    $region59: #{tpu_custom_call.1} parent=1 // pred_check_branch
      %100 = sbr.rel (0) target = $region61
    $region60: #{tpu_custom_call.1} parent=1 // pred_region
      _
    $region61: #{tpu_custom_call.1} parent=1 // pred_fallthru
      _
    // Predicated region
    $region62: #{tpu_custom_call.1} parent=1 // pred_check
      _
    $region63: #{tpu_custom_call.1} parent=1 // pred_check_branch
      %102 = sbr.rel (0) target = $region65
    $region64: #{tpu_custom_call.1} parent=1 // pred_region
      _
    $region65: #{tpu_custom_call.1} parent=1 // pred_fallthru
      _
    // Predicated region
    $region66: #{tpu_custom_call.1} parent=1 // pred_check
      _
    $region67: #{tpu_custom_call.1} parent=1 // pred_check_branch
      %104 = sbr.rel (0) target = $region69
    $region68: #{tpu_custom_call.1} parent=1 // pred_region
      _
    $region69: #{tpu_custom_call.1} parent=1 // pred_fallthru
      _
    // Predicated region
    $region70: #{tpu_custom_call.1} parent=1 // pred_check
      _
    $region71: #{tpu_custom_call.1} parent=1 // pred_check_branch
      %106 = sbr.rel (0) target = $region73
    $region72: #{tpu_custom_call.1} parent=1 // pred_region
      _
    $region73: #{tpu_custom_call.1} parent=1 // pred_fallthru
      _
    // Predicated region
    $region74: #{tpu_custom_call.1} parent=1 // pred_check
      _
    $region75: #{tpu_custom_call.1} parent=1 // pred_check_branch
      %108 = sbr.rel (0) target = $region77
    $region76: #{tpu_custom_call.1} parent=1 // pred_region
      _
    $region77: #{tpu_custom_call.1} parent=1 // pred_fallthru
      _
    // Predicated region
    $region78: #{tpu_custom_call.1} parent=1 // pred_check
      _
    $region79: #{tpu_custom_call.1} parent=1 // pred_check_branch
      %110 = sbr.rel (0) target = $region81
    $region80: #{tpu_custom_call.1} parent=1 // pred_region
      _
    $region81: #{tpu_custom_call.1} parent=1 // pred_fallthru
      _
    // Predicated region
    $region82: #{tpu_custom_call.1} parent=1 // pred_check
      _
    $region83: #{tpu_custom_call.1} parent=1 // pred_check_branch
      %112 = sbr.rel (0) target = $region85
    $region84: #{tpu_custom_call.1} parent=1 // pred_region
      _
    $region85: #{tpu_custom_call.1} parent=1 // pred_fallthru
      _
    // Predicated region
    $region86: #{tpu_custom_call.1} parent=1 // pred_check
      _
    $region87: #{tpu_custom_call.1} parent=1 // pred_check_branch
      %114 = sbr.rel (0) target = $region89
    $region88: #{tpu_custom_call.1} parent=1 // pred_region
      _
    $region89: #{tpu_custom_call.1} parent=1 // pred_fallthru
      _
    // Predicated region
    $region90: #{tpu_custom_call.1} parent=1 // pred_check
      _
    $region91: #{tpu_custom_call.1} parent=1 // pred_check_branch
      %116 = sbr.rel (0) target = $region93
    $region92: #{tpu_custom_call.1} parent=1 // pred_region
      _
    $region93: #{tpu_custom_call.1} parent=1 // pred_fallthru
      _
    // Predicated region
    $region94: #{tpu_custom_call.1} parent=1 // pred_check
      _
    $region95: #{tpu_custom_call.1} parent=1 // pred_check_branch
      %118 = sbr.rel (0) target = $region97
    $region96: #{tpu_custom_call.1} parent=1 // pred_region
      _
    $region97: #{tpu_custom_call.1} parent=1 // pred_fallthru
      _
    // Predicated region
    $region98: #{tpu_custom_call.1} parent=1 // pred_check
      _
    $region99: #{tpu_custom_call.1} parent=1 // pred_check_branch
      %120 = sbr.rel (0) target = $region101
    $region100: #{tpu_custom_call.1} parent=1 // pred_region
      _
    $region101: #{tpu_custom_call.1} parent=1 // pred_fallthru
      _
    // Predicated region
    $region102: #{tpu_custom_call.1} parent=1 // pred_check
      _
    $region103: #{tpu_custom_call.1} parent=1 // pred_check_branch
      %122 = sbr.rel (0) target = $region105
    $region104: #{tpu_custom_call.1} parent=1 // pred_region
      _
    $region105: #{tpu_custom_call.1} parent=1 // pred_fallthru
      _
    // Predicated region
    $region106: #{tpu_custom_call.1} parent=1 // pred_check
      _
    $region107: #{tpu_custom_call.1} parent=1 // pred_check_branch
      %124 = sbr.rel (0) target = $region109
    $region108: #{tpu_custom_call.1} parent=1 // pred_region
      _
    $region109: #{tpu_custom_call.1} parent=1 // pred_fallthru
      _
    // Predicated region
    $region110: #{tpu_custom_call.1} parent=1 // pred_check
      _
    $region111: #{tpu_custom_call.1} parent=1 // pred_check_branch
      %126 = sbr.rel (0) target = $region113
    $region112: #{tpu_custom_call.1} parent=1 // pred_region
      _
    $region113: #{tpu_custom_call.1} parent=1 // pred_fallthru
      _
    // Predicated region
    $region114: #{tpu_custom_call.1} parent=1 // pred_check
      _
    $region115: #{tpu_custom_call.1} parent=1 // pred_check_branch
      %128 = sbr.rel (0) target = $region117
    $region116: #{tpu_custom_call.1} parent=1 // pred_region
      _
    $region117: #{tpu_custom_call.1} parent=1 // pred_fallthru
      _
    // Predicated region
    $region118: #{tpu_custom_call.1} parent=1 // pred_check
      _
    $region119: #{tpu_custom_call.1} parent=1 // pred_check_branch
      %130 = sbr.rel (0) target = $region121
    $region120: #{tpu_custom_call.1} parent=1 // pred_region
      _
    $region121: #{tpu_custom_call.1} parent=1 // pred_fallthru
      _
    // Predicated region
    $region122: #{tpu_custom_call.1} parent=1 // pred_check
      _
    $region123: #{tpu_custom_call.1} parent=1 // pred_check_branch
      %132 = sbr.rel (0) target = $region125
    $region124: #{tpu_custom_call.1} parent=1 // pred_region
      _
    $region125: #{tpu_custom_call.1} parent=1 // pred_fallthru
      _
    // Predicated region
    $region126: #{tpu_custom_call.1} parent=1 // pred_check
      _
    $region127: #{tpu_custom_call.1} parent=1 // pred_check_branch
      %134 = sbr.rel (0) target = $region129
    $region128: #{tpu_custom_call.1} parent=1 // pred_region
      _
    $region129: #{tpu_custom_call.1} parent=1 // pred_fallthru
      _
    %v135 = vld [vmem:[%s11] sm:$0xff]
    %v136 = vld [vmem:[%s11 + $0x8] sm:$0x3]
    %v137 = vld [vmem:[%s9] sm:$0xff]
    %v138 = vld [vmem:[%s9 + $0x8] sm:$0xff]
    %v139 = vld [vmem:[%s9 + $0x10] sm:$0x3f]
    %v140 = vld [vmem:[%s7] sm:$0x3]
    %v141 = vlog2.pop %v140
    %v142 = vmul.f32 %v141, 0.6931472
    %v143 = vmul.f32 %v142, 0.25
    %v144 = vld [vmem:[%s25] sm:$0x1]
    %146 = vset.pattern.permute.xlu0 0
    %147 = vperm.xlu0 %146, %v143
    %v148 = vpop.permute.xlu0 %147
    %v151 = vlaneseq
    %v152 = vshrl.u32 %v151, 7
    %v153 = vsub.s32 0, %v152
    %v154 = vrot.slane %v144, %v153
    %v156 = vmul.f32 %v148, %v154
    %v157 = vld [vmem:[%s27] sm:$0x1]
    %v159 = vlaneseq
    %v160 = vshrl.u32 %v159, 7
    %v161 = vsub.s32 0, %v160
    %v162 = vrot.slane %v157, %v161
    %v164 = vadd.f32 %v156, %v162
    %v165 = vld [vmem:[%s5] sm:$0x3]
    %v166 = vld [vmem:[%s21] sm:$0xff]
    %v167 = vld [vmem:[%s21 + $0x8] sm:$0xff]
    %v168 = vld [vmem:[%s23] sm:$0x1]
    %v170 = vlaneseq
    %v171 = vshrl.u32 %v170, 7
    %v172 = vsub.s32 0, %v171
    %v173 = vrot.slane %v168, %v172
    %vm175 = vcmask 130048
    %v177 = vsel %vm175, %v165, 0
    %179 = vmatprep.subr.mxu0 0.0
    %180 = vmatpush1.msra.mxu0 %v166
    %181 = vmatprep.subr.mxu0 0.0
    %182 = vmatpush1.msra.mxu0 %v167
    %183 = vmatprep.subr.mxu0 0.0
    %184 = vmatpush1.msra.mxu0 0.0
    %185 = vmatprep.subr.mxu0 0.0
    %186 = vmatpush1.msra.mxu0 0.0
    %187 = vmatprep.subr.mxu0 0.0
    %188 = vmatpush1.msra.mxu0 0.0
    %189 = vmatprep.subr.mxu0 0.0
    %190 = vmatpush1.msra.mxu0 0.0
    %191 = vmatprep.subr.mxu0 0.0
    %192 = vmatpush1.msra.mxu0 0.0
    %193 = vmatprep.subr.mxu0 0.0
    %194 = vmatpush1.msra.mxu0 0.0
    %195 = vmatprep.subr.mxu0 0.0
    %196 = vmatpush1.msra.mxu0 0.0
    %197 = vmatprep.subr.mxu0 0.0
    %198 = vmatpush1.msra.mxu0 0.0
    %199 = vmatprep.subr.mxu0 0.0
    %200 = vmatpush1.msra.mxu0 0.0
    %201 = vmatprep.subr.mxu0 0.0
    %202 = vmatpush1.msra.mxu0 0.0
    %203 = vmatprep.subr.mxu0 0.0
    %204 = vmatpush1.msra.mxu0 0.0
    %205 = vmatprep.subr.mxu0 0.0
    %206 = vmatpush1.msra.mxu0 0.0
    %207 = vmatprep.subr.mxu0 0.0
    %208 = vmatpush1.msra.mxu0 0.0
    %209 = vmatprep.subr.mxu0 0.0
    %210 = vmatpush1.msra.mxu0 0.0
    %211 = vmatprep.subr.mxu0 0.0
    %212 = vmatpush1.msra.mxu0 0.0
    %213 = vmatprep.subr.mxu0 0.0
    %214 = vmatpush1.msra.mxu0 0.0
    %215 = vmatprep.subr.mxu0 0.0
    %216 = vmatpush1.msra.mxu0 0.0
    %217 = vmatprep.subr.mxu0 0.0
    %218 = vmatpush1.msra.mxu0 0.0
    %219 = vmatprep.subr.mxu0 0.0
    %220 = vmatpush1.msra.mxu0 0.0
    %221 = vmatprep.subr.mxu0 0.0
    %222 = vmatpush1.msra.mxu0 0.0
    %223 = vmatprep.subr.mxu0 0.0
    %224 = vmatpush1.msra.mxu0 0.0
    %225 = vmatprep.subr.mxu0 0.0
    %226 = vmatpush1.msra.mxu0 0.0
    %227 = vmatprep.subr.mxu0 0.0
    %228 = vmatpush1.msra.mxu0 0.0
    %229 = vmatprep.subr.mxu0 0.0
    %230 = vmatpush1.msra.mxu0 0.0
    %231 = vmatprep.subr.mxu0 0.0
    %232 = vmatpush1.msra.mxu0 0.0
    %233 = vmatprep.subr.mxu0 0.0
    %234 = vmatpush1.msra.mxu0 0.0
    %235 = vmatprep.subr.mxu0 0.0
    %236 = vmatpush1.msra.mxu0 0.0
    %237 = vmatprep.subr.mxu0 0.0
    %238 = vmatpush1.msra.mxu0 0.0
    %239 = vmatprep.subr.mxu0 0.0
    %240 = vmatpush1.msra.mxu0 0.0
    %241 = vmatprep.subr.mxu0 0.0
    %242 = vmatpush1.msra.mxu0 0.0
    %243 = vmatprep.mubr.f32.mxu0 0.0
    %244 = vmatmul.mubr.f32.gmra.mrb[0].mxu0 %v177
    %v245 = vpop.f32.mrb[0].mxu0
    %v246 = vadd.f32 %v173, %v245
    %v247 = vpop.f32.mrb[0].mxu0
    %248 = vdwg.mxu0
    %v249 = vld [vmem:[%s1] sm:$0xff]
    %v250 = vld [vmem:[%s1 + $0x8] sm:$0x3]
    %v251 = vld [vmem:[%s13] sm:$0xff]
    %v252 = vld [vmem:[%s13 + $0x8] sm:$0xff]
    %v253 = vld [vmem:[%s15] sm:$0x1]
    %v255 = vlaneseq
    %v256 = vshrl.u32 %v255, 7
    %v257 = vsub.s32 0, %v256
    %v258 = vrot.slane %v253, %v257
    %v261 = vsel %vm175, %v249, 0
    %v264 = vsel %vm175, %v250, 0
    %266 = vmatprep.subr.mxu0 0.0
    %267 = vmatpush1.msra.mxu0 %v251
    %268 = vmatprep.subr.mxu0 0.0
    %269 = vmatpush1.msra.mxu0 %v252
    %270 = vmatprep.subr.mxu0 0.0
    %271 = vmatpush1.msra.mxu0 0.0
    %272 = vmatprep.subr.mxu0 0.0
    %273 = vmatpush1.msra.mxu0 0.0
    %274 = vmatprep.subr.mxu0 0.0
    %275 = vmatpush1.msra.mxu0 0.0
    %276 = vmatprep.subr.mxu0 0.0
    %277 = vmatpush1.msra.mxu0 0.0
    %278 = vmatprep.subr.mxu0 0.0
    %279 = vmatpush1.msra.mxu0 0.0
    %280 = vmatprep.subr.mxu0 0.0
    %281 = vmatpush1.msra.mxu0 0.0
    %282 = vmatprep.subr.mxu0 0.0
    %283 = vmatpush1.msra.mxu0 0.0
    %284 = vmatprep.subr.mxu0 0.0
    %285 = vmatpush1.msra.mxu0 0.0
    %286 = vmatprep.subr.mxu0 0.0
    %287 = vmatpush1.msra.mxu0 0.0
    %288 = vmatprep.subr.mxu0 0.0
    %289 = vmatpush1.msra.mxu0 0.0
    %290 = vmatprep.subr.mxu0 0.0
    %291 = vmatpush1.msra.mxu0 0.0
    %292 = vmatprep.subr.mxu0 0.0
    %293 = vmatpush1.msra.mxu0 0.0
    %294 = vmatprep.subr.mxu0 0.0
    %295 = vmatpush1.msra.mxu0 0.0
    %296 = vmatprep.subr.mxu0 0.0
    %297 = vmatpush1.msra.mxu0 0.0
    %298 = vmatprep.subr.mxu0 0.0
    %299 = vmatpush1.msra.mxu0 0.0
    %300 = vmatprep.subr.mxu0 0.0
    %301 = vmatpush1.msra.mxu0 0.0
    %302 = vmatprep.subr.mxu0 0.0
    %303 = vmatpush1.msra.mxu0 0.0
    %304 = vmatprep.subr.mxu0 0.0
    %305 = vmatpush1.msra.mxu0 0.0
    %306 = vmatprep.subr.mxu0 0.0
    %307 = vmatpush1.msra.mxu0 0.0
    %308 = vmatprep.subr.mxu0 0.0
    %309 = vmatpush1.msra.mxu0 0.0
    %310 = vmatprep.subr.mxu0 0.0
    %311 = vmatpush1.msra.mxu0 0.0
    %312 = vmatprep.subr.mxu0 0.0
    %313 = vmatpush1.msra.mxu0 0.0
    %314 = vmatprep.subr.mxu0 0.0
    %315 = vmatpush1.msra.mxu0 0.0
    %316 = vmatprep.subr.mxu0 0.0
    %317 = vmatpush1.msra.mxu0 0.0
    %318 = vmatprep.subr.mxu0 0.0
    %319 = vmatpush1.msra.mxu0 0.0
    %320 = vmatprep.subr.mxu0 0.0
    %321 = vmatpush1.msra.mxu0 0.0
    %322 = vmatprep.subr.mxu0 0.0
    %323 = vmatpush1.msra.mxu0 0.0
    %324 = vmatprep.subr.mxu0 0.0
    %325 = vmatpush1.msra.mxu0 0.0
    %326 = vmatprep.subr.mxu0 0.0
    %327 = vmatpush1.msra.mxu0 0.0
    %328 = vmatprep.subr.mxu0 0.0
    %329 = vmatpush1.msra.mxu0 0.0
    %330 = vmatprep.mubr.f32.mxu0 0.0
    %331 = vmatmul.mubr.f32.gmra.mrb[0].mxu0 %v261
    %v332 = vpop.f32.mrb[0].mxu0
    %v333 = vadd.f32 %v258, %v332
    %v334 = vpop.f32.mrb[0].mxu0
    %335 = vmatprep.mubr.f32.mxu0 0.0
    %336 = vmatmul.mubr.f32.gmra.mrb[0].mxu0 %v264
    %v337 = vpop.f32.mrb[0].mxu0
    %v338 = vadd.f32 %v258, %v337
    %v339 = vpop.f32.mrb[0].mxu0
    %340 = vdwg.mxu0
    %v341 = vadd.f32 %v333, %v135
    %v342 = vadd.f32 %v338, %v136
    %v343 = vld [vmem:[%s3] sm:$0xff]
    %v344 = vld [vmem:[%s17] sm:$0xff]
    %v345 = vld [vmem:[%s19] sm:$0x1]
    %v347 = vlaneseq
    %v348 = vshrl.u32 %v347, 7
    %v349 = vsub.s32 0, %v348
    %v350 = vrot.slane %v345, %v349
    %vm352 = vcmask 64512
    %v354 = vsel %vm352, %v343, 0
    %356 = vmatprep.subr.mxu0 0.0
    %357 = vmatpush1.msra.mxu0 %v344
    %358 = vmatprep.subr.mxu0 0.0
    %359 = vmatpush1.msra.mxu0 0.0
    %360 = vmatprep.subr.mxu0 0.0
    %361 = vmatpush1.msra.mxu0 0.0
    %362 = vmatprep.subr.mxu0 0.0
    %363 = vmatpush1.msra.mxu0 0.0
    %364 = vmatprep.subr.mxu0 0.0
    %365 = vmatpush1.msra.mxu0 0.0
    %366 = vmatprep.subr.mxu0 0.0
    %367 = vmatpush1.msra.mxu0 0.0
    %368 = vmatprep.subr.mxu0 0.0
    %369 = vmatpush1.msra.mxu0 0.0
    %370 = vmatprep.subr.mxu0 0.0
    %371 = vmatpush1.msra.mxu0 0.0
    %372 = vmatprep.subr.mxu0 0.0
    %373 = vmatpush1.msra.mxu0 0.0
    %374 = vmatprep.subr.mxu0 0.0
    %375 = vmatpush1.msra.mxu0 0.0
    %376 = vmatprep.subr.mxu0 0.0
    %377 = vmatpush1.msra.mxu0 0.0
    %378 = vmatprep.subr.mxu0 0.0
    %379 = vmatpush1.msra.mxu0 0.0
    %380 = vmatprep.subr.mxu0 0.0
    %381 = vmatpush1.msra.mxu0 0.0
    %382 = vmatprep.subr.mxu0 0.0
    %383 = vmatpush1.msra.mxu0 0.0
    %384 = vmatprep.subr.mxu0 0.0
    %385 = vmatpush1.msra.mxu0 0.0
    %386 = vmatprep.subr.mxu0 0.0
    %387 = vmatpush1.msra.mxu0 0.0
    %388 = vmatprep.subr.mxu0 0.0
    %389 = vmatpush1.msra.mxu0 0.0
    %390 = vmatprep.subr.mxu0 0.0
    %391 = vmatpush1.msra.mxu0 0.0
    %392 = vmatprep.subr.mxu0 0.0
    %393 = vmatpush1.msra.mxu0 0.0
    %394 = vmatprep.subr.mxu0 0.0
    %395 = vmatpush1.msra.mxu0 0.0
    %396 = vmatprep.subr.mxu0 0.0
    %397 = vmatpush1.msra.mxu0 0.0
    %398 = vmatprep.subr.mxu0 0.0
    %399 = vmatpush1.msra.mxu0 0.0
    %400 = vmatprep.subr.mxu0 0.0
    %401 = vmatpush1.msra.mxu0 0.0
    %402 = vmatprep.subr.mxu0 0.0
    %403 = vmatpush1.msra.mxu0 0.0
    %404 = vmatprep.subr.mxu0 0.0
    %405 = vmatpush1.msra.mxu0 0.0
    %406 = vmatprep.subr.mxu0 0.0
    %407 = vmatpush1.msra.mxu0 0.0
    %408 = vmatprep.subr.mxu0 0.0
    %409 = vmatpush1.msra.mxu0 0.0
    %410 = vmatprep.subr.mxu0 0.0
    %411 = vmatpush1.msra.mxu0 0.0
    %412 = vmatprep.subr.mxu0 0.0
    %413 = vmatpush1.msra.mxu0 0.0
    %414 = vmatprep.subr.mxu0 0.0
    %415 = vmatpush1.msra.mxu0 0.0
    %416 = vmatprep.subr.mxu0 0.0
    %417 = vmatpush1.msra.mxu0 0.0
    %418 = vmatprep.subr.mxu0 0.0
    %419 = vmatpush1.msra.mxu0 0.0
    %420 = vmatprep.mubr.f32.mxu0 0.0
    %421 = vmatmul.mubr.f32.gmra.mrb[0].mxu0 %v354
    %v422 = vpop.f32.mrb[0].mxu0
    %v423 = vadd.f32 %v350, %v422
    %v424 = vpop.f32.mrb[0].mxu0
    %425 = vdwg.mxu0
    %vm428 = vcmask 1045504
    %v429 = vrot.slane %v135, 2
    %v430 = vrot.slane %v136, 2
    %v431 = vsel %vm428, %v429, %v430
    %v433 = vadd.f32 %v423, %v431
    %v435 = vrot.slane %v246, 6
    %vm439 = vcmask 1043456
    %v440 = vrot.slane %v341, 4
    %v441 = vrot.slane %v342, 4
    %v442 = vsel %vm439, %v440, %v441
    %v446 = vrot.slane %v433, 2
    %vm448 = vcmask 1041408
    %v449 = vsel %vm448, %v164, %v435
    %v450 = vsel %vm439, %v449, %v440
    %v451 = vsel %vm428, %v442, %v446
    %v452 = vld [vmem:[%s29] sm:$0x1]
    %v453 = vld [vmem:[%s31] sm:$0x1]
    %vm454 = vcmask 523264
    %v455 = vsel %vm454, %v450, 0.0
    %456 = vadd.xlane.f32.xlu0 %v455
    %v457 = vpop.xlane.xlu0 %456
    %v458 = vsel %vm454, %v451, 0.0
    %459 = vadd.xlane.f32.xlu0 %v458
    %v460 = vpop.xlane.xlu0 %459
    %vm461 = vcmask 521216
    %v462 = vsel %vm461, %v446, 0.0
    %463 = vadd.xlane.f32.xlu0 %v462
    %v464 = vpop.xlane.xlu0 %463
    %v465 = vrcp.pop 64.0
    %v466 = vmul.f32 %v457, %v465
    %v467 = vmul.f32 %v460, %v465
    %v468 = vmul.f32 %v464, %v465
    %v469 = vsub.f32 %v450, %v466
    %v470 = vsub.f32 %v451, %v467
    %v471 = vsub.f32 %v446, %v468
    %v472 = vmul.f32 %v469, %v469
    %v473 = vmul.f32 %v470, %v470
    %v474 = vmul.f32 %v471, %v471
    %v475 = vsel %vm454, %v472, 0.0
    %476 = vadd.xlane.f32.xlu0 %v475
    %v477 = vpop.xlane.xlu0 %476
    %v478 = vsel %vm454, %v473, 0.0
    %479 = vadd.xlane.f32.xlu0 %v478
    %v480 = vpop.xlane.xlu0 %479
    %v481 = vsel %vm461, %v474, 0.0
    %482 = vadd.xlane.f32.xlu0 %v481
    %v483 = vpop.xlane.xlu0 %482
    %v484 = vmul.f32 %v477, %v465
    %v485 = vmul.f32 %v480, %v465
    %v486 = vmul.f32 %v483, %v465
    %v487 = vadd.f32 %v484, 1e-05
    %v488 = vadd.f32 %v485, 1e-05
    %v489 = vadd.f32 %v486, 1e-05
    %v490 = vrsqrt.pop %v487
    %v491 = vrsqrt.pop %v488
    %v492 = vrsqrt.pop %v489
    %v493 = vmul.f32 %v469, %v490
    %v494 = vmul.f32 %v470, %v491
    %v495 = vmul.f32 %v471, %v492
    %v497 = vlaneseq
    %v498 = vshrl.u32 %v497, 7
    %v499 = vsub.s32 0, %v498
    %v500 = vrot.slane %v452, %v499
    %v502 = vmul.f32 %v493, %v500
    %v503 = vmul.f32 %v494, %v500
    %v504 = vmul.f32 %v495, %v500
    %v506 = vlaneseq
    %v507 = vshrl.u32 %v506, 7
    %v508 = vsub.s32 0, %v507
    %v509 = vrot.slane %v453, %v508
    %v511 = vadd.f32 %v502, %v509
    %v512 = vadd.f32 %v503, %v509
    %v513 = vadd.f32 %v504, %v509
    %v514 = vld [vmem:[%s33] sm:$0xff]
    %v515 = vld [vmem:[%s33 + $0x8] sm:$0xff]
    %v516 = vld [vmem:[%s33 + $0x10] sm:$0xff]
    %v517 = vld [vmem:[%s33 + $0x18] sm:$0xff]
    %v518 = vld [vmem:[%s33 + $0x20] sm:$0xff]
    %v519 = vld [vmem:[%s33 + $0x28] sm:$0xff]
    %v520 = vld [vmem:[%s33 + $0x30] sm:$0xff]
    %v521 = vld [vmem:[%s33 + $0x38] sm:$0xff]
    %v522 = vld [vmem:[%s33 + $0x40] sm:$0xff]
    %v523 = vld [vmem:[%s33 + $0x48] sm:$0xff]
    %v524 = vld [vmem:[%s33 + $0x50] sm:$0xff]
    %v525 = vld [vmem:[%s33 + $0x58] sm:$0xff]
    %v526 = vld [vmem:[%s33 + $0x60] sm:$0xff]
    %v527 = vld [vmem:[%s33 + $0x68] sm:$0xff]
    %v528 = vld [vmem:[%s33 + $0x70] sm:$0xff]
    %v529 = vld [vmem:[%s33 + $0x78] sm:$0xff]
    %v530 = vld [vmem:[%s35] sm:$0x3]
    %v532 = vlaneseq
    %v533 = vshrl.u32 %v532, 7
    %v534 = vsub.s32 0, %v533
    %v535 = vrot.slane %v530, %v534
    %v536 = vlaneseq
    %v537 = vshrl.u32 %v536, 7
    %v538 = vsub.s32 1, %v537
    %v539 = vrot.slane %v530, %v538
    %v543 = vsel %vm454, %v511, 0
    %v546 = vsel %vm454, %v512, 0
    %v549 = vsel %vm454, %v513, 0
    %551 = vmatprep.subr.mxu0 %v515
    %552 = vmatpush1.msra.mxu0 %v514
    %553 = vmatprep.subr.mxu0 %v517
    %554 = vmatpush1.msra.mxu0 %v516
    %555 = vmatprep.subr.mxu0 %v519
    %556 = vmatpush1.msra.mxu0 %v518
    %557 = vmatprep.subr.mxu0 %v521
    %558 = vmatpush1.msra.mxu0 %v520
    %559 = vmatprep.subr.mxu0 %v523
    %560 = vmatpush1.msra.mxu0 %v522
    %561 = vmatprep.subr.mxu0 %v525
    %562 = vmatpush1.msra.mxu0 %v524
    %563 = vmatprep.subr.mxu0 %v527
    %564 = vmatpush1.msra.mxu0 %v526
    %565 = vmatprep.subr.mxu0 %v529
    %566 = vmatpush1.msra.mxu0 %v528
    %567 = vmatprep.subr.mxu0 0.0
    %568 = vmatpush1.msra.mxu0 0.0
    %569 = vmatprep.subr.mxu0 0.0
    %570 = vmatpush1.msra.mxu0 0.0
    %571 = vmatprep.subr.mxu0 0.0
    %572 = vmatpush1.msra.mxu0 0.0
    %573 = vmatprep.subr.mxu0 0.0
    %574 = vmatpush1.msra.mxu0 0.0
    %575 = vmatprep.subr.mxu0 0.0
    %576 = vmatpush1.msra.mxu0 0.0
    %577 = vmatprep.subr.mxu0 0.0
    %578 = vmatpush1.msra.mxu0 0.0
    %579 = vmatprep.subr.mxu0 0.0
    %580 = vmatpush1.msra.mxu0 0.0
    %581 = vmatprep.subr.mxu0 0.0
    %582 = vmatpush1.msra.mxu0 0.0
    %583 = vmatprep.subr.mxu0 0.0
    %584 = vmatpush1.msra.mxu0 0.0
    %585 = vmatprep.subr.mxu0 0.0
    %586 = vmatpush1.msra.mxu0 0.0
    %587 = vmatprep.subr.mxu0 0.0
    %588 = vmatpush1.msra.mxu0 0.0
    %589 = vmatprep.subr.mxu0 0.0
    %590 = vmatpush1.msra.mxu0 0.0
    %591 = vmatprep.subr.mxu0 0.0
    %592 = vmatpush1.msra.mxu0 0.0
    %593 = vmatprep.subr.mxu0 0.0
    %594 = vmatpush1.msra.mxu0 0.0
    %595 = vmatprep.subr.mxu0 0.0
    %596 = vmatpush1.msra.mxu0 0.0
    %597 = vmatprep.subr.mxu0 0.0
    %598 = vmatpush1.msra.mxu0 0.0
    %599 = vmatprep.subr.mxu0 0.0
    %600 = vmatpush1.msra.mxu0 0.0
    %601 = vmatprep.subr.mxu0 0.0
    %602 = vmatpush1.msra.mxu0 0.0
    %603 = vmatprep.subr.mxu0 0.0
    %604 = vmatpush1.msra.mxu0 0.0
    %605 = vmatprep.subr.mxu0 0.0
    %606 = vmatpush1.msra.mxu0 0.0
    %607 = vmatprep.subr.mxu0 0.0
    %608 = vmatpush1.msra.mxu0 0.0
    %609 = vmatprep.subr.mxu0 0.0
    %610 = vmatpush1.msra.mxu0 0.0
    %611 = vmatprep.subr.mxu0 0.0
    %612 = vmatpush1.msra.mxu0 0.0
    %613 = vmatprep.subr.mxu0 0.0
    %614 = vmatpush1.msra.mxu0 0.0
    %615 = vmatprep.mubr.f32.mxu0 0.0
    %616 = vmatmul.mubr.f32.gmra.mrb[0].mxu0 %v543
    %v617 = vpop.f32.mrb[0].mxu0
    %v618 = vadd.f32 %v535, %v617
    %v619 = vpop.f32.mrb[0].mxu0
    %v620 = vadd.f32 %v539, %v619
    %621 = vmatprep.mubr.f32.mxu0 0.0
    %622 = vmatmul.mubr.f32.gmra.mrb[0].mxu0 %v546
    %v623 = vpop.f32.mrb[0].mxu0
    %v624 = vadd.f32 %v535, %v623
    %v625 = vpop.f32.mrb[0].mxu0
    %v626 = vadd.f32 %v539, %v625
    %627 = vmatprep.mubr.f32.mxu0 0.0
    %628 = vmatmul.mubr.f32.gmra.mrb[0].mxu0 %v549
    %v629 = vpop.f32.mrb[0].mxu0
    %v630 = vadd.f32 %v535, %v629
    %v631 = vpop.f32.mrb[0].mxu0
    %v632 = vadd.f32 %v539, %v631
    %633 = vdwg.mxu0
    %637 = vrot.lane.b32.xlu0 %v618, 64
    %v638 = vpop.permute.xlu0 %637
    %639 = vrot.lane.b32.xlu0 %v624, 64
    %v640 = vpop.permute.xlu0 %639
    %641 = vrot.lane.b32.xlu0 %v630, 64
    %v642 = vpop.permute.xlu0 %641
    %v643 = vsel %vm175, %v618, 0
    %v645 = vsel %vm175, %v624, 0
    %v647 = vsel %vm175, %v630, 0
    %v649 = vsel %vm175, %v638, 0
    %v651 = vsel %vm175, %v640, 0
    %v653 = vsel %vm175, %v642, 0
    %655 = vmatprep.subr.mxu0 0.0
    %656 = vmatpush1.xpose.msra.mxu0 %v649
    %657 = vmatprep.subr.mxu0 0.0
    %658 = vmatpush1.xpose.msra.mxu0 %v651
    %659 = vmatprep.subr.mxu0 0.0
    %660 = vmatpush1.xpose.msra.mxu0 %v653
    %661 = vmatprep.subr.mxu0 0.0
    %662 = vmatpush1.xpose.msra.mxu0 0.0
    %663 = vmatprep.subr.mxu0 0.0
    %664 = vmatpush1.xpose.msra.mxu0 0.0
    %665 = vmatprep.subr.mxu0 0.0
    %666 = vmatpush1.xpose.msra.mxu0 0.0
    %667 = vmatprep.subr.mxu0 0.0
    %668 = vmatpush1.xpose.msra.mxu0 0.0
    %669 = vmatprep.subr.mxu0 0.0
    %670 = vmatpush1.xpose.msra.mxu0 0.0
    %671 = vmatprep.subr.mxu0 0.0
    %672 = vmatpush1.xpose.msra.mxu0 0.0
    %673 = vmatprep.subr.mxu0 0.0
    %674 = vmatpush1.xpose.msra.mxu0 0.0
    %675 = vmatprep.subr.mxu0 0.0
    %676 = vmatpush1.xpose.msra.mxu0 0.0
    %677 = vmatprep.subr.mxu0 0.0
    %678 = vmatpush1.xpose.msra.mxu0 0.0
    %679 = vmatprep.subr.mxu0 0.0
    %680 = vmatpush1.xpose.msra.mxu0 0.0
    %681 = vmatprep.subr.mxu0 0.0
    %682 = vmatpush1.xpose.msra.mxu0 0.0
    %683 = vmatprep.subr.mxu0 0.0
    %684 = vmatpush1.xpose.msra.mxu0 0.0
    %685 = vmatprep.subr.mxu0 0.0
    %686 = vmatpush1.xpose.msra.mxu0 0.0
    %687 = vmatprep.subr.mxu0 0.0
    %688 = vmatpush1.xpose.msra.mxu0 0.0
    %689 = vmatprep.subr.mxu0 0.0
    %690 = vmatpush1.xpose.msra.mxu0 0.0
    %691 = vmatprep.subr.mxu0 0.0
    %692 = vmatpush1.xpose.msra.mxu0 0.0
    %693 = vmatprep.subr.mxu0 0.0
    %694 = vmatpush1.xpose.msra.mxu0 0.0
    %695 = vmatprep.subr.mxu0 0.0
    %696 = vmatpush1.xpose.msra.mxu0 0.0
    %697 = vmatprep.subr.mxu0 0.0
    %698 = vmatpush1.xpose.msra.mxu0 0.0
    %699 = vmatprep.subr.mxu0 0.0
    %700 = vmatpush1.xpose.msra.mxu0 0.0
    %701 = vmatprep.subr.mxu0 0.0
    %702 = vmatpush1.xpose.msra.mxu0 0.0
    %703 = vmatprep.subr.mxu0 0.0
    %704 = vmatpush1.xpose.msra.mxu0 0.0
    %705 = vmatprep.subr.mxu0 0.0
    %706 = vmatpush1.xpose.msra.mxu0 0.0
    %707 = vmatprep.subr.mxu0 0.0
    %708 = vmatpush1.xpose.msra.mxu0 0.0
    %709 = vmatprep.subr.mxu0 0.0
    %710 = vmatpush1.xpose.msra.mxu0 0.0
    %711 = vmatprep.subr.mxu0 0.0
    %712 = vmatpush1.xpose.msra.mxu0 0.0
    %713 = vmatprep.subr.mxu0 0.0
    %714 = vmatpush1.xpose.msra.mxu0 0.0
    %715 = vmatprep.subr.mxu0 0.0
    %716 = vmatpush1.xpose.msra.mxu0 0.0
    %717 = vmatprep.subr.mxu0 0.0
    %718 = vmatpush1.xpose.msra.mxu0 0.0
    %719 = vmatprep.mubr.f32.mxu0 0.0
    %720 = vmatmul.mubr.f32.gmra.mrb[0].mxu0 %v643
    %v721 = vpop.f32.mrb[0].mxu0
    %v722 = vadd.f32 0.0, %v721
    %v723 = vpop.f32.mrb[0].mxu0
    %724 = vmatprep.mubr.f32.mxu0 0.0
    %725 = vmatmul.mubr.f32.gmra.mrb[0].mxu0 %v645
    %v726 = vpop.f32.mrb[0].mxu0
    %v727 = vadd.f32 0.0, %v726
    %v728 = vpop.f32.mrb[0].mxu0
    %729 = vmatprep.mubr.f32.mxu0 0.0
    %730 = vmatmul.mubr.f32.gmra.mrb[0].mxu0 %v647
    %v731 = vpop.f32.mrb[0].mxu0
    %v732 = vadd.f32 0.0, %v731
    %v733 = vpop.f32.mrb[0].mxu0
    %734 = vdwg.mxu0
    %v735 = vmul.f32 %v722, 0.25
    %v736 = vmul.f32 %v727, 0.25
    %v737 = vmul.f32 %v732, 0.25
    %v738 = vadd.f32 %v735, %v137
    %v739 = vadd.f32 %v736, %v138
    %v740 = vadd.f32 %v737, %v139
    %vm741 = vcmask 179200
    %v742 = vsel %vm741, %v738, -inf
    %743 = vmax.xlane.f32.xlu0 %v742
    %v744 = vpop.xlane.xlu0 %743
    %v745 = vsel %vm741, %v739, -inf
    %746 = vmax.xlane.f32.xlu0 %v745
    %v747 = vpop.xlane.xlu0 %746
    %vm748 = vcmask 177152
    %v749 = vsel %vm748, %v740, -inf
    %750 = vmax.xlane.f32.xlu0 %v749
    %v751 = vpop.xlane.xlu0 %750
    %v752 = vsub.f32 %v738, %v744
    %v753 = vsub.f32 %v739, %v747
    %v754 = vsub.f32 %v740, %v751
    %v755 = vmul.f32 %v752, 1.442695
    %v756 = vpow.pop %v755
    %v757 = vmul.f32 %v753, 1.442695
    %v758 = vpow.pop %v757
    %v759 = vmul.f32 %v754, 1.442695
    %v760 = vpow.pop %v759
    %v761 = vsel %vm741, %v756, 0.0
    %762 = vadd.xlane.f32.xlu0 %v761
    %v763 = vpop.xlane.xlu0 %762
    %v764 = vsel %vm741, %v758, 0.0
    %765 = vadd.xlane.f32.xlu0 %v764
    %v766 = vpop.xlane.xlu0 %765
    %v767 = vsel %vm748, %v760, 0.0
    %768 = vadd.xlane.f32.xlu0 %v767
    %v769 = vpop.xlane.xlu0 %768
    %v770 = vrcp.pop %v763
    %v771 = vrcp.pop %v766
    %v772 = vrcp.pop %v769
    %v773 = vmul.f32 %v756, %v770
    %v774 = vmul.f32 %v758, %v771
    %v775 = vmul.f32 %v760, %v772
    %v777 = vsel %vm741, %v773, 0
    %v780 = vsel %vm741, %v774, 0
    %v783 = vsel %vm741, %v775, 0
    %v786 = vsel %vm428, %v632, 0
    %788 = vmatprep.subr.mxu0 0.0
    %789 = vmatpush1.msra.mxu0 %v620
    %790 = vmatprep.subr.mxu0 0.0
    %791 = vmatpush1.msra.mxu0 %v626
    %792 = vmatprep.subr.mxu0 0.0
    %793 = vmatpush1.msra.mxu0 %v786
    %794 = vmatprep.subr.mxu0 0.0
    %795 = vmatpush1.msra.mxu0 0.0
    %796 = vmatprep.subr.mxu0 0.0
    %797 = vmatpush1.msra.mxu0 0.0
    %798 = vmatprep.subr.mxu0 0.0
    %799 = vmatpush1.msra.mxu0 0.0
    %800 = vmatprep.subr.mxu0 0.0
    %801 = vmatpush1.msra.mxu0 0.0
    %802 = vmatprep.subr.mxu0 0.0
    %803 = vmatpush1.msra.mxu0 0.0
    %804 = vmatprep.subr.mxu0 0.0
    %805 = vmatpush1.msra.mxu0 0.0
    %806 = vmatprep.subr.mxu0 0.0
    %807 = vmatpush1.msra.mxu0 0.0
    %808 = vmatprep.subr.mxu0 0.0
    %809 = vmatpush1.msra.mxu0 0.0
    %810 = vmatprep.subr.mxu0 0.0
    %811 = vmatpush1.msra.mxu0 0.0
    %812 = vmatprep.subr.mxu0 0.0
    %813 = vmatpush1.msra.mxu0 0.0
    %814 = vmatprep.subr.mxu0 0.0
    %815 = vmatpush1.msra.mxu0 0.0
    %816 = vmatprep.subr.mxu0 0.0
    %817 = vmatpush1.msra.mxu0 0.0
    %818 = vmatprep.subr.mxu0 0.0
    %819 = vmatpush1.msra.mxu0 0.0
    %820 = vmatprep.subr.mxu0 0.0
    %821 = vmatpush1.msra.mxu0 0.0
    %822 = vmatprep.subr.mxu0 0.0
    %823 = vmatpush1.msra.mxu0 0.0
    %824 = vmatprep.subr.mxu0 0.0
    %825 = vmatpush1.msra.mxu0 0.0
    %826 = vmatprep.subr.mxu0 0.0
    %827 = vmatpush1.msra.mxu0 0.0
    %828 = vmatprep.subr.mxu0 0.0
    %829 = vmatpush1.msra.mxu0 0.0
    %830 = vmatprep.subr.mxu0 0.0
    %831 = vmatpush1.msra.mxu0 0.0
    %832 = vmatprep.subr.mxu0 0.0
    %833 = vmatpush1.msra.mxu0 0.0
    %834 = vmatprep.subr.mxu0 0.0
    %835 = vmatpush1.msra.mxu0 0.0
    %836 = vmatprep.subr.mxu0 0.0
    %837 = vmatpush1.msra.mxu0 0.0
    %838 = vmatprep.subr.mxu0 0.0
    %839 = vmatpush1.msra.mxu0 0.0
    %840 = vmatprep.subr.mxu0 0.0
    %841 = vmatpush1.msra.mxu0 0.0
    %842 = vmatprep.subr.mxu0 0.0
    %843 = vmatpush1.msra.mxu0 0.0
    %844 = vmatprep.subr.mxu0 0.0
    %845 = vmatpush1.msra.mxu0 0.0
    %846 = vmatprep.subr.mxu0 0.0
    %847 = vmatpush1.msra.mxu0 0.0
    %848 = vmatprep.subr.mxu0 0.0
    %849 = vmatpush1.msra.mxu0 0.0
    %850 = vmatprep.subr.mxu0 0.0
    %851 = vmatpush1.msra.mxu0 0.0
    %852 = vmatprep.mubr.f32.mxu0 0.0
    %853 = vmatmul.mubr.f32.gmra.mrb[0].mxu0 %v777
    %v854 = vpop.f32.mrb[0].mxu0
    %v855 = vadd.f32 0.0, %v854
    %v856 = vpop.f32.mrb[0].mxu0
    %857 = vmatprep.mubr.f32.mxu0 0.0
    %858 = vmatmul.mubr.f32.gmra.mrb[0].mxu0 %v780
    %v859 = vpop.f32.mrb[0].mxu0
    %v860 = vadd.f32 0.0, %v859
    %v861 = vpop.f32.mrb[0].mxu0
    %862 = vmatprep.mubr.f32.mxu0 0.0
    %863 = vmatmul.mubr.f32.gmra.mrb[0].mxu0 %v783
    %v864 = vpop.f32.mrb[0].mxu0
    %v865 = vadd.f32 0.0, %v864
    %v866 = vpop.f32.mrb[0].mxu0
    %867 = vdwg.mxu0
    %868 = vrot.lane.b32.xlu0 %v618, 112
    %v869 = vpop.permute.xlu0 %868
    %870 = vrot.lane.b32.xlu0 %v624, 112
    %v871 = vpop.permute.xlu0 %870
    %872 = vrot.lane.b32.xlu0 %v630, 112
    %v873 = vpop.permute.xlu0 %872
    %874 = vrot.lane.b32.xlu0 %v618, 48
    %v875 = vpop.permute.xlu0 %874
    %876 = vrot.lane.b32.xlu0 %v624, 48
    %v877 = vpop.permute.xlu0 %876
    %878 = vrot.lane.b32.xlu0 %v630, 48
    %v879 = vpop.permute.xlu0 %878
    %v880 = vsel %vm175, %v869, 0
    %v882 = vsel %vm175, %v871, 0
    %v884 = vsel %vm175, %v873, 0
    %v886 = vsel %vm175, %v875, 0
    %v888 = vsel %vm175, %v877, 0
    %v890 = vsel %vm175, %v879, 0
    %892 = vmatprep.subr.mxu0 0.0
    %893 = vmatpush1.xpose.msra.mxu0 %v886
    %894 = vmatprep.subr.mxu0 0.0
    %895 = vmatpush1.xpose.msra.mxu0 %v888
    %896 = vmatprep.subr.mxu0 0.0
    %897 = vmatpush1.xpose.msra.mxu0 %v890
    %898 = vmatprep.subr.mxu0 0.0
    %899 = vmatpush1.xpose.msra.mxu0 0.0
    %900 = vmatprep.subr.mxu0 0.0
    %901 = vmatpush1.xpose.msra.mxu0 0.0
    %902 = vmatprep.subr.mxu0 0.0
    %903 = vmatpush1.xpose.msra.mxu0 0.0
    %904 = vmatprep.subr.mxu0 0.0
    %905 = vmatpush1.xpose.msra.mxu0 0.0
    %906 = vmatprep.subr.mxu0 0.0
    %907 = vmatpush1.xpose.msra.mxu0 0.0
    %908 = vmatprep.subr.mxu0 0.0
    %909 = vmatpush1.xpose.msra.mxu0 0.0
    %910 = vmatprep.subr.mxu0 0.0
    %911 = vmatpush1.xpose.msra.mxu0 0.0
    %912 = vmatprep.subr.mxu0 0.0
    %913 = vmatpush1.xpose.msra.mxu0 0.0
    %914 = vmatprep.subr.mxu0 0.0
    %915 = vmatpush1.xpose.msra.mxu0 0.0
    %916 = vmatprep.subr.mxu0 0.0
    %917 = vmatpush1.xpose.msra.mxu0 0.0
    %918 = vmatprep.subr.mxu0 0.0
    %919 = vmatpush1.xpose.msra.mxu0 0.0
    %920 = vmatprep.subr.mxu0 0.0
    %921 = vmatpush1.xpose.msra.mxu0 0.0
    %922 = vmatprep.subr.mxu0 0.0
    %923 = vmatpush1.xpose.msra.mxu0 0.0
    %924 = vmatprep.subr.mxu0 0.0
    %925 = vmatpush1.xpose.msra.mxu0 0.0
    %926 = vmatprep.subr.mxu0 0.0
    %927 = vmatpush1.xpose.msra.mxu0 0.0
    %928 = vmatprep.subr.mxu0 0.0
    %929 = vmatpush1.xpose.msra.mxu0 0.0
    %930 = vmatprep.subr.mxu0 0.0
    %931 = vmatpush1.xpose.msra.mxu0 0.0
    %932 = vmatprep.subr.mxu0 0.0
    %933 = vmatpush1.xpose.msra.mxu0 0.0
    %934 = vmatprep.subr.mxu0 0.0
    %935 = vmatpush1.xpose.msra.mxu0 0.0
    %936 = vmatprep.subr.mxu0 0.0
    %937 = vmatpush1.xpose.msra.mxu0 0.0
    %938 = vmatprep.subr.mxu0 0.0
    %939 = vmatpush1.xpose.msra.mxu0 0.0
    %940 = vmatprep.subr.mxu0 0.0
    %941 = vmatpush1.xpose.msra.mxu0 0.0
    %942 = vmatprep.subr.mxu0 0.0
    %943 = vmatpush1.xpose.msra.mxu0 0.0
    %944 = vmatprep.subr.mxu0 0.0
    %945 = vmatpush1.xpose.msra.mxu0 0.0
    %946 = vmatprep.subr.mxu0 0.0
    %947 = vmatpush1.xpose.msra.mxu0 0.0
    %948 = vmatprep.subr.mxu0 0.0
    %949 = vmatpush1.xpose.msra.mxu0 0.0
    %950 = vmatprep.subr.mxu0 0.0
    %951 = vmatpush1.xpose.msra.mxu0 0.0
    %952 = vmatprep.subr.mxu0 0.0
    %953 = vmatpush1.xpose.msra.mxu0 0.0
    %954 = vmatprep.subr.mxu0 0.0
    %955 = vmatpush1.xpose.msra.mxu0 0.0
    %956 = vmatprep.mubr.f32.mxu0 0.0
    %957 = vmatmul.mubr.f32.gmra.mrb[0].mxu0 %v880
    %v958 = vpop.f32.mrb[0].mxu0
    %v959 = vadd.f32 0.0, %v958
    %v960 = vpop.f32.mrb[0].mxu0
    %961 = vmatprep.mubr.f32.mxu0 0.0
    %962 = vmatmul.mubr.f32.gmra.mrb[0].mxu0 %v882
    %v963 = vpop.f32.mrb[0].mxu0
    %v964 = vadd.f32 0.0, %v963
    %v965 = vpop.f32.mrb[0].mxu0
    %966 = vmatprep.mubr.f32.mxu0 0.0
    %967 = vmatmul.mubr.f32.gmra.mrb[0].mxu0 %v884
    %v968 = vpop.f32.mrb[0].mxu0
    %v969 = vadd.f32 0.0, %v968
    %v970 = vpop.f32.mrb[0].mxu0
    %971 = vdwg.mxu0
    %v972 = vmul.f32 %v959, 0.25
    %v973 = vmul.f32 %v964, 0.25
    %v974 = vmul.f32 %v969, 0.25
    %v975 = vadd.f32 %v972, %v137
    %v976 = vadd.f32 %v973, %v138
    %v977 = vadd.f32 %v974, %v139
    %v978 = vsel %vm741, %v975, -inf
    %979 = vmax.xlane.f32.xlu0 %v978
    %v980 = vpop.xlane.xlu0 %979
    %v981 = vsel %vm741, %v976, -inf
    %982 = vmax.xlane.f32.xlu0 %v981
    %v983 = vpop.xlane.xlu0 %982
    %v984 = vsel %vm748, %v977, -inf
    %985 = vmax.xlane.f32.xlu0 %v984
    %v986 = vpop.xlane.xlu0 %985
    %v987 = vsub.f32 %v975, %v980
    %v988 = vsub.f32 %v976, %v983
    %v989 = vsub.f32 %v977, %v986
    %v990 = vmul.f32 %v987, 1.442695
    %v991 = vpow.pop %v990
    %v992 = vmul.f32 %v988, 1.442695
    %v993 = vpow.pop %v992
    %v994 = vmul.f32 %v989, 1.442695
    %v995 = vpow.pop %v994
    %v996 = vsel %vm741, %v991, 0.0
    %997 = vadd.xlane.f32.xlu0 %v996
    %v998 = vpop.xlane.xlu0 %997
    %v999 = vsel %vm741, %v993, 0.0
    %1000 = vadd.xlane.f32.xlu0 %v999
    %v1001 = vpop.xlane.xlu0 %1000
    %v1002 = vsel %vm748, %v995, 0.0
    %1003 = vadd.xlane.f32.xlu0 %v1002
    %v1004 = vpop.xlane.xlu0 %1003
    %v1005 = vrcp.pop %v998
    %v1006 = vrcp.pop %v1001
    %v1007 = vrcp.pop %v1004
    %v1008 = vmul.f32 %v991, %v1005
    %v1009 = vmul.f32 %v993, %v1006
    %v1010 = vmul.f32 %v995, %v1007
    %1013 = vrot.lane.b32.xlu0 %v620, 112
    %v1014 = vpop.permute.xlu0 %1013
    %1015 = vrot.lane.b32.xlu0 %v626, 112
    %v1016 = vpop.permute.xlu0 %1015
    %1017 = vrot.lane.b32.xlu0 %v632, 112
    %v1018 = vpop.permute.xlu0 %1017
    %v1022 = vsel %vm741, %v1008, 0
    %v1025 = vsel %vm741, %v1009, 0
    %v1028 = vsel %vm741, %v1010, 0
    %v1030 = vsel %vm428, %v1018, 0
    %1032 = vmatprep.subr.mxu0 0.0
    %1033 = vmatpush1.msra.mxu0 %v1014
    %1034 = vmatprep.subr.mxu0 0.0
    %1035 = vmatpush1.msra.mxu0 %v1016
    %1036 = vmatprep.subr.mxu0 0.0
    %1037 = vmatpush1.msra.mxu0 %v1030
    %1038 = vmatprep.subr.mxu0 0.0
    %1039 = vmatpush1.msra.mxu0 0.0
    %1040 = vmatprep.subr.mxu0 0.0
    %1041 = vmatpush1.msra.mxu0 0.0
    %1042 = vmatprep.subr.mxu0 0.0
    %1043 = vmatpush1.msra.mxu0 0.0
    %1044 = vmatprep.subr.mxu0 0.0
    %1045 = vmatpush1.msra.mxu0 0.0
    %1046 = vmatprep.subr.mxu0 0.0
    %1047 = vmatpush1.msra.mxu0 0.0
    %1048 = vmatprep.subr.mxu0 0.0
    %1049 = vmatpush1.msra.mxu0 0.0
    %1050 = vmatprep.subr.mxu0 0.0
    %1051 = vmatpush1.msra.mxu0 0.0
    %1052 = vmatprep.subr.mxu0 0.0
    %1053 = vmatpush1.msra.mxu0 0.0
    %1054 = vmatprep.subr.mxu0 0.0
    %1055 = vmatpush1.msra.mxu0 0.0
    %1056 = vmatprep.subr.mxu0 0.0
    %1057 = vmatpush1.msra.mxu0 0.0
    %1058 = vmatprep.subr.mxu0 0.0
    %1059 = vmatpush1.msra.mxu0 0.0
    %1060 = vmatprep.subr.mxu0 0.0
    %1061 = vmatpush1.msra.mxu0 0.0
    %1062 = vmatprep.subr.mxu0 0.0
    %1063 = vmatpush1.msra.mxu0 0.0
    %1064 = vmatprep.subr.mxu0 0.0
    %1065 = vmatpush1.msra.mxu0 0.0
    %1066 = vmatprep.subr.mxu0 0.0
    %1067 = vmatpush1.msra.mxu0 0.0
    %1068 = vmatprep.subr.mxu0 0.0
    %1069 = vmatpush1.msra.mxu0 0.0
    %1070 = vmatprep.subr.mxu0 0.0
    %1071 = vmatpush1.msra.mxu0 0.0
    %1072 = vmatprep.subr.mxu0 0.0
    %1073 = vmatpush1.msra.mxu0 0.0
    %1074 = vmatprep.subr.mxu0 0.0
    %1075 = vmatpush1.msra.mxu0 0.0
    %1076 = vmatprep.subr.mxu0 0.0
    %1077 = vmatpush1.msra.mxu0 0.0
    %1078 = vmatprep.subr.mxu0 0.0
    %1079 = vmatpush1.msra.mxu0 0.0
    %1080 = vmatprep.subr.mxu0 0.0
    %1081 = vmatpush1.msra.mxu0 0.0
    %1082 = vmatprep.subr.mxu0 0.0
    %1083 = vmatpush1.msra.mxu0 0.0
    %1084 = vmatprep.subr.mxu0 0.0
    %1085 = vmatpush1.msra.mxu0 0.0
    %1086 = vmatprep.subr.mxu0 0.0
    %1087 = vmatpush1.msra.mxu0 0.0
    %1088 = vmatprep.subr.mxu0 0.0
    %1089 = vmatpush1.msra.mxu0 0.0
    %1090 = vmatprep.subr.mxu0 0.0
    %1091 = vmatpush1.msra.mxu0 0.0
    %1092 = vmatprep.subr.mxu0 0.0
    %1093 = vmatpush1.msra.mxu0 0.0
    %1094 = vmatprep.subr.mxu0 0.0
    %1095 = vmatpush1.msra.mxu0 0.0
    %1096 = vmatprep.mubr.f32.mxu0 0.0
    %1097 = vmatmul.mubr.f32.gmra.mrb[0].mxu0 %v1022
    %v1098 = vpop.f32.mrb[0].mxu0
    %v1099 = vadd.f32 0.0, %v1098
    %v1100 = vpop.f32.mrb[0].mxu0
    %1101 = vmatprep.mubr.f32.mxu0 0.0
    %1102 = vmatmul.mubr.f32.gmra.mrb[0].mxu0 %v1025
    %v1103 = vpop.f32.mrb[0].mxu0
    %v1104 = vadd.f32 0.0, %v1103
    %v1105 = vpop.f32.mrb[0].mxu0
    %1106 = vmatprep.mubr.f32.mxu0 0.0
    %1107 = vmatmul.mubr.f32.gmra.mrb[0].mxu0 %v1028
    %v1108 = vpop.f32.mrb[0].mxu0
    %v1109 = vadd.f32 0.0, %v1108
    %v1110 = vpop.f32.mrb[0].mxu0
    %1111 = vdwg.mxu0
    %1112 = vrot.lane.b32.xlu0 %v618, 96
    %v1113 = vpop.permute.xlu0 %1112
    %1114 = vrot.lane.b32.xlu0 %v624, 96
    %v1115 = vpop.permute.xlu0 %1114
    %1116 = vrot.lane.b32.xlu0 %v630, 96
    %v1117 = vpop.permute.xlu0 %1116
    %1118 = vrot.lane.b32.xlu0 %v618, 32
    %v1119 = vpop.permute.xlu0 %1118
    %1120 = vrot.lane.b32.xlu0 %v624, 32
    %v1121 = vpop.permute.xlu0 %1120
    %1122 = vrot.lane.b32.xlu0 %v630, 32
    %v1123 = vpop.permute.xlu0 %1122
    %v1124 = vsel %vm175, %v1113, 0
    %v1126 = vsel %vm175, %v1115, 0
    %v1128 = vsel %vm175, %v1117, 0
    %v1130 = vsel %vm175, %v1119, 0
    %v1132 = vsel %vm175, %v1121, 0
    %v1134 = vsel %vm175, %v1123, 0
    %1136 = vmatprep.subr.mxu0 0.0
    %1137 = vmatpush1.xpose.msra.mxu0 %v1130
    %1138 = vmatprep.subr.mxu0 0.0
    %1139 = vmatpush1.xpose.msra.mxu0 %v1132
    %1140 = vmatprep.subr.mxu0 0.0
    %1141 = vmatpush1.xpose.msra.mxu0 %v1134
    %1142 = vmatprep.subr.mxu0 0.0
    %1143 = vmatpush1.xpose.msra.mxu0 0.0
    %1144 = vmatprep.subr.mxu0 0.0
    %1145 = vmatpush1.xpose.msra.mxu0 0.0
    %1146 = vmatprep.subr.mxu0 0.0
    %1147 = vmatpush1.xpose.msra.mxu0 0.0
    %1148 = vmatprep.subr.mxu0 0.0
    %1149 = vmatpush1.xpose.msra.mxu0 0.0
    %1150 = vmatprep.subr.mxu0 0.0
    %1151 = vmatpush1.xpose.msra.mxu0 0.0
    %1152 = vmatprep.subr.mxu0 0.0
    %1153 = vmatpush1.xpose.msra.mxu0 0.0
    %1154 = vmatprep.subr.mxu0 0.0
    %1155 = vmatpush1.xpose.msra.mxu0 0.0
    %1156 = vmatprep.subr.mxu0 0.0
    %1157 = vmatpush1.xpose.msra.mxu0 0.0
    %1158 = vmatprep.subr.mxu0 0.0
    %1159 = vmatpush1.xpose.msra.mxu0 0.0
    %1160 = vmatprep.subr.mxu0 0.0
    %1161 = vmatpush1.xpose.msra.mxu0 0.0
    %1162 = vmatprep.subr.mxu0 0.0
    %1163 = vmatpush1.xpose.msra.mxu0 0.0
    %1164 = vmatprep.subr.mxu0 0.0
    %1165 = vmatpush1.xpose.msra.mxu0 0.0
    %1166 = vmatprep.subr.mxu0 0.0
    %1167 = vmatpush1.xpose.msra.mxu0 0.0
    %1168 = vmatprep.subr.mxu0 0.0
    %1169 = vmatpush1.xpose.msra.mxu0 0.0
    %1170 = vmatprep.subr.mxu0 0.0
    %1171 = vmatpush1.xpose.msra.mxu0 0.0
    %1172 = vmatprep.subr.mxu0 0.0
    %1173 = vmatpush1.xpose.msra.mxu0 0.0
    %1174 = vmatprep.subr.mxu0 0.0
    %1175 = vmatpush1.xpose.msra.mxu0 0.0
    %1176 = vmatprep.subr.mxu0 0.0
    %1177 = vmatpush1.xpose.msra.mxu0 0.0
    %1178 = vmatprep.subr.mxu0 0.0
    %1179 = vmatpush1.xpose.msra.mxu0 0.0
    %1180 = vmatprep.subr.mxu0 0.0
    %1181 = vmatpush1.xpose.msra.mxu0 0.0
    %1182 = vmatprep.subr.mxu0 0.0
    %1183 = vmatpush1.xpose.msra.mxu0 0.0
    %1184 = vmatprep.subr.mxu0 0.0
    %1185 = vmatpush1.xpose.msra.mxu0 0.0
    %1186 = vmatprep.subr.mxu0 0.0
    %1187 = vmatpush1.xpose.msra.mxu0 0.0
    %1188 = vmatprep.subr.mxu0 0.0
    %1189 = vmatpush1.xpose.msra.mxu0 0.0
    %1190 = vmatprep.subr.mxu0 0.0
    %1191 = vmatpush1.xpose.msra.mxu0 0.0
    %1192 = vmatprep.subr.mxu0 0.0
    %1193 = vmatpush1.xpose.msra.mxu0 0.0
    %1194 = vmatprep.subr.mxu0 0.0
    %1195 = vmatpush1.xpose.msra.mxu0 0.0
    %1196 = vmatprep.subr.mxu0 0.0
    %1197 = vmatpush1.xpose.msra.mxu0 0.0
    %1198 = vmatprep.subr.mxu0 0.0
    %1199 = vmatpush1.xpose.msra.mxu0 0.0
    %1200 = vmatprep.mubr.f32.mxu0 0.0
    %1201 = vmatmul.mubr.f32.gmra.mrb[0].mxu0 %v1124
    %v1202 = vpop.f32.mrb[0].mxu0
    %v1203 = vadd.f32 0.0, %v1202
    %v1204 = vpop.f32.mrb[0].mxu0
    %1205 = vmatprep.mubr.f32.mxu0 0.0
    %1206 = vmatmul.mubr.f32.gmra.mrb[0].mxu0 %v1126
    %v1207 = vpop.f32.mrb[0].mxu0
    %v1208 = vadd.f32 0.0, %v1207
    %v1209 = vpop.f32.mrb[0].mxu0
    %1210 = vmatprep.mubr.f32.mxu0 0.0
    %1211 = vmatmul.mubr.f32.gmra.mrb[0].mxu0 %v1128
    %v1212 = vpop.f32.mrb[0].mxu0
    %v1213 = vadd.f32 0.0, %v1212
    %v1214 = vpop.f32.mrb[0].mxu0
    %1215 = vdwg.mxu0
    %v1216 = vmul.f32 %v1203, 0.25
    %v1217 = vmul.f32 %v1208, 0.25
    %v1218 = vmul.f32 %v1213, 0.25
    %v1219 = vadd.f32 %v1216, %v137
    %v1220 = vadd.f32 %v1217, %v138
    %v1221 = vadd.f32 %v1218, %v139
    %v1222 = vsel %vm741, %v1219, -inf
    %1223 = vmax.xlane.f32.xlu0 %v1222
    %v1224 = vpop.xlane.xlu0 %1223
    %v1225 = vsel %vm741, %v1220, -inf
    %1226 = vmax.xlane.f32.xlu0 %v1225
    %v1227 = vpop.xlane.xlu0 %1226
    %v1228 = vsel %vm748, %v1221, -inf
    %1229 = vmax.xlane.f32.xlu0 %v1228
    %v1230 = vpop.xlane.xlu0 %1229
    %v1231 = vsub.f32 %v1219, %v1224
    %v1232 = vsub.f32 %v1220, %v1227
    %v1233 = vsub.f32 %v1221, %v1230
    %v1234 = vmul.f32 %v1231, 1.442695
    %v1235 = vpow.pop %v1234
    %v1236 = vmul.f32 %v1232, 1.442695
    %v1237 = vpow.pop %v1236
    %v1238 = vmul.f32 %v1233, 1.442695
    %v1239 = vpow.pop %v1238
    %v1240 = vsel %vm741, %v1235, 0.0
    %1241 = vadd.xlane.f32.xlu0 %v1240
    %v1242 = vpop.xlane.xlu0 %1241
    %v1243 = vsel %vm741, %v1237, 0.0
    %1244 = vadd.xlane.f32.xlu0 %v1243
    %v1245 = vpop.xlane.xlu0 %1244
    %v1246 = vsel %vm748, %v1239, 0.0
    %1247 = vadd.xlane.f32.xlu0 %v1246
    %v1248 = vpop.xlane.xlu0 %1247
    %v1249 = vrcp.pop %v1242
    %v1250 = vrcp.pop %v1245
    %v1251 = vrcp.pop %v1248
    %v1252 = vmul.f32 %v1235, %v1249
    %v1253 = vmul.f32 %v1237, %v1250
    %v1254 = vmul.f32 %v1239, %v1251
    %1255 = vrot.lane.b32.xlu0 %v620, 96
    %v1256 = vpop.permute.xlu0 %1255
    %1257 = vrot.lane.b32.xlu0 %v626, 96
    %v1258 = vpop.permute.xlu0 %1257
    %1259 = vrot.lane.b32.xlu0 %v632, 96
    %v1260 = vpop.permute.xlu0 %1259
    %v1264 = vsel %vm741, %v1252, 0
    %v1267 = vsel %vm741, %v1253, 0
    %v1270 = vsel %vm741, %v1254, 0
    %v1272 = vsel %vm428, %v1260, 0
    %1274 = vmatprep.subr.mxu0 0.0
    %1275 = vmatpush1.msra.mxu0 %v1256
    %1276 = vmatprep.subr.mxu0 0.0
    %1277 = vmatpush1.msra.mxu0 %v1258
    %1278 = vmatprep.subr.mxu0 0.0
    %1279 = vmatpush1.msra.mxu0 %v1272
    %1280 = vmatprep.subr.mxu0 0.0
    %1281 = vmatpush1.msra.mxu0 0.0
    %1282 = vmatprep.subr.mxu0 0.0
    %1283 = vmatpush1.msra.mxu0 0.0
    %1284 = vmatprep.subr.mxu0 0.0
    %1285 = vmatpush1.msra.mxu0 0.0
    %1286 = vmatprep.subr.mxu0 0.0
    %1287 = vmatpush1.msra.mxu0 0.0
    %1288 = vmatprep.subr.mxu0 0.0
    %1289 = vmatpush1.msra.mxu0 0.0
    %1290 = vmatprep.subr.mxu0 0.0
    %1291 = vmatpush1.msra.mxu0 0.0
    %1292 = vmatprep.subr.mxu0 0.0
    %1293 = vmatpush1.msra.mxu0 0.0
    %1294 = vmatprep.subr.mxu0 0.0
    %1295 = vmatpush1.msra.mxu0 0.0
    %1296 = vmatprep.subr.mxu0 0.0
    %1297 = vmatpush1.msra.mxu0 0.0
    %1298 = vmatprep.subr.mxu0 0.0
    %1299 = vmatpush1.msra.mxu0 0.0
    %1300 = vmatprep.subr.mxu0 0.0
    %1301 = vmatpush1.msra.mxu0 0.0
    %1302 = vmatprep.subr.mxu0 0.0
    %1303 = vmatpush1.msra.mxu0 0.0
    %1304 = vmatprep.subr.mxu0 0.0
    %1305 = vmatpush1.msra.mxu0 0.0
    %1306 = vmatprep.subr.mxu0 0.0
    %1307 = vmatpush1.msra.mxu0 0.0
    %1308 = vmatprep.subr.mxu0 0.0
    %1309 = vmatpush1.msra.mxu0 0.0
    %1310 = vmatprep.subr.mxu0 0.0
    %1311 = vmatpush1.msra.mxu0 0.0
    %1312 = vmatprep.subr.mxu0 0.0
    %1313 = vmatpush1.msra.mxu0 0.0
    %1314 = vmatprep.subr.mxu0 0.0
    %1315 = vmatpush1.msra.mxu0 0.0
    %1316 = vmatprep.subr.mxu0 0.0
    %1317 = vmatpush1.msra.mxu0 0.0
    %1318 = vmatprep.subr.mxu0 0.0
    %1319 = vmatpush1.msra.mxu0 0.0
    %1320 = vmatprep.subr.mxu0 0.0
    %1321 = vmatpush1.msra.mxu0 0.0
    %1322 = vmatprep.subr.mxu0 0.0
    %1323 = vmatpush1.msra.mxu0 0.0
    %1324 = vmatprep.subr.mxu0 0.0
    %1325 = vmatpush1.msra.mxu0 0.0
    %1326 = vmatprep.subr.mxu0 0.0
    %1327 = vmatpush1.msra.mxu0 0.0
    %1328 = vmatprep.subr.mxu0 0.0
    %1329 = vmatpush1.msra.mxu0 0.0
    %1330 = vmatprep.subr.mxu0 0.0
    %1331 = vmatpush1.msra.mxu0 0.0
    %1332 = vmatprep.subr.mxu0 0.0
    %1333 = vmatpush1.msra.mxu0 0.0
    %1334 = vmatprep.subr.mxu0 0.0
    %1335 = vmatpush1.msra.mxu0 0.0
    %1336 = vmatprep.subr.mxu0 0.0
    %1337 = vmatpush1.msra.mxu0 0.0
    %1338 = vmatprep.mubr.f32.mxu0 0.0
    %1339 = vmatmul.mubr.f32.gmra.mrb[0].mxu0 %v1264
    %v1340 = vpop.f32.mrb[0].mxu0
    %v1341 = vadd.f32 0.0, %v1340
    %v1342 = vpop.f32.mrb[0].mxu0
    %1343 = vmatprep.mubr.f32.mxu0 0.0
    %1344 = vmatmul.mubr.f32.gmra.mrb[0].mxu0 %v1267
    %v1345 = vpop.f32.mrb[0].mxu0
    %v1346 = vadd.f32 0.0, %v1345
    %v1347 = vpop.f32.mrb[0].mxu0
    %1348 = vmatprep.mubr.f32.mxu0 0.0
    %1349 = vmatmul.mubr.f32.gmra.mrb[0].mxu0 %v1270
    %v1350 = vpop.f32.mrb[0].mxu0
    %v1351 = vadd.f32 0.0, %v1350
    %v1352 = vpop.f32.mrb[0].mxu0
    %1353 = vdwg.mxu0
    %1354 = vrot.lane.b32.xlu0 %v618, 80
    %v1355 = vpop.permute.xlu0 %1354
    %1356 = vrot.lane.b32.xlu0 %v624, 80
    %v1357 = vpop.permute.xlu0 %1356
    %1358 = vrot.lane.b32.xlu0 %v630, 80
    %v1359 = vpop.permute.xlu0 %1358
    %1360 = vrot.lane.b32.xlu0 %v618, 16
    %v1361 = vpop.permute.xlu0 %1360
    %1362 = vrot.lane.b32.xlu0 %v624, 16
    %v1363 = vpop.permute.xlu0 %1362
    %1364 = vrot.lane.b32.xlu0 %v630, 16
    %v1365 = vpop.permute.xlu0 %1364
    %v1366 = vsel %vm175, %v1355, 0
    %v1368 = vsel %vm175, %v1357, 0
    %v1370 = vsel %vm175, %v1359, 0
    %v1372 = vsel %vm175, %v1361, 0
    %v1374 = vsel %vm175, %v1363, 0
    %v1376 = vsel %vm175, %v1365, 0
    %1378 = vmatprep.subr.mxu0 0.0
    %1379 = vmatpush1.xpose.msra.mxu0 %v1372
    %1380 = vmatprep.subr.mxu0 0.0
    %1381 = vmatpush1.xpose.msra.mxu0 %v1374
    %1382 = vmatprep.subr.mxu0 0.0
    %1383 = vmatpush1.xpose.msra.mxu0 %v1376
    %1384 = vmatprep.subr.mxu0 0.0
    %1385 = vmatpush1.xpose.msra.mxu0 0.0
    %1386 = vmatprep.subr.mxu0 0.0
    %1387 = vmatpush1.xpose.msra.mxu0 0.0
    %1388 = vmatprep.subr.mxu0 0.0
    %1389 = vmatpush1.xpose.msra.mxu0 0.0
    %1390 = vmatprep.subr.mxu0 0.0
    %1391 = vmatpush1.xpose.msra.mxu0 0.0
    %1392 = vmatprep.subr.mxu0 0.0
    %1393 = vmatpush1.xpose.msra.mxu0 0.0
    %1394 = vmatprep.subr.mxu0 0.0
    %1395 = vmatpush1.xpose.msra.mxu0 0.0
    %1396 = vmatprep.subr.mxu0 0.0
    %1397 = vmatpush1.xpose.msra.mxu0 0.0
    %1398 = vmatprep.subr.mxu0 0.0
    %1399 = vmatpush1.xpose.msra.mxu0 0.0
    %1400 = vmatprep.subr.mxu0 0.0
    %1401 = vmatpush1.xpose.msra.mxu0 0.0
    %1402 = vmatprep.subr.mxu0 0.0
    %1403 = vmatpush1.xpose.msra.mxu0 0.0
    %1404 = vmatprep.subr.mxu0 0.0
    %1405 = vmatpush1.xpose.msra.mxu0 0.0
    %1406 = vmatprep.subr.mxu0 0.0
    %1407 = vmatpush1.xpose.msra.mxu0 0.0
    %1408 = vmatprep.subr.mxu0 0.0
    %1409 = vmatpush1.xpose.msra.mxu0 0.0
    %1410 = vmatprep.subr.mxu0 0.0
    %1411 = vmatpush1.xpose.msra.mxu0 0.0
    %1412 = vmatprep.subr.mxu0 0.0
    %1413 = vmatpush1.xpose.msra.mxu0 0.0
    %1414 = vmatprep.subr.mxu0 0.0
    %1415 = vmatpush1.xpose.msra.mxu0 0.0
    %1416 = vmatprep.subr.mxu0 0.0
    %1417 = vmatpush1.xpose.msra.mxu0 0.0
    %1418 = vmatprep.subr.mxu0 0.0
    %1419 = vmatpush1.xpose.msra.mxu0 0.0
    %1420 = vmatprep.subr.mxu0 0.0
    %1421 = vmatpush1.xpose.msra.mxu0 0.0
    %1422 = vmatprep.subr.mxu0 0.0
    %1423 = vmatpush1.xpose.msra.mxu0 0.0
    %1424 = vmatprep.subr.mxu0 0.0
    %1425 = vmatpush1.xpose.msra.mxu0 0.0
    %1426 = vmatprep.subr.mxu0 0.0
    %1427 = vmatpush1.xpose.msra.mxu0 0.0
    %1428 = vmatprep.subr.mxu0 0.0
    %1429 = vmatpush1.xpose.msra.mxu0 0.0
    %1430 = vmatprep.subr.mxu0 0.0
    %1431 = vmatpush1.xpose.msra.mxu0 0.0
    %1432 = vmatprep.subr.mxu0 0.0
    %1433 = vmatpush1.xpose.msra.mxu0 0.0
    %1434 = vmatprep.subr.mxu0 0.0
    %1435 = vmatpush1.xpose.msra.mxu0 0.0
    %1436 = vmatprep.subr.mxu0 0.0
    %1437 = vmatpush1.xpose.msra.mxu0 0.0
    %1438 = vmatprep.subr.mxu0 0.0
    %1439 = vmatpush1.xpose.msra.mxu0 0.0
    %1440 = vmatprep.subr.mxu0 0.0
    %1441 = vmatpush1.xpose.msra.mxu0 0.0
    %1442 = vmatprep.mubr.f32.mxu0 0.0
    %1443 = vmatmul.mubr.f32.gmra.mrb[0].mxu0 %v1366
    %v1444 = vpop.f32.mrb[0].mxu0
    %v1445 = vadd.f32 0.0, %v1444
    %v1446 = vpop.f32.mrb[0].mxu0
    %1447 = vmatprep.mubr.f32.mxu0 0.0
    %1448 = vmatmul.mubr.f32.gmra.mrb[0].mxu0 %v1368
    %v1449 = vpop.f32.mrb[0].mxu0
    %v1450 = vadd.f32 0.0, %v1449
    %v1451 = vpop.f32.mrb[0].mxu0
    %1452 = vmatprep.mubr.f32.mxu0 0.0
    %1453 = vmatmul.mubr.f32.gmra.mrb[0].mxu0 %v1370
    %v1454 = vpop.f32.mrb[0].mxu0
    %v1455 = vadd.f32 0.0, %v1454
    %v1456 = vpop.f32.mrb[0].mxu0
    %1457 = vdwg.mxu0
    %v1458 = vmul.f32 %v1445, 0.25
    %v1459 = vmul.f32 %v1450, 0.25
    %v1460 = vmul.f32 %v1455, 0.25
    %v1461 = vadd.f32 %v1458, %v137
    %v1462 = vadd.f32 %v1459, %v138
    %v1463 = vadd.f32 %v1460, %v139
    %v1464 = vsel %vm741, %v1461, -inf
    %1465 = vmax.xlane.f32.xlu0 %v1464
    %v1466 = vpop.xlane.xlu0 %1465
    %v1467 = vsel %vm741, %v1462, -inf
    %1468 = vmax.xlane.f32.xlu0 %v1467
    %v1469 = vpop.xlane.xlu0 %1468
    %v1470 = vsel %vm748, %v1463, -inf
    %1471 = vmax.xlane.f32.xlu0 %v1470
    %v1472 = vpop.xlane.xlu0 %1471
    %v1473 = vsub.f32 %v1461, %v1466
    %v1474 = vsub.f32 %v1462, %v1469
    %v1475 = vsub.f32 %v1463, %v1472
    %v1476 = vmul.f32 %v1473, 1.442695
    %v1477 = vpow.pop %v1476
    %v1478 = vmul.f32 %v1474, 1.442695
    %v1479 = vpow.pop %v1478
    %v1480 = vmul.f32 %v1475, 1.442695
    %v1481 = vpow.pop %v1480
    %v1482 = vsel %vm741, %v1477, 0.0
    %1483 = vadd.xlane.f32.xlu0 %v1482
    %v1484 = vpop.xlane.xlu0 %1483
    %v1485 = vsel %vm741, %v1479, 0.0
    %1486 = vadd.xlane.f32.xlu0 %v1485
    %v1487 = vpop.xlane.xlu0 %1486
    %v1488 = vsel %vm748, %v1481, 0.0
    %1489 = vadd.xlane.f32.xlu0 %v1488
    %v1490 = vpop.xlane.xlu0 %1489
    %v1491 = vrcp.pop %v1484
    %v1492 = vrcp.pop %v1487
    %v1493 = vrcp.pop %v1490
    %v1494 = vmul.f32 %v1477, %v1491
    %v1495 = vmul.f32 %v1479, %v1492
    %v1496 = vmul.f32 %v1481, %v1493
    %1497 = vrot.lane.b32.xlu0 %v620, 80
    %v1498 = vpop.permute.xlu0 %1497
    %1499 = vrot.lane.b32.xlu0 %v626, 80
    %v1500 = vpop.permute.xlu0 %1499
    %1501 = vrot.lane.b32.xlu0 %v632, 80
    %v1502 = vpop.permute.xlu0 %1501
    %v1506 = vsel %vm741, %v1494, 0
    %v1509 = vsel %vm741, %v1495, 0
    %v1512 = vsel %vm741, %v1496, 0
    %v1514 = vsel %vm428, %v1502, 0
    %1516 = vmatprep.subr.mxu0 0.0
    %1517 = vmatpush1.msra.mxu0 %v1498
    %1518 = vmatprep.subr.mxu0 0.0
    %1519 = vmatpush1.msra.mxu0 %v1500
    %1520 = vmatprep.subr.mxu0 0.0
    %1521 = vmatpush1.msra.mxu0 %v1514
    %1522 = vmatprep.subr.mxu0 0.0
    %1523 = vmatpush1.msra.mxu0 0.0
    %1524 = vmatprep.subr.mxu0 0.0
    %1525 = vmatpush1.msra.mxu0 0.0
    %1526 = vmatprep.subr.mxu0 0.0
    %1527 = vmatpush1.msra.mxu0 0.0
    %1528 = vmatprep.subr.mxu0 0.0
    %1529 = vmatpush1.msra.mxu0 0.0
    %1530 = vmatprep.subr.mxu0 0.0
    %1531 = vmatpush1.msra.mxu0 0.0
    %1532 = vmatprep.subr.mxu0 0.0
    %1533 = vmatpush1.msra.mxu0 0.0
    %1534 = vmatprep.subr.mxu0 0.0
    %1535 = vmatpush1.msra.mxu0 0.0
    %1536 = vmatprep.subr.mxu0 0.0
    %1537 = vmatpush1.msra.mxu0 0.0
    %1538 = vmatprep.subr.mxu0 0.0
    %1539 = vmatpush1.msra.mxu0 0.0
    %1540 = vmatprep.subr.mxu0 0.0
    %1541 = vmatpush1.msra.mxu0 0.0
    %1542 = vmatprep.subr.mxu0 0.0
    %1543 = vmatpush1.msra.mxu0 0.0
    %1544 = vmatprep.subr.mxu0 0.0
    %1545 = vmatpush1.msra.mxu0 0.0
    %1546 = vmatprep.subr.mxu0 0.0
    %1547 = vmatpush1.msra.mxu0 0.0
    %1548 = vmatprep.subr.mxu0 0.0
    %1549 = vmatpush1.msra.mxu0 0.0
    %1550 = vmatprep.subr.mxu0 0.0
    %1551 = vmatpush1.msra.mxu0 0.0
    %1552 = vmatprep.subr.mxu0 0.0
    %1553 = vmatpush1.msra.mxu0 0.0
    %1554 = vmatprep.subr.mxu0 0.0
    %1555 = vmatpush1.msra.mxu0 0.0
    %1556 = vmatprep.subr.mxu0 0.0
    %1557 = vmatpush1.msra.mxu0 0.0
    %1558 = vmatprep.subr.mxu0 0.0
    %1559 = vmatpush1.msra.mxu0 0.0
    %1560 = vmatprep.subr.mxu0 0.0
    %1561 = vmatpush1.msra.mxu0 0.0
    %1562 = vmatprep.subr.mxu0 0.0
    %1563 = vmatpush1.msra.mxu0 0.0
    %1564 = vmatprep.subr.mxu0 0.0
    %1565 = vmatpush1.msra.mxu0 0.0
    %1566 = vmatprep.subr.mxu0 0.0
    %1567 = vmatpush1.msra.mxu0 0.0
    %1568 = vmatprep.subr.mxu0 0.0
    %1569 = vmatpush1.msra.mxu0 0.0
    %1570 = vmatprep.subr.mxu0 0.0
    %1571 = vmatpush1.msra.mxu0 0.0
    %1572 = vmatprep.subr.mxu0 0.0
    %1573 = vmatpush1.msra.mxu0 0.0
    %1574 = vmatprep.subr.mxu0 0.0
    %1575 = vmatpush1.msra.mxu0 0.0
    %1576 = vmatprep.subr.mxu0 0.0
    %1577 = vmatpush1.msra.mxu0 0.0
    %1578 = vmatprep.subr.mxu0 0.0
    %1579 = vmatpush1.msra.mxu0 0.0
    %1580 = vmatprep.mubr.f32.mxu0 0.0
    %1581 = vmatmul.mubr.f32.gmra.mrb[0].mxu0 %v1506
    %v1582 = vpop.f32.mrb[0].mxu0
    %v1583 = vadd.f32 0.0, %v1582
    %v1584 = vpop.f32.mrb[0].mxu0
    %1585 = vmatprep.mubr.f32.mxu0 0.0
    %1586 = vmatmul.mubr.f32.gmra.mrb[0].mxu0 %v1509
    %v1587 = vpop.f32.mrb[0].mxu0
    %v1588 = vadd.f32 0.0, %v1587
    %v1589 = vpop.f32.mrb[0].mxu0
    %1590 = vmatprep.mubr.f32.mxu0 0.0
    %1591 = vmatmul.mubr.f32.gmra.mrb[0].mxu0 %v1512
    %v1592 = vpop.f32.mrb[0].mxu0
    %v1593 = vadd.f32 0.0, %v1592
    %v1594 = vpop.f32.mrb[0].mxu0
    %1595 = vdwg.mxu0
    %1599 = vrot.lane.b32.xlu0 %v1099, 16
    %v1600 = vpop.permute.xlu0 %1599
    %1601 = vrot.lane.b32.xlu0 %v1104, 16
    %v1602 = vpop.permute.xlu0 %1601
    %1603 = vrot.lane.b32.xlu0 %v1109, 16
    %v1604 = vpop.permute.xlu0 %1603
    %1611 = vrot.lane.b32.xlu0 %v1341, 32
    %v1612 = vpop.permute.xlu0 %1611
    %1613 = vrot.lane.b32.xlu0 %v1346, 32
    %v1614 = vpop.permute.xlu0 %1613
    %1615 = vrot.lane.b32.xlu0 %v1351, 32
    %v1616 = vpop.permute.xlu0 %1615
    %1623 = vrot.lane.b32.xlu0 %v1583, 48
    %v1624 = vpop.permute.xlu0 %1623
    %1625 = vrot.lane.b32.xlu0 %v1588, 48
    %v1626 = vpop.permute.xlu0 %1625
    %1627 = vrot.lane.b32.xlu0 %v1593, 48
    %v1628 = vpop.permute.xlu0 %1627
    %v1632 = vsel %vm175, %v855, %v1600
    %v1633 = vsel %vm175, %v860, %v1602
    %v1634 = vsel %vm175, %v865, %v1604
    %vm1635 = vcmask 261120
    %v1636 = vsel %vm1635, %v1632, %v1612
    %v1637 = vsel %vm1635, %v1633, %v1614
    %v1638 = vsel %vm1635, %v1634, %v1616
    %vm1639 = vcmask 392192
    %v1640 = vsel %vm1639, %v1636, %v1624
    %v1641 = vsel %vm1639, %v1637, %v1626
    %v1642 = vsel %vm1639, %v1638, %v1628
    %v1643 = vld [vmem:[%s37] sm:$0xff]
    %v1644 = vld [vmem:[%s37 + $0x8] sm:$0xff]
    %v1645 = vld [vmem:[%s37 + $0x10] sm:$0xff]
    %v1646 = vld [vmem:[%s37 + $0x18] sm:$0xff]
    %v1647 = vld [vmem:[%s37 + $0x20] sm:$0xff]
    %v1648 = vld [vmem:[%s37 + $0x28] sm:$0xff]
    %v1649 = vld [vmem:[%s37 + $0x30] sm:$0xff]
    %v1650 = vld [vmem:[%s37 + $0x38] sm:$0xff]
    %v1651 = vld [vmem:[%s39] sm:$0x1]
    %v1653 = vlaneseq
    %v1654 = vshrl.u32 %v1653, 7
    %v1655 = vsub.s32 0, %v1654
    %v1656 = vrot.slane %v1651, %v1655
    %v1659 = vsel %vm454, %v1640, 0
    %v1662 = vsel %vm454, %v1641, 0
    %v1665 = vsel %vm454, %v1642, 0
    %1667 = vmatprep.subr.mxu0 0.0
    %1668 = vmatpush1.msra.mxu0 %v1643
    %1669 = vmatprep.subr.mxu0 0.0
    %1670 = vmatpush1.msra.mxu0 %v1644
    %1671 = vmatprep.subr.mxu0 0.0
    %1672 = vmatpush1.msra.mxu0 %v1645
    %1673 = vmatprep.subr.mxu0 0.0
    %1674 = vmatpush1.msra.mxu0 %v1646
    %1675 = vmatprep.subr.mxu0 0.0
    %1676 = vmatpush1.msra.mxu0 %v1647
    %1677 = vmatprep.subr.mxu0 0.0
    %1678 = vmatpush1.msra.mxu0 %v1648
    %1679 = vmatprep.subr.mxu0 0.0
    %1680 = vmatpush1.msra.mxu0 %v1649
    %1681 = vmatprep.subr.mxu0 0.0
    %1682 = vmatpush1.msra.mxu0 %v1650
    %1683 = vmatprep.subr.mxu0 0.0
    %1684 = vmatpush1.msra.mxu0 0.0
    %1685 = vmatprep.subr.mxu0 0.0
    %1686 = vmatpush1.msra.mxu0 0.0
    %1687 = vmatprep.subr.mxu0 0.0
    %1688 = vmatpush1.msra.mxu0 0.0
    %1689 = vmatprep.subr.mxu0 0.0
    %1690 = vmatpush1.msra.mxu0 0.0
    %1691 = vmatprep.subr.mxu0 0.0
    %1692 = vmatpush1.msra.mxu0 0.0
    %1693 = vmatprep.subr.mxu0 0.0
    %1694 = vmatpush1.msra.mxu0 0.0
    %1695 = vmatprep.subr.mxu0 0.0
    %1696 = vmatpush1.msra.mxu0 0.0
    %1697 = vmatprep.subr.mxu0 0.0
    %1698 = vmatpush1.msra.mxu0 0.0
    %1699 = vmatprep.subr.mxu0 0.0
    %1700 = vmatpush1.msra.mxu0 0.0
    %1701 = vmatprep.subr.mxu0 0.0
    %1702 = vmatpush1.msra.mxu0 0.0
    %1703 = vmatprep.subr.mxu0 0.0
    %1704 = vmatpush1.msra.mxu0 0.0
    %1705 = vmatprep.subr.mxu0 0.0
    %1706 = vmatpush1.msra.mxu0 0.0
    %1707 = vmatprep.subr.mxu0 0.0
    %1708 = vmatpush1.msra.mxu0 0.0
    %1709 = vmatprep.subr.mxu0 0.0
    %1710 = vmatpush1.msra.mxu0 0.0
    %1711 = vmatprep.subr.mxu0 0.0
    %1712 = vmatpush1.msra.mxu0 0.0
    %1713 = vmatprep.subr.mxu0 0.0
    %1714 = vmatpush1.msra.mxu0 0.0
    %1715 = vmatprep.subr.mxu0 0.0
    %1716 = vmatpush1.msra.mxu0 0.0
    %1717 = vmatprep.subr.mxu0 0.0
    %1718 = vmatpush1.msra.mxu0 0.0
    %1719 = vmatprep.subr.mxu0 0.0
    %1720 = vmatpush1.msra.mxu0 0.0
    %1721 = vmatprep.subr.mxu0 0.0
    %1722 = vmatpush1.msra.mxu0 0.0
    %1723 = vmatprep.subr.mxu0 0.0
    %1724 = vmatpush1.msra.mxu0 0.0
    %1725 = vmatprep.subr.mxu0 0.0
    %1726 = vmatpush1.msra.mxu0 0.0
    %1727 = vmatprep.subr.mxu0 0.0
    %1728 = vmatpush1.msra.mxu0 0.0
    %1729 = vmatprep.subr.mxu0 0.0
    %1730 = vmatpush1.msra.mxu0 0.0
    %1731 = vmatprep.mubr.f32.mxu0 0.0
    %1732 = vmatmul.mubr.f32.gmra.mrb[0].mxu0 %v1659
    %v1733 = vpop.f32.mrb[0].mxu0
    %v1734 = vadd.f32 %v1656, %v1733
    %v1735 = vpop.f32.mrb[0].mxu0
    %1736 = vmatprep.mubr.f32.mxu0 0.0
    %1737 = vmatmul.mubr.f32.gmra.mrb[0].mxu0 %v1662
    %v1738 = vpop.f32.mrb[0].mxu0
    %v1739 = vadd.f32 %v1656, %v1738
    %v1740 = vpop.f32.mrb[0].mxu0
    %1741 = vmatprep.mubr.f32.mxu0 0.0
    %1742 = vmatmul.mubr.f32.gmra.mrb[0].mxu0 %v1665
    %v1743 = vpop.f32.mrb[0].mxu0
    %v1744 = vadd.f32 %v1656, %v1743
    %v1745 = vpop.f32.mrb[0].mxu0
    %1746 = vdwg.mxu0
    %v1747 = vadd.f32 %v450, %v1734
    %v1748 = vadd.f32 %v451, %v1739
    %v1749 = vadd.f32 %v446, %v1744
    %v1750 = vld [vmem:[%s41] sm:$0x1]
    %v1751 = vld [vmem:[%s43] sm:$0x1]
    %v1752 = vsel %vm454, %v1747, 0.0
    %1753 = vadd.xlane.f32.xlu0 %v1752
    %v1754 = vpop.xlane.xlu0 %1753
    %v1755 = vsel %vm454, %v1748, 0.0
    %1756 = vadd.xlane.f32.xlu0 %v1755
    %v1757 = vpop.xlane.xlu0 %1756
    %v1758 = vsel %vm461, %v1749, 0.0
    %1759 = vadd.xlane.f32.xlu0 %v1758
    %v1760 = vpop.xlane.xlu0 %1759
    %v1761 = vmul.f32 %v1754, %v465
    %v1762 = vmul.f32 %v1757, %v465
    %v1763 = vmul.f32 %v1760, %v465
    %v1764 = vsub.f32 %v1747, %v1761
    %v1765 = vsub.f32 %v1748, %v1762
    %v1766 = vsub.f32 %v1749, %v1763
    %v1767 = vmul.f32 %v1764, %v1764
    %v1768 = vmul.f32 %v1765, %v1765
    %v1769 = vmul.f32 %v1766, %v1766
    %v1770 = vsel %vm454, %v1767, 0.0
    %1771 = vadd.xlane.f32.xlu0 %v1770
    %v1772 = vpop.xlane.xlu0 %1771
    %v1773 = vsel %vm454, %v1768, 0.0
    %1774 = vadd.xlane.f32.xlu0 %v1773
    %v1775 = vpop.xlane.xlu0 %1774
    %v1776 = vsel %vm461, %v1769, 0.0
    %1777 = vadd.xlane.f32.xlu0 %v1776
    %v1778 = vpop.xlane.xlu0 %1777
    %v1779 = vmul.f32 %v1772, %v465
    %v1780 = vmul.f32 %v1775, %v465
    %v1781 = vmul.f32 %v1778, %v465
    %v1782 = vadd.f32 %v1779, 1e-05
    %v1783 = vadd.f32 %v1780, 1e-05
    %v1784 = vadd.f32 %v1781, 1e-05
    %v1785 = vrsqrt.pop %v1782
    %v1786 = vrsqrt.pop %v1783
    %v1787 = vrsqrt.pop %v1784
    %v1788 = vmul.f32 %v1764, %v1785
    %v1789 = vmul.f32 %v1765, %v1786
    %v1790 = vmul.f32 %v1766, %v1787
    %v1792 = vlaneseq
    %v1793 = vshrl.u32 %v1792, 7
    %v1794 = vsub.s32 0, %v1793
    %v1795 = vrot.slane %v1750, %v1794
    %v1797 = vmul.f32 %v1788, %v1795
    %v1798 = vmul.f32 %v1789, %v1795
    %v1799 = vmul.f32 %v1790, %v1795
    %v1801 = vlaneseq
    %v1802 = vshrl.u32 %v1801, 7
    %v1803 = vsub.s32 0, %v1802
    %v1804 = vrot.slane %v1751, %v1803
    %v1806 = vadd.f32 %v1797, %v1804
    %v1807 = vadd.f32 %v1798, %v1804
    %v1808 = vadd.f32 %v1799, %v1804
    %v1809 = vld [vmem:[%s45] sm:$0xff]
    %v1810 = vld [vmem:[%s45 + $0x8] sm:$0xff]
    %v1811 = vld [vmem:[%s45 + $0x10] sm:$0xff]
    %v1812 = vld [vmem:[%s45 + $0x18] sm:$0xff]
    %v1813 = vld [vmem:[%s45 + $0x20] sm:$0xff]
    %v1814 = vld [vmem:[%s45 + $0x28] sm:$0xff]
    %v1815 = vld [vmem:[%s45 + $0x30] sm:$0xff]
    %v1816 = vld [vmem:[%s45 + $0x38] sm:$0xff]
    %v1817 = vld [vmem:[%s45 + $0x40] sm:$0xff]
    %v1818 = vld [vmem:[%s45 + $0x48] sm:$0xff]
    %v1819 = vld [vmem:[%s45 + $0x50] sm:$0xff]
    %v1820 = vld [vmem:[%s45 + $0x58] sm:$0xff]
    %v1821 = vld [vmem:[%s45 + $0x60] sm:$0xff]
    %v1822 = vld [vmem:[%s45 + $0x68] sm:$0xff]
    %v1823 = vld [vmem:[%s45 + $0x70] sm:$0xff]
    %v1824 = vld [vmem:[%s45 + $0x78] sm:$0xff]
    %v1825 = vld [vmem:[%s47] sm:$0x3]
    %v1827 = vlaneseq
    %v1828 = vshrl.u32 %v1827, 7
    %v1829 = vsub.s32 0, %v1828
    %v1830 = vrot.slane %v1825, %v1829
    %v1831 = vlaneseq
    %v1832 = vshrl.u32 %v1831, 7
    %v1833 = vsub.s32 1, %v1832
    %v1834 = vrot.slane %v1825, %v1833
    %v1838 = vsel %vm454, %v1806, 0
    %v1841 = vsel %vm454, %v1807, 0
    %v1844 = vsel %vm454, %v1808, 0
    %1846 = vmatprep.subr.mxu0 %v1810
    %1847 = vmatpush1.msra.mxu0 %v1809
    %1848 = vmatprep.subr.mxu0 %v1812
    %1849 = vmatpush1.msra.mxu0 %v1811
    %1850 = vmatprep.subr.mxu0 %v1814
    %1851 = vmatpush1.msra.mxu0 %v1813
    %1852 = vmatprep.subr.mxu0 %v1816
    %1853 = vmatpush1.msra.mxu0 %v1815
    %1854 = vmatprep.subr.mxu0 %v1818
    %1855 = vmatpush1.msra.mxu0 %v1817
    %1856 = vmatprep.subr.mxu0 %v1820
    %1857 = vmatpush1.msra.mxu0 %v1819
    %1858 = vmatprep.subr.mxu0 %v1822
    %1859 = vmatpush1.msra.mxu0 %v1821
    %1860 = vmatprep.subr.mxu0 %v1824
    %1861 = vmatpush1.msra.mxu0 %v1823
    %1862 = vmatprep.subr.mxu0 0.0
    %1863 = vmatpush1.msra.mxu0 0.0
    %1864 = vmatprep.subr.mxu0 0.0
    %1865 = vmatpush1.msra.mxu0 0.0
    %1866 = vmatprep.subr.mxu0 0.0
    %1867 = vmatpush1.msra.mxu0 0.0
    %1868 = vmatprep.subr.mxu0 0.0
    %1869 = vmatpush1.msra.mxu0 0.0
    %1870 = vmatprep.subr.mxu0 0.0
    %1871 = vmatpush1.msra.mxu0 0.0
    %1872 = vmatprep.subr.mxu0 0.0
    %1873 = vmatpush1.msra.mxu0 0.0
    %1874 = vmatprep.subr.mxu0 0.0
    %1875 = vmatpush1.msra.mxu0 0.0
    %1876 = vmatprep.subr.mxu0 0.0
    %1877 = vmatpush1.msra.mxu0 0.0
    %1878 = vmatprep.subr.mxu0 0.0
    %1879 = vmatpush1.msra.mxu0 0.0
    %1880 = vmatprep.subr.mxu0 0.0
    %1881 = vmatpush1.msra.mxu0 0.0
    %1882 = vmatprep.subr.mxu0 0.0
    %1883 = vmatpush1.msra.mxu0 0.0
    %1884 = vmatprep.subr.mxu0 0.0
    %1885 = vmatpush1.msra.mxu0 0.0
    %1886 = vmatprep.subr.mxu0 0.0
    %1887 = vmatpush1.msra.mxu0 0.0
    %1888 = vmatprep.subr.mxu0 0.0
    %1889 = vmatpush1.msra.mxu0 0.0
    %1890 = vmatprep.subr.mxu0 0.0
    %1891 = vmatpush1.msra.mxu0 0.0
    %1892 = vmatprep.subr.mxu0 0.0
    %1893 = vmatpush1.msra.mxu0 0.0
    %1894 = vmatprep.subr.mxu0 0.0
    %1895 = vmatpush1.msra.mxu0 0.0
    %1896 = vmatprep.subr.mxu0 0.0
    %1897 = vmatpush1.msra.mxu0 0.0
    %1898 = vmatprep.subr.mxu0 0.0
    %1899 = vmatpush1.msra.mxu0 0.0
    %1900 = vmatprep.subr.mxu0 0.0
    %1901 = vmatpush1.msra.mxu0 0.0
    %1902 = vmatprep.subr.mxu0 0.0
    %1903 = vmatpush1.msra.mxu0 0.0
    %1904 = vmatprep.subr.mxu0 0.0
    %1905 = vmatpush1.msra.mxu0 0.0
    %1906 = vmatprep.subr.mxu0 0.0
    %1907 = vmatpush1.msra.mxu0 0.0
    %1908 = vmatprep.subr.mxu0 0.0
    %1909 = vmatpush1.msra.mxu0 0.0
    %1910 = vmatprep.mubr.f32.mxu0 0.0
    %1911 = vmatmul.mubr.f32.gmra.mrb[0].mxu0 %v1838
    %v1912 = vpop.f32.mrb[0].mxu0
    %v1913 = vadd.f32 %v1830, %v1912
    %v1914 = vpop.f32.mrb[0].mxu0
    %v1915 = vadd.f32 %v1834, %v1914
    %1916 = vmatprep.mubr.f32.mxu0 0.0
    %1917 = vmatmul.mubr.f32.gmra.mrb[0].mxu0 %v1841
    %v1918 = vpop.f32.mrb[0].mxu0
    %v1919 = vadd.f32 %v1830, %v1918
    %v1920 = vpop.f32.mrb[0].mxu0
    %v1921 = vadd.f32 %v1834, %v1920
    %1922 = vmatprep.mubr.f32.mxu0 0.0
    %1923 = vmatmul.mubr.f32.gmra.mrb[0].mxu0 %v1844
    %v1924 = vpop.f32.mrb[0].mxu0
    %v1925 = vadd.f32 %v1830, %v1924
    %v1926 = vpop.f32.mrb[0].mxu0
    %v1927 = vadd.f32 %v1834, %v1926
    %1928 = vdwg.mxu0
    %v1929 = vmul.f32 %v1913, 0.5
    %v1930 = vmul.f32 %v1915, 0.5
    %v1931 = vmul.f32 %v1919, 0.5
    %v1932 = vmul.f32 %v1921, 0.5
    %v1933 = vmul.f32 %v1925, 0.5
    %v1934 = vmul.f32 %v1927, 0.5
    %v1935 = vmul.f32 %v1913, 0.70710677
    %v1936 = vmul.f32 %v1915, 0.70710677
    %v1937 = vmul.f32 %v1919, 0.70710677
    %v1938 = vmul.f32 %v1921, 0.70710677
    %v1939 = vmul.f32 %v1925, 0.70710677
    %v1940 = vmul.f32 %v1927, 0.70710677
    %v1941 = verf.f32.pop %v1935
    %v1942 = verf.f32.pop %v1936
    %v1943 = verf.f32.pop %v1937
    %v1944 = verf.f32.pop %v1938
    %v1945 = verf.f32.pop %v1939
    %v1946 = verf.f32.pop %v1940
    %v1947 = vadd.f32 %v1941, 1.0
    %v1948 = vadd.f32 %v1942, 1.0
    %v1949 = vadd.f32 %v1943, 1.0
    %v1950 = vadd.f32 %v1944, 1.0
    %v1951 = vadd.f32 %v1945, 1.0
    %v1952 = vadd.f32 %v1946, 1.0
    %v1953 = vmul.f32 %v1929, %v1947
    %v1954 = vmul.f32 %v1930, %v1948
    %v1955 = vmul.f32 %v1931, %v1949
    %v1956 = vmul.f32 %v1932, %v1950
    %v1957 = vmul.f32 %v1933, %v1951
    %v1958 = vmul.f32 %v1934, %v1952
    %v1959 = vld [vmem:[%s49] sm:$0xff]
    %v1960 = vld [vmem:[%s49 + $0x8] sm:$0xff]
    %v1961 = vld [vmem:[%s49 + $0x10] sm:$0xff]
    %v1962 = vld [vmem:[%s49 + $0x18] sm:$0xff]
    %v1963 = vld [vmem:[%s49 + $0x20] sm:$0xff]
    %v1964 = vld [vmem:[%s49 + $0x28] sm:$0xff]
    %v1965 = vld [vmem:[%s49 + $0x30] sm:$0xff]
    %v1966 = vld [vmem:[%s49 + $0x38] sm:$0xff]
    %v1967 = vld [vmem:[%s49 + $0x40] sm:$0xff]
    %v1968 = vld [vmem:[%s49 + $0x48] sm:$0xff]
    %v1969 = vld [vmem:[%s49 + $0x50] sm:$0xff]
    %v1970 = vld [vmem:[%s49 + $0x58] sm:$0xff]
    %v1971 = vld [vmem:[%s49 + $0x60] sm:$0xff]
    %v1972 = vld [vmem:[%s49 + $0x68] sm:$0xff]
    %v1973 = vld [vmem:[%s49 + $0x70] sm:$0xff]
    %v1974 = vld [vmem:[%s49 + $0x78] sm:$0xff]
    %v1975 = vld [vmem:[%s49 + $0x80] sm:$0xff]
    %v1976 = vld [vmem:[%s49 + $0x88] sm:$0xff]
    %v1977 = vld [vmem:[%s49 + $0x90] sm:$0xff]
    %v1978 = vld [vmem:[%s49 + $0x98] sm:$0xff]
    %v1979 = vld [vmem:[%s49 + $0xa0] sm:$0xff]
    %v1980 = vld [vmem:[%s49 + $0xa8] sm:$0xff]
    %v1981 = vld [vmem:[%s49 + $0xb0] sm:$0xff]
    %v1982 = vld [vmem:[%s49 + $0xb8] sm:$0xff]
    %v1983 = vld [vmem:[%s49 + $0xc0] sm:$0xff]
    %v1984 = vld [vmem:[%s49 + $0xc8] sm:$0xff]
    %v1985 = vld [vmem:[%s49 + $0xd0] sm:$0xff]
    %v1986 = vld [vmem:[%s49 + $0xd8] sm:$0xff]
    %v1987 = vld [vmem:[%s49 + $0xe0] sm:$0xff]
    %v1988 = vld [vmem:[%s49 + $0xe8] sm:$0xff]
    %v1989 = vld [vmem:[%s49 + $0xf0] sm:$0xff]
    %v1990 = vld [vmem:[%s49 + $0xf8] sm:$0xff]
    %v1991 = vld [vmem:[%s51] sm:$0x1]
    %v1993 = vlaneseq
    %v1994 = vshrl.u32 %v1993, 7
    %v1995 = vsub.s32 0, %v1994
    %v1996 = vrot.slane %v1991, %v1995
    %1998 = vmatprep.subr.mxu0 0.0
    %1999 = vmatpush1.msra.mxu0 %v1959
    %2000 = vmatprep.subr.mxu0 0.0
    %2001 = vmatpush1.msra.mxu0 %v1960
    %2002 = vmatprep.subr.mxu0 0.0
    %2003 = vmatpush1.msra.mxu0 %v1961
    %2004 = vmatprep.subr.mxu0 0.0
    %2005 = vmatpush1.msra.mxu0 %v1962
    %2006 = vmatprep.subr.mxu0 0.0
    %2007 = vmatpush1.msra.mxu0 %v1963
    %2008 = vmatprep.subr.mxu0 0.0
    %2009 = vmatpush1.msra.mxu0 %v1964
    %2010 = vmatprep.subr.mxu0 0.0
    %2011 = vmatpush1.msra.mxu0 %v1965
    %2012 = vmatprep.subr.mxu0 0.0
    %2013 = vmatpush1.msra.mxu0 %v1966
    %2014 = vmatprep.subr.mxu0 0.0
    %2015 = vmatpush1.msra.mxu0 %v1967
    %2016 = vmatprep.subr.mxu0 0.0
    %2017 = vmatpush1.msra.mxu0 %v1968
    %2018 = vmatprep.subr.mxu0 0.0
    %2019 = vmatpush1.msra.mxu0 %v1969
    %2020 = vmatprep.subr.mxu0 0.0
    %2021 = vmatpush1.msra.mxu0 %v1970
    %2022 = vmatprep.subr.mxu0 0.0
    %2023 = vmatpush1.msra.mxu0 %v1971
    %2024 = vmatprep.subr.mxu0 0.0
    %2025 = vmatpush1.msra.mxu0 %v1972
    %2026 = vmatprep.subr.mxu0 0.0
    %2027 = vmatpush1.msra.mxu0 %v1973
    %2028 = vmatprep.subr.mxu0 0.0
    %2029 = vmatpush1.msra.mxu0 %v1974
    %2030 = vmatprep.subr.mxu0 0.0
    %2031 = vmatpush1.msra.mxu0 %v1975
    %2032 = vmatprep.subr.mxu0 0.0
    %2033 = vmatpush1.msra.mxu0 %v1976
    %2034 = vmatprep.subr.mxu0 0.0
    %2035 = vmatpush1.msra.mxu0 %v1977
    %2036 = vmatprep.subr.mxu0 0.0
    %2037 = vmatpush1.msra.mxu0 %v1978
    %2038 = vmatprep.subr.mxu0 0.0
    %2039 = vmatpush1.msra.mxu0 %v1979
    %2040 = vmatprep.subr.mxu0 0.0
    %2041 = vmatpush1.msra.mxu0 %v1980
    %2042 = vmatprep.subr.mxu0 0.0
    %2043 = vmatpush1.msra.mxu0 %v1981
    %2044 = vmatprep.subr.mxu0 0.0
    %2045 = vmatpush1.msra.mxu0 %v1982
    %2046 = vmatprep.subr.mxu0 0.0
    %2047 = vmatpush1.msra.mxu0 %v1983
    %2048 = vmatprep.subr.mxu0 0.0
    %2049 = vmatpush1.msra.mxu0 %v1984
    %2050 = vmatprep.subr.mxu0 0.0
    %2051 = vmatpush1.msra.mxu0 %v1985
    %2052 = vmatprep.subr.mxu0 0.0
    %2053 = vmatpush1.msra.mxu0 %v1986
    %2054 = vmatprep.subr.mxu0 0.0
    %2055 = vmatpush1.msra.mxu0 %v1987
    %2056 = vmatprep.subr.mxu0 0.0
    %2057 = vmatpush1.msra.mxu0 %v1988
    %2058 = vmatprep.subr.mxu0 0.0
    %2059 = vmatpush1.msra.mxu0 %v1989
    %2060 = vmatprep.subr.mxu0 0.0
    %2061 = vmatpush1.msra.mxu0 %v1990
    %2062 = vmatprep.mubr.f32.mxu0 %v1954
    %2063 = vmatmul.mubr.f32.gmra.mrb[0].mxu0 %v1953
    %v2064 = vpop.f32.mrb[0].mxu0
    %v2065 = vadd.f32 %v1996, %v2064
    %v2066 = vpop.f32.mrb[0].mxu0
    %2067 = vmatprep.mubr.f32.mxu0 %v1956
    %2068 = vmatmul.mubr.f32.gmra.mrb[0].mxu0 %v1955
    %v2069 = vpop.f32.mrb[0].mxu0
    %v2070 = vadd.f32 %v1996, %v2069
    %v2071 = vpop.f32.mrb[0].mxu0
    %2072 = vmatprep.mubr.f32.mxu0 %v1958
    %2073 = vmatmul.mubr.f32.gmra.mrb[0].mxu0 %v1957
    %v2074 = vpop.f32.mrb[0].mxu0
    %v2075 = vadd.f32 %v1996, %v2074
    %v2076 = vpop.f32.mrb[0].mxu0
    %2077 = vdwg.mxu0
    %v2078 = vadd.f32 %v1747, %v2065
    %v2079 = vadd.f32 %v1748, %v2070
    %v2080 = vadd.f32 %v1749, %v2075
    %s2081 = scalar_lea.vmem %s29, 1
    %v2082 = vld [vmem:[%s2081] sm:$0x1]
    %s2083 = scalar_lea.vmem %s31, 1
    %v2084 = vld [vmem:[%s2083] sm:$0x1]
    %v2085 = vsel %vm454, %v2078, 0.0
    %2086 = vadd.xlane.f32.xlu0 %v2085
    %v2087 = vpop.xlane.xlu0 %2086
    %v2088 = vsel %vm454, %v2079, 0.0
    %2089 = vadd.xlane.f32.xlu0 %v2088
    %v2090 = vpop.xlane.xlu0 %2089
    %v2091 = vsel %vm461, %v2080, 0.0
    %2092 = vadd.xlane.f32.xlu0 %v2091
    %v2093 = vpop.xlane.xlu0 %2092
    %v2094 = vmul.f32 %v2087, %v465
    %v2095 = vmul.f32 %v2090, %v465
    %v2096 = vmul.f32 %v2093, %v465
    %v2097 = vsub.f32 %v2078, %v2094
    %v2098 = vsub.f32 %v2079, %v2095
    %v2099 = vsub.f32 %v2080, %v2096
    %v2100 = vmul.f32 %v2097, %v2097
    %v2101 = vmul.f32 %v2098, %v2098
    %v2102 = vmul.f32 %v2099, %v2099
    %v2103 = vsel %vm454, %v2100, 0.0
    %2104 = vadd.xlane.f32.xlu0 %v2103
    %v2105 = vpop.xlane.xlu0 %2104
    %v2106 = vsel %vm454, %v2101, 0.0
    %2107 = vadd.xlane.f32.xlu0 %v2106
    %v2108 = vpop.xlane.xlu0 %2107
    %v2109 = vsel %vm461, %v2102, 0.0
    %2110 = vadd.xlane.f32.xlu0 %v2109
    %v2111 = vpop.xlane.xlu0 %2110
    %v2112 = vmul.f32 %v2105, %v465
    %v2113 = vmul.f32 %v2108, %v465
    %v2114 = vmul.f32 %v2111, %v465
    %v2115 = vadd.f32 %v2112, 1e-05
    %v2116 = vadd.f32 %v2113, 1e-05
    %v2117 = vadd.f32 %v2114, 1e-05
    %v2118 = vrsqrt.pop %v2115
    %v2119 = vrsqrt.pop %v2116
    %v2120 = vrsqrt.pop %v2117
    %v2121 = vmul.f32 %v2097, %v2118
    %v2122 = vmul.f32 %v2098, %v2119
    %v2123 = vmul.f32 %v2099, %v2120
    %v2125 = vlaneseq
    %v2126 = vshrl.u32 %v2125, 7
    %v2127 = vsub.s32 0, %v2126
    %v2128 = vrot.slane %v2082, %v2127
    %v2130 = vmul.f32 %v2121, %v2128
    %v2131 = vmul.f32 %v2122, %v2128
    %v2132 = vmul.f32 %v2123, %v2128
    %v2134 = vlaneseq
    %v2135 = vshrl.u32 %v2134, 7
    %v2136 = vsub.s32 0, %v2135
    %v2137 = vrot.slane %v2084, %v2136
    %v2139 = vadd.f32 %v2130, %v2137
    %v2140 = vadd.f32 %v2131, %v2137
    %v2141 = vadd.f32 %v2132, %v2137
    %s2142 = scalar_lea.vmem %s33, 128
    %v2143 = vld [vmem:[%s2142] sm:$0xff]
    %v2144 = vld [vmem:[%s2142 + $0x8] sm:$0xff]
    %v2145 = vld [vmem:[%s2142 + $0x10] sm:$0xff]
    %v2146 = vld [vmem:[%s2142 + $0x18] sm:$0xff]
    %v2147 = vld [vmem:[%s2142 + $0x20] sm:$0xff]
    %v2148 = vld [vmem:[%s2142 + $0x28] sm:$0xff]
    %v2149 = vld [vmem:[%s2142 + $0x30] sm:$0xff]
    %v2150 = vld [vmem:[%s2142 + $0x38] sm:$0xff]
    %v2151 = vld [vmem:[%s2142 + $0x40] sm:$0xff]
    %v2152 = vld [vmem:[%s2142 + $0x48] sm:$0xff]
    %v2153 = vld [vmem:[%s2142 + $0x50] sm:$0xff]
    %v2154 = vld [vmem:[%s2142 + $0x58] sm:$0xff]
    %v2155 = vld [vmem:[%s2142 + $0x60] sm:$0xff]
    %v2156 = vld [vmem:[%s2142 + $0x68] sm:$0xff]
    %v2157 = vld [vmem:[%s2142 + $0x70] sm:$0xff]
    %v2158 = vld [vmem:[%s2142 + $0x78] sm:$0xff]
    %s2159 = scalar_lea.vmem %s35, 2
    %v2160 = vld [vmem:[%s2159] sm:$0x3]
    %v2162 = vlaneseq
    %v2163 = vshrl.u32 %v2162, 7
    %v2164 = vsub.s32 0, %v2163
    %v2165 = vrot.slane %v2160, %v2164
    %v2166 = vlaneseq
    %v2167 = vshrl.u32 %v2166, 7
    %v2168 = vsub.s32 1, %v2167
    %v2169 = vrot.slane %v2160, %v2168
    %v2173 = vsel %vm454, %v2139, 0
    %v2176 = vsel %vm454, %v2140, 0
    %v2179 = vsel %vm454, %v2141, 0
    %2181 = vmatprep.subr.mxu0 %v2144
    %2182 = vmatpush1.msra.mxu0 %v2143
    %2183 = vmatprep.subr.mxu0 %v2146
    %2184 = vmatpush1.msra.mxu0 %v2145
    %2185 = vmatprep.subr.mxu0 %v2148
    %2186 = vmatpush1.msra.mxu0 %v2147
    %2187 = vmatprep.subr.mxu0 %v2150
    %2188 = vmatpush1.msra.mxu0 %v2149
    %2189 = vmatprep.subr.mxu0 %v2152
    %2190 = vmatpush1.msra.mxu0 %v2151
    %2191 = vmatprep.subr.mxu0 %v2154
    %2192 = vmatpush1.msra.mxu0 %v2153
    %2193 = vmatprep.subr.mxu0 %v2156
    %2194 = vmatpush1.msra.mxu0 %v2155
    %2195 = vmatprep.subr.mxu0 %v2158
    %2196 = vmatpush1.msra.mxu0 %v2157
    %2197 = vmatprep.subr.mxu0 0.0
    %2198 = vmatpush1.msra.mxu0 0.0
    %2199 = vmatprep.subr.mxu0 0.0
    %2200 = vmatpush1.msra.mxu0 0.0
    %2201 = vmatprep.subr.mxu0 0.0
    %2202 = vmatpush1.msra.mxu0 0.0
    %2203 = vmatprep.subr.mxu0 0.0
    %2204 = vmatpush1.msra.mxu0 0.0
    %2205 = vmatprep.subr.mxu0 0.0
    %2206 = vmatpush1.msra.mxu0 0.0
    %2207 = vmatprep.subr.mxu0 0.0
    %2208 = vmatpush1.msra.mxu0 0.0
    %2209 = vmatprep.subr.mxu0 0.0
    %2210 = vmatpush1.msra.mxu0 0.0
    %2211 = vmatprep.subr.mxu0 0.0
    %2212 = vmatpush1.msra.mxu0 0.0
    %2213 = vmatprep.subr.mxu0 0.0
    %2214 = vmatpush1.msra.mxu0 0.0
    %2215 = vmatprep.subr.mxu0 0.0
    %2216 = vmatpush1.msra.mxu0 0.0
    %2217 = vmatprep.subr.mxu0 0.0
    %2218 = vmatpush1.msra.mxu0 0.0
    %2219 = vmatprep.subr.mxu0 0.0
    %2220 = vmatpush1.msra.mxu0 0.0
    %2221 = vmatprep.subr.mxu0 0.0
    %2222 = vmatpush1.msra.mxu0 0.0
    %2223 = vmatprep.subr.mxu0 0.0
    %2224 = vmatpush1.msra.mxu0 0.0
    %2225 = vmatprep.subr.mxu0 0.0
    %2226 = vmatpush1.msra.mxu0 0.0
    %2227 = vmatprep.subr.mxu0 0.0
    %2228 = vmatpush1.msra.mxu0 0.0
    %2229 = vmatprep.subr.mxu0 0.0
    %2230 = vmatpush1.msra.mxu0 0.0
    %2231 = vmatprep.subr.mxu0 0.0
    %2232 = vmatpush1.msra.mxu0 0.0
    %2233 = vmatprep.subr.mxu0 0.0
    %2234 = vmatpush1.msra.mxu0 0.0
    %2235 = vmatprep.subr.mxu0 0.0
    %2236 = vmatpush1.msra.mxu0 0.0
    %2237 = vmatprep.subr.mxu0 0.0
    %2238 = vmatpush1.msra.mxu0 0.0
    %2239 = vmatprep.subr.mxu0 0.0
    %2240 = vmatpush1.msra.mxu0 0.0
    %2241 = vmatprep.subr.mxu0 0.0
    %2242 = vmatpush1.msra.mxu0 0.0
    %2243 = vmatprep.subr.mxu0 0.0
    %2244 = vmatpush1.msra.mxu0 0.0
    %2245 = vmatprep.mubr.f32.mxu0 0.0
    %2246 = vmatmul.mubr.f32.gmra.mrb[0].mxu0 %v2173
    %v2247 = vpop.f32.mrb[0].mxu0
    %v2248 = vadd.f32 %v2165, %v2247
    %v2249 = vpop.f32.mrb[0].mxu0
    %v2250 = vadd.f32 %v2169, %v2249
    %2251 = vmatprep.mubr.f32.mxu0 0.0
    %2252 = vmatmul.mubr.f32.gmra.mrb[0].mxu0 %v2176
    %v2253 = vpop.f32.mrb[0].mxu0
    %v2254 = vadd.f32 %v2165, %v2253
    %v2255 = vpop.f32.mrb[0].mxu0
    %v2256 = vadd.f32 %v2169, %v2255
    %2257 = vmatprep.mubr.f32.mxu0 0.0
    %2258 = vmatmul.mubr.f32.gmra.mrb[0].mxu0 %v2179
    %v2259 = vpop.f32.mrb[0].mxu0
    %v2260 = vadd.f32 %v2165, %v2259
    %v2261 = vpop.f32.mrb[0].mxu0
    %v2262 = vadd.f32 %v2169, %v2261
    %2263 = vdwg.mxu0
    %2267 = vrot.lane.b32.xlu0 %v2248, 64
    %v2268 = vpop.permute.xlu0 %2267
    %2269 = vrot.lane.b32.xlu0 %v2254, 64
    %v2270 = vpop.permute.xlu0 %2269
    %2271 = vrot.lane.b32.xlu0 %v2260, 64
    %v2272 = vpop.permute.xlu0 %2271
    %v2273 = vsel %vm175, %v2248, 0
    %v2275 = vsel %vm175, %v2254, 0
    %v2277 = vsel %vm175, %v2260, 0
    %v2279 = vsel %vm175, %v2268, 0
    %v2281 = vsel %vm175, %v2270, 0
    %v2283 = vsel %vm175, %v2272, 0
    %2285 = vmatprep.subr.mxu0 0.0
    %2286 = vmatpush1.xpose.msra.mxu0 %v2279
    %2287 = vmatprep.subr.mxu0 0.0
    %2288 = vmatpush1.xpose.msra.mxu0 %v2281
    %2289 = vmatprep.subr.mxu0 0.0
    %2290 = vmatpush1.xpose.msra.mxu0 %v2283
    %2291 = vmatprep.subr.mxu0 0.0
    %2292 = vmatpush1.xpose.msra.mxu0 0.0
    %2293 = vmatprep.subr.mxu0 0.0
    %2294 = vmatpush1.xpose.msra.mxu0 0.0
    %2295 = vmatprep.subr.mxu0 0.0
    %2296 = vmatpush1.xpose.msra.mxu0 0.0
    %2297 = vmatprep.subr.mxu0 0.0
    %2298 = vmatpush1.xpose.msra.mxu0 0.0
    %2299 = vmatprep.subr.mxu0 0.0
    %2300 = vmatpush1.xpose.msra.mxu0 0.0
    %2301 = vmatprep.subr.mxu0 0.0
    %2302 = vmatpush1.xpose.msra.mxu0 0.0
    %2303 = vmatprep.subr.mxu0 0.0
    %2304 = vmatpush1.xpose.msra.mxu0 0.0
    %2305 = vmatprep.subr.mxu0 0.0
    %2306 = vmatpush1.xpose.msra.mxu0 0.0
    %2307 = vmatprep.subr.mxu0 0.0
    %2308 = vmatpush1.xpose.msra.mxu0 0.0
    %2309 = vmatprep.subr.mxu0 0.0
    %2310 = vmatpush1.xpose.msra.mxu0 0.0
    %2311 = vmatprep.subr.mxu0 0.0
    %2312 = vmatpush1.xpose.msra.mxu0 0.0
    %2313 = vmatprep.subr.mxu0 0.0
    %2314 = vmatpush1.xpose.msra.mxu0 0.0
    %2315 = vmatprep.subr.mxu0 0.0
    %2316 = vmatpush1.xpose.msra.mxu0 0.0
    %2317 = vmatprep.subr.mxu0 0.0
    %2318 = vmatpush1.xpose.msra.mxu0 0.0
    %2319 = vmatprep.subr.mxu0 0.0
    %2320 = vmatpush1.xpose.msra.mxu0 0.0
    %2321 = vmatprep.subr.mxu0 0.0
    %2322 = vmatpush1.xpose.msra.mxu0 0.0
    %2323 = vmatprep.subr.mxu0 0.0
    %2324 = vmatpush1.xpose.msra.mxu0 0.0
    %2325 = vmatprep.subr.mxu0 0.0
    %2326 = vmatpush1.xpose.msra.mxu0 0.0
    %2327 = vmatprep.subr.mxu0 0.0
    %2328 = vmatpush1.xpose.msra.mxu0 0.0
    %2329 = vmatprep.subr.mxu0 0.0
    %2330 = vmatpush1.xpose.msra.mxu0 0.0
    %2331 = vmatprep.subr.mxu0 0.0
    %2332 = vmatpush1.xpose.msra.mxu0 0.0
    %2333 = vmatprep.subr.mxu0 0.0
    %2334 = vmatpush1.xpose.msra.mxu0 0.0
    %2335 = vmatprep.subr.mxu0 0.0
    %2336 = vmatpush1.xpose.msra.mxu0 0.0
    %2337 = vmatprep.subr.mxu0 0.0
    %2338 = vmatpush1.xpose.msra.mxu0 0.0
    %2339 = vmatprep.subr.mxu0 0.0
    %2340 = vmatpush1.xpose.msra.mxu0 0.0
    %2341 = vmatprep.subr.mxu0 0.0
    %2342 = vmatpush1.xpose.msra.mxu0 0.0
    %2343 = vmatprep.subr.mxu0 0.0
    %2344 = vmatpush1.xpose.msra.mxu0 0.0
    %2345 = vmatprep.subr.mxu0 0.0
    %2346 = vmatpush1.xpose.msra.mxu0 0.0
    %2347 = vmatprep.subr.mxu0 0.0
    %2348 = vmatpush1.xpose.msra.mxu0 0.0
    %2349 = vmatprep.mubr.f32.mxu0 0.0
    %2350 = vmatmul.mubr.f32.gmra.mrb[0].mxu0 %v2273
    %v2351 = vpop.f32.mrb[0].mxu0
    %v2352 = vadd.f32 0.0, %v2351
    %v2353 = vpop.f32.mrb[0].mxu0
    %2354 = vmatprep.mubr.f32.mxu0 0.0
    %2355 = vmatmul.mubr.f32.gmra.mrb[0].mxu0 %v2275
    %v2356 = vpop.f32.mrb[0].mxu0
    %v2357 = vadd.f32 0.0, %v2356
    %v2358 = vpop.f32.mrb[0].mxu0
    %2359 = vmatprep.mubr.f32.mxu0 0.0
    %2360 = vmatmul.mubr.f32.gmra.mrb[0].mxu0 %v2277
    %v2361 = vpop.f32.mrb[0].mxu0
    %v2362 = vadd.f32 0.0, %v2361
    %v2363 = vpop.f32.mrb[0].mxu0
    %2364 = vdwg.mxu0
    %v2365 = vmul.f32 %v2352, 0.25
    %v2366 = vmul.f32 %v2357, 0.25
    %v2367 = vmul.f32 %v2362, 0.25
    %v2368 = vadd.f32 %v2365, %v137
    %v2369 = vadd.f32 %v2366, %v138
    %v2370 = vadd.f32 %v2367, %v139
    %v2371 = vsel %vm741, %v2368, -inf
    %2372 = vmax.xlane.f32.xlu0 %v2371
    %v2373 = vpop.xlane.xlu0 %2372
    %v2374 = vsel %vm741, %v2369, -inf
    %2375 = vmax.xlane.f32.xlu0 %v2374
    %v2376 = vpop.xlane.xlu0 %2375
    %v2377 = vsel %vm748, %v2370, -inf
    %2378 = vmax.xlane.f32.xlu0 %v2377
    %v2379 = vpop.xlane.xlu0 %2378
    %v2380 = vsub.f32 %v2368, %v2373
    %v2381 = vsub.f32 %v2369, %v2376
    %v2382 = vsub.f32 %v2370, %v2379
    %v2383 = vmul.f32 %v2380, 1.442695
    %v2384 = vpow.pop %v2383
    %v2385 = vmul.f32 %v2381, 1.442695
    %v2386 = vpow.pop %v2385
    %v2387 = vmul.f32 %v2382, 1.442695
    %v2388 = vpow.pop %v2387
    %v2389 = vsel %vm741, %v2384, 0.0
    %2390 = vadd.xlane.f32.xlu0 %v2389
    %v2391 = vpop.xlane.xlu0 %2390
    %v2392 = vsel %vm741, %v2386, 0.0
    %2393 = vadd.xlane.f32.xlu0 %v2392
    %v2394 = vpop.xlane.xlu0 %2393
    %v2395 = vsel %vm748, %v2388, 0.0
    %2396 = vadd.xlane.f32.xlu0 %v2395
    %v2397 = vpop.xlane.xlu0 %2396
    %v2398 = vrcp.pop %v2391
    %v2399 = vrcp.pop %v2394
    %v2400 = vrcp.pop %v2397
    %v2401 = vmul.f32 %v2384, %v2398
    %v2402 = vmul.f32 %v2386, %v2399
    %v2403 = vmul.f32 %v2388, %v2400
    %v2405 = vsel %vm741, %v2401, 0
    %v2408 = vsel %vm741, %v2402, 0
    %v2411 = vsel %vm741, %v2403, 0
    %v2414 = vsel %vm428, %v2262, 0
    %2416 = vmatprep.subr.mxu0 0.0
    %2417 = vmatpush1.msra.mxu0 %v2250
    %2418 = vmatprep.subr.mxu0 0.0
    %2419 = vmatpush1.msra.mxu0 %v2256
    %2420 = vmatprep.subr.mxu0 0.0
    %2421 = vmatpush1.msra.mxu0 %v2414
    %2422 = vmatprep.subr.mxu0 0.0
    %2423 = vmatpush1.msra.mxu0 0.0
    %2424 = vmatprep.subr.mxu0 0.0
    %2425 = vmatpush1.msra.mxu0 0.0
    %2426 = vmatprep.subr.mxu0 0.0
    %2427 = vmatpush1.msra.mxu0 0.0
    %2428 = vmatprep.subr.mxu0 0.0
    %2429 = vmatpush1.msra.mxu0 0.0
    %2430 = vmatprep.subr.mxu0 0.0
    %2431 = vmatpush1.msra.mxu0 0.0
    %2432 = vmatprep.subr.mxu0 0.0
    %2433 = vmatpush1.msra.mxu0 0.0
    %2434 = vmatprep.subr.mxu0 0.0
    %2435 = vmatpush1.msra.mxu0 0.0
    %2436 = vmatprep.subr.mxu0 0.0
    %2437 = vmatpush1.msra.mxu0 0.0
    %2438 = vmatprep.subr.mxu0 0.0
    %2439 = vmatpush1.msra.mxu0 0.0
    %2440 = vmatprep.subr.mxu0 0.0
    %2441 = vmatpush1.msra.mxu0 0.0
    %2442 = vmatprep.subr.mxu0 0.0
    %2443 = vmatpush1.msra.mxu0 0.0
    %2444 = vmatprep.subr.mxu0 0.0
    %2445 = vmatpush1.msra.mxu0 0.0
    %2446 = vmatprep.subr.mxu0 0.0
    %2447 = vmatpush1.msra.mxu0 0.0
    %2448 = vmatprep.subr.mxu0 0.0
    %2449 = vmatpush1.msra.mxu0 0.0
    %2450 = vmatprep.subr.mxu0 0.0
    %2451 = vmatpush1.msra.mxu0 0.0
    %2452 = vmatprep.subr.mxu0 0.0
    %2453 = vmatpush1.msra.mxu0 0.0
    %2454 = vmatprep.subr.mxu0 0.0
    %2455 = vmatpush1.msra.mxu0 0.0
    %2456 = vmatprep.subr.mxu0 0.0
    %2457 = vmatpush1.msra.mxu0 0.0
    %2458 = vmatprep.subr.mxu0 0.0
    %2459 = vmatpush1.msra.mxu0 0.0
    %2460 = vmatprep.subr.mxu0 0.0
    %2461 = vmatpush1.msra.mxu0 0.0
    %2462 = vmatprep.subr.mxu0 0.0
    %2463 = vmatpush1.msra.mxu0 0.0
    %2464 = vmatprep.subr.mxu0 0.0
    %2465 = vmatpush1.msra.mxu0 0.0
    %2466 = vmatprep.subr.mxu0 0.0
    %2467 = vmatpush1.msra.mxu0 0.0
    %2468 = vmatprep.subr.mxu0 0.0
    %2469 = vmatpush1.msra.mxu0 0.0
    %2470 = vmatprep.subr.mxu0 0.0
    %2471 = vmatpush1.msra.mxu0 0.0
    %2472 = vmatprep.subr.mxu0 0.0
    %2473 = vmatpush1.msra.mxu0 0.0
    %2474 = vmatprep.subr.mxu0 0.0
    %2475 = vmatpush1.msra.mxu0 0.0
    %2476 = vmatprep.subr.mxu0 0.0
    %2477 = vmatpush1.msra.mxu0 0.0
    %2478 = vmatprep.subr.mxu0 0.0
    %2479 = vmatpush1.msra.mxu0 0.0
    %2480 = vmatprep.mubr.f32.mxu0 0.0
    %2481 = vmatmul.mubr.f32.gmra.mrb[0].mxu0 %v2405
    %v2482 = vpop.f32.mrb[0].mxu0
    %v2483 = vadd.f32 0.0, %v2482
    %v2484 = vpop.f32.mrb[0].mxu0
    %2485 = vmatprep.mubr.f32.mxu0 0.0
    %2486 = vmatmul.mubr.f32.gmra.mrb[0].mxu0 %v2408
    %v2487 = vpop.f32.mrb[0].mxu0
    %v2488 = vadd.f32 0.0, %v2487
    %v2489 = vpop.f32.mrb[0].mxu0
    %2490 = vmatprep.mubr.f32.mxu0 0.0
    %2491 = vmatmul.mubr.f32.gmra.mrb[0].mxu0 %v2411
    %v2492 = vpop.f32.mrb[0].mxu0
    %v2493 = vadd.f32 0.0, %v2492
    %v2494 = vpop.f32.mrb[0].mxu0
    %2495 = vdwg.mxu0
    %2496 = vrot.lane.b32.xlu0 %v2248, 112
    %v2497 = vpop.permute.xlu0 %2496
    %2498 = vrot.lane.b32.xlu0 %v2254, 112
    %v2499 = vpop.permute.xlu0 %2498
    %2500 = vrot.lane.b32.xlu0 %v2260, 112
    %v2501 = vpop.permute.xlu0 %2500
    %2502 = vrot.lane.b32.xlu0 %v2248, 48
    %v2503 = vpop.permute.xlu0 %2502
    %2504 = vrot.lane.b32.xlu0 %v2254, 48
    %v2505 = vpop.permute.xlu0 %2504
    %2506 = vrot.lane.b32.xlu0 %v2260, 48
    %v2507 = vpop.permute.xlu0 %2506
    %v2508 = vsel %vm175, %v2497, 0
    %v2510 = vsel %vm175, %v2499, 0
    %v2512 = vsel %vm175, %v2501, 0
    %v2514 = vsel %vm175, %v2503, 0
    %v2516 = vsel %vm175, %v2505, 0
    %v2518 = vsel %vm175, %v2507, 0
    %2520 = vmatprep.subr.mxu0 0.0
    %2521 = vmatpush1.xpose.msra.mxu0 %v2514
    %2522 = vmatprep.subr.mxu0 0.0
    %2523 = vmatpush1.xpose.msra.mxu0 %v2516
    %2524 = vmatprep.subr.mxu0 0.0
    %2525 = vmatpush1.xpose.msra.mxu0 %v2518
    %2526 = vmatprep.subr.mxu0 0.0
    %2527 = vmatpush1.xpose.msra.mxu0 0.0
    %2528 = vmatprep.subr.mxu0 0.0
    %2529 = vmatpush1.xpose.msra.mxu0 0.0
    %2530 = vmatprep.subr.mxu0 0.0
    %2531 = vmatpush1.xpose.msra.mxu0 0.0
    %2532 = vmatprep.subr.mxu0 0.0
    %2533 = vmatpush1.xpose.msra.mxu0 0.0
    %2534 = vmatprep.subr.mxu0 0.0
    %2535 = vmatpush1.xpose.msra.mxu0 0.0
    %2536 = vmatprep.subr.mxu0 0.0
    %2537 = vmatpush1.xpose.msra.mxu0 0.0
    %2538 = vmatprep.subr.mxu0 0.0
    %2539 = vmatpush1.xpose.msra.mxu0 0.0
    %2540 = vmatprep.subr.mxu0 0.0
    %2541 = vmatpush1.xpose.msra.mxu0 0.0
    %2542 = vmatprep.subr.mxu0 0.0
    %2543 = vmatpush1.xpose.msra.mxu0 0.0
    %2544 = vmatprep.subr.mxu0 0.0
    %2545 = vmatpush1.xpose.msra.mxu0 0.0
    %2546 = vmatprep.subr.mxu0 0.0
    %2547 = vmatpush1.xpose.msra.mxu0 0.0
    %2548 = vmatprep.subr.mxu0 0.0
    %2549 = vmatpush1.xpose.msra.mxu0 0.0
    %2550 = vmatprep.subr.mxu0 0.0
    %2551 = vmatpush1.xpose.msra.mxu0 0.0
    %2552 = vmatprep.subr.mxu0 0.0
    %2553 = vmatpush1.xpose.msra.mxu0 0.0
    %2554 = vmatprep.subr.mxu0 0.0
    %2555 = vmatpush1.xpose.msra.mxu0 0.0
    %2556 = vmatprep.subr.mxu0 0.0
    %2557 = vmatpush1.xpose.msra.mxu0 0.0
    %2558 = vmatprep.subr.mxu0 0.0
    %2559 = vmatpush1.xpose.msra.mxu0 0.0
    %2560 = vmatprep.subr.mxu0 0.0
    %2561 = vmatpush1.xpose.msra.mxu0 0.0
    %2562 = vmatprep.subr.mxu0 0.0
    %2563 = vmatpush1.xpose.msra.mxu0 0.0
    %2564 = vmatprep.subr.mxu0 0.0
    %2565 = vmatpush1.xpose.msra.mxu0 0.0
    %2566 = vmatprep.subr.mxu0 0.0
    %2567 = vmatpush1.xpose.msra.mxu0 0.0
    %2568 = vmatprep.subr.mxu0 0.0
    %2569 = vmatpush1.xpose.msra.mxu0 0.0
    %2570 = vmatprep.subr.mxu0 0.0
    %2571 = vmatpush1.xpose.msra.mxu0 0.0
    %2572 = vmatprep.subr.mxu0 0.0
    %2573 = vmatpush1.xpose.msra.mxu0 0.0
    %2574 = vmatprep.subr.mxu0 0.0
    %2575 = vmatpush1.xpose.msra.mxu0 0.0
    %2576 = vmatprep.subr.mxu0 0.0
    %2577 = vmatpush1.xpose.msra.mxu0 0.0
    %2578 = vmatprep.subr.mxu0 0.0
    %2579 = vmatpush1.xpose.msra.mxu0 0.0
    %2580 = vmatprep.subr.mxu0 0.0
    %2581 = vmatpush1.xpose.msra.mxu0 0.0
    %2582 = vmatprep.subr.mxu0 0.0
    %2583 = vmatpush1.xpose.msra.mxu0 0.0
    %2584 = vmatprep.mubr.f32.mxu0 0.0
    %2585 = vmatmul.mubr.f32.gmra.mrb[0].mxu0 %v2508
    %v2586 = vpop.f32.mrb[0].mxu0
    %v2587 = vadd.f32 0.0, %v2586
    %v2588 = vpop.f32.mrb[0].mxu0
    %2589 = vmatprep.mubr.f32.mxu0 0.0
    %2590 = vmatmul.mubr.f32.gmra.mrb[0].mxu0 %v2510
    %v2591 = vpop.f32.mrb[0].mxu0
    %v2592 = vadd.f32 0.0, %v2591
    %v2593 = vpop.f32.mrb[0].mxu0
    %2594 = vmatprep.mubr.f32.mxu0 0.0
    %2595 = vmatmul.mubr.f32.gmra.mrb[0].mxu0 %v2512
    %v2596 = vpop.f32.mrb[0].mxu0
    %v2597 = vadd.f32 0.0, %v2596
    %v2598 = vpop.f32.mrb[0].mxu0
    %2599 = vdwg.mxu0
    %v2600 = vmul.f32 %v2587, 0.25
    %v2601 = vmul.f32 %v2592, 0.25
    %v2602 = vmul.f32 %v2597, 0.25
    %v2603 = vadd.f32 %v2600, %v137
    %v2604 = vadd.f32 %v2601, %v138
    %v2605 = vadd.f32 %v2602, %v139
    %v2606 = vsel %vm741, %v2603, -inf
    %2607 = vmax.xlane.f32.xlu0 %v2606
    %v2608 = vpop.xlane.xlu0 %2607
    %v2609 = vsel %vm741, %v2604, -inf
    %2610 = vmax.xlane.f32.xlu0 %v2609
    %v2611 = vpop.xlane.xlu0 %2610
    %v2612 = vsel %vm748, %v2605, -inf
    %2613 = vmax.xlane.f32.xlu0 %v2612
    %v2614 = vpop.xlane.xlu0 %2613
    %v2615 = vsub.f32 %v2603, %v2608
    %v2616 = vsub.f32 %v2604, %v2611
    %v2617 = vsub.f32 %v2605, %v2614
    %v2618 = vmul.f32 %v2615, 1.442695
    %v2619 = vpow.pop %v2618
    %v2620 = vmul.f32 %v2616, 1.442695
    %v2621 = vpow.pop %v2620
    %v2622 = vmul.f32 %v2617, 1.442695
    %v2623 = vpow.pop %v2622
    %v2624 = vsel %vm741, %v2619, 0.0
    %2625 = vadd.xlane.f32.xlu0 %v2624
    %v2626 = vpop.xlane.xlu0 %2625
    %v2627 = vsel %vm741, %v2621, 0.0
    %2628 = vadd.xlane.f32.xlu0 %v2627
    %v2629 = vpop.xlane.xlu0 %2628
    %v2630 = vsel %vm748, %v2623, 0.0
    %2631 = vadd.xlane.f32.xlu0 %v2630
    %v2632 = vpop.xlane.xlu0 %2631
    %v2633 = vrcp.pop %v2626
    %v2634 = vrcp.pop %v2629
    %v2635 = vrcp.pop %v2632
    %v2636 = vmul.f32 %v2619, %v2633
    %v2637 = vmul.f32 %v2621, %v2634
    %v2638 = vmul.f32 %v2623, %v2635
    %2641 = vrot.lane.b32.xlu0 %v2250, 112
    %v2642 = vpop.permute.xlu0 %2641
    %2643 = vrot.lane.b32.xlu0 %v2256, 112
    %v2644 = vpop.permute.xlu0 %2643
    %2645 = vrot.lane.b32.xlu0 %v2262, 112
    %v2646 = vpop.permute.xlu0 %2645
    %v2650 = vsel %vm741, %v2636, 0
    %v2653 = vsel %vm741, %v2637, 0
    %v2656 = vsel %vm741, %v2638, 0
    %v2658 = vsel %vm428, %v2646, 0
    %2660 = vmatprep.subr.mxu0 0.0
    %2661 = vmatpush1.msra.mxu0 %v2642
    %2662 = vmatprep.subr.mxu0 0.0
    %2663 = vmatpush1.msra.mxu0 %v2644
    %2664 = vmatprep.subr.mxu0 0.0
    %2665 = vmatpush1.msra.mxu0 %v2658
    %2666 = vmatprep.subr.mxu0 0.0
    %2667 = vmatpush1.msra.mxu0 0.0
    %2668 = vmatprep.subr.mxu0 0.0
    %2669 = vmatpush1.msra.mxu0 0.0
    %2670 = vmatprep.subr.mxu0 0.0
    %2671 = vmatpush1.msra.mxu0 0.0
    %2672 = vmatprep.subr.mxu0 0.0
    %2673 = vmatpush1.msra.mxu0 0.0
    %2674 = vmatprep.subr.mxu0 0.0
    %2675 = vmatpush1.msra.mxu0 0.0
    %2676 = vmatprep.subr.mxu0 0.0
    %2677 = vmatpush1.msra.mxu0 0.0
    %2678 = vmatprep.subr.mxu0 0.0
    %2679 = vmatpush1.msra.mxu0 0.0
    %2680 = vmatprep.subr.mxu0 0.0
    %2681 = vmatpush1.msra.mxu0 0.0
    %2682 = vmatprep.subr.mxu0 0.0
    %2683 = vmatpush1.msra.mxu0 0.0
    %2684 = vmatprep.subr.mxu0 0.0
    %2685 = vmatpush1.msra.mxu0 0.0
    %2686 = vmatprep.subr.mxu0 0.0
    %2687 = vmatpush1.msra.mxu0 0.0
    %2688 = vmatprep.subr.mxu0 0.0
    %2689 = vmatpush1.msra.mxu0 0.0
    %2690 = vmatprep.subr.mxu0 0.0
    %2691 = vmatpush1.msra.mxu0 0.0
    %2692 = vmatprep.subr.mxu0 0.0
    %2693 = vmatpush1.msra.mxu0 0.0
    %2694 = vmatprep.subr.mxu0 0.0
    %2695 = vmatpush1.msra.mxu0 0.0
    %2696 = vmatprep.subr.mxu0 0.0
    %2697 = vmatpush1.msra.mxu0 0.0
    %2698 = vmatprep.subr.mxu0 0.0
    %2699 = vmatpush1.msra.mxu0 0.0
    %2700 = vmatprep.subr.mxu0 0.0
    %2701 = vmatpush1.msra.mxu0 0.0
    %2702 = vmatprep.subr.mxu0 0.0
    %2703 = vmatpush1.msra.mxu0 0.0
    %2704 = vmatprep.subr.mxu0 0.0
    %2705 = vmatpush1.msra.mxu0 0.0
    %2706 = vmatprep.subr.mxu0 0.0
    %2707 = vmatpush1.msra.mxu0 0.0
    %2708 = vmatprep.subr.mxu0 0.0
    %2709 = vmatpush1.msra.mxu0 0.0
    %2710 = vmatprep.subr.mxu0 0.0
    %2711 = vmatpush1.msra.mxu0 0.0
    %2712 = vmatprep.subr.mxu0 0.0
    %2713 = vmatpush1.msra.mxu0 0.0
    %2714 = vmatprep.subr.mxu0 0.0
    %2715 = vmatpush1.msra.mxu0 0.0
    %2716 = vmatprep.subr.mxu0 0.0
    %2717 = vmatpush1.msra.mxu0 0.0
    %2718 = vmatprep.subr.mxu0 0.0
    %2719 = vmatpush1.msra.mxu0 0.0
    %2720 = vmatprep.subr.mxu0 0.0
    %2721 = vmatpush1.msra.mxu0 0.0
    %2722 = vmatprep.subr.mxu0 0.0
    %2723 = vmatpush1.msra.mxu0 0.0
    %2724 = vmatprep.mubr.f32.mxu0 0.0
    %2725 = vmatmul.mubr.f32.gmra.mrb[0].mxu0 %v2650
    %v2726 = vpop.f32.mrb[0].mxu0
    %v2727 = vadd.f32 0.0, %v2726
    %v2728 = vpop.f32.mrb[0].mxu0
    %2729 = vmatprep.mubr.f32.mxu0 0.0
    %2730 = vmatmul.mubr.f32.gmra.mrb[0].mxu0 %v2653
    %v2731 = vpop.f32.mrb[0].mxu0
    %v2732 = vadd.f32 0.0, %v2731
    %v2733 = vpop.f32.mrb[0].mxu0
    %2734 = vmatprep.mubr.f32.mxu0 0.0
    %2735 = vmatmul.mubr.f32.gmra.mrb[0].mxu0 %v2656
    %v2736 = vpop.f32.mrb[0].mxu0
    %v2737 = vadd.f32 0.0, %v2736
    %v2738 = vpop.f32.mrb[0].mxu0
    %2739 = vdwg.mxu0
    %2740 = vrot.lane.b32.xlu0 %v2248, 96
    %v2741 = vpop.permute.xlu0 %2740
    %2742 = vrot.lane.b32.xlu0 %v2254, 96
    %v2743 = vpop.permute.xlu0 %2742
    %2744 = vrot.lane.b32.xlu0 %v2260, 96
    %v2745 = vpop.permute.xlu0 %2744
    %2746 = vrot.lane.b32.xlu0 %v2248, 32
    %v2747 = vpop.permute.xlu0 %2746
    %2748 = vrot.lane.b32.xlu0 %v2254, 32
    %v2749 = vpop.permute.xlu0 %2748
    %2750 = vrot.lane.b32.xlu0 %v2260, 32
    %v2751 = vpop.permute.xlu0 %2750
    %v2752 = vsel %vm175, %v2741, 0
    %v2754 = vsel %vm175, %v2743, 0
    %v2756 = vsel %vm175, %v2745, 0
    %v2758 = vsel %vm175, %v2747, 0
    %v2760 = vsel %vm175, %v2749, 0
    %v2762 = vsel %vm175, %v2751, 0
    %2764 = vmatprep.subr.mxu0 0.0
    %2765 = vmatpush1.xpose.msra.mxu0 %v2758
    %2766 = vmatprep.subr.mxu0 0.0
    %2767 = vmatpush1.xpose.msra.mxu0 %v2760
    %2768 = vmatprep.subr.mxu0 0.0
    %2769 = vmatpush1.xpose.msra.mxu0 %v2762
    %2770 = vmatprep.subr.mxu0 0.0
    %2771 = vmatpush1.xpose.msra.mxu0 0.0
    %2772 = vmatprep.subr.mxu0 0.0
    %2773 = vmatpush1.xpose.msra.mxu0 0.0
    %2774 = vmatprep.subr.mxu0 0.0
    %2775 = vmatpush1.xpose.msra.mxu0 0.0
    %2776 = vmatprep.subr.mxu0 0.0
    %2777 = vmatpush1.xpose.msra.mxu0 0.0
    %2778 = vmatprep.subr.mxu0 0.0
    %2779 = vmatpush1.xpose.msra.mxu0 0.0
    %2780 = vmatprep.subr.mxu0 0.0
    %2781 = vmatpush1.xpose.msra.mxu0 0.0
    %2782 = vmatprep.subr.mxu0 0.0
    %2783 = vmatpush1.xpose.msra.mxu0 0.0
    %2784 = vmatprep.subr.mxu0 0.0
    %2785 = vmatpush1.xpose.msra.mxu0 0.0
    %2786 = vmatprep.subr.mxu0 0.0
    %2787 = vmatpush1.xpose.msra.mxu0 0.0
    %2788 = vmatprep.subr.mxu0 0.0
    %2789 = vmatpush1.xpose.msra.mxu0 0.0
    %2790 = vmatprep.subr.mxu0 0.0
    %2791 = vmatpush1.xpose.msra.mxu0 0.0
    %2792 = vmatprep.subr.mxu0 0.0
    %2793 = vmatpush1.xpose.msra.mxu0 0.0
    %2794 = vmatprep.subr.mxu0 0.0
    %2795 = vmatpush1.xpose.msra.mxu0 0.0
    %2796 = vmatprep.subr.mxu0 0.0
    %2797 = vmatpush1.xpose.msra.mxu0 0.0
    %2798 = vmatprep.subr.mxu0 0.0
    %2799 = vmatpush1.xpose.msra.mxu0 0.0
    %2800 = vmatprep.subr.mxu0 0.0
    %2801 = vmatpush1.xpose.msra.mxu0 0.0
    %2802 = vmatprep.subr.mxu0 0.0
    %2803 = vmatpush1.xpose.msra.mxu0 0.0
    %2804 = vmatprep.subr.mxu0 0.0
    %2805 = vmatpush1.xpose.msra.mxu0 0.0
    %2806 = vmatprep.subr.mxu0 0.0
    %2807 = vmatpush1.xpose.msra.mxu0 0.0
    %2808 = vmatprep.subr.mxu0 0.0
    %2809 = vmatpush1.xpose.msra.mxu0 0.0
    %2810 = vmatprep.subr.mxu0 0.0
    %2811 = vmatpush1.xpose.msra.mxu0 0.0
    %2812 = vmatprep.subr.mxu0 0.0
    %2813 = vmatpush1.xpose.msra.mxu0 0.0
    %2814 = vmatprep.subr.mxu0 0.0
    %2815 = vmatpush1.xpose.msra.mxu0 0.0
    %2816 = vmatprep.subr.mxu0 0.0
    %2817 = vmatpush1.xpose.msra.mxu0 0.0
    %2818 = vmatprep.subr.mxu0 0.0
    %2819 = vmatpush1.xpose.msra.mxu0 0.0
    %2820 = vmatprep.subr.mxu0 0.0
    %2821 = vmatpush1.xpose.msra.mxu0 0.0
    %2822 = vmatprep.subr.mxu0 0.0
    %2823 = vmatpush1.xpose.msra.mxu0 0.0
    %2824 = vmatprep.subr.mxu0 0.0
    %2825 = vmatpush1.xpose.msra.mxu0 0.0
    %2826 = vmatprep.subr.mxu0 0.0
    %2827 = vmatpush1.xpose.msra.mxu0 0.0
    %2828 = vmatprep.mubr.f32.mxu0 0.0
    %2829 = vmatmul.mubr.f32.gmra.mrb[0].mxu0 %v2752
    %v2830 = vpop.f32.mrb[0].mxu0
    %v2831 = vadd.f32 0.0, %v2830
    %v2832 = vpop.f32.mrb[0].mxu0
    %2833 = vmatprep.mubr.f32.mxu0 0.0
    %2834 = vmatmul.mubr.f32.gmra.mrb[0].mxu0 %v2754
    %v2835 = vpop.f32.mrb[0].mxu0
    %v2836 = vadd.f32 0.0, %v2835
    %v2837 = vpop.f32.mrb[0].mxu0
    %2838 = vmatprep.mubr.f32.mxu0 0.0
    %2839 = vmatmul.mubr.f32.gmra.mrb[0].mxu0 %v2756
    %v2840 = vpop.f32.mrb[0].mxu0
    %v2841 = vadd.f32 0.0, %v2840
    %v2842 = vpop.f32.mrb[0].mxu0
    %2843 = vdwg.mxu0
    %v2844 = vmul.f32 %v2831, 0.25
    %v2845 = vmul.f32 %v2836, 0.25
    %v2846 = vmul.f32 %v2841, 0.25
    %v2847 = vadd.f32 %v2844, %v137
    %v2848 = vadd.f32 %v2845, %v138
    %v2849 = vadd.f32 %v2846, %v139
    %v2850 = vsel %vm741, %v2847, -inf
    %2851 = vmax.xlane.f32.xlu0 %v2850
    %v2852 = vpop.xlane.xlu0 %2851
    %v2853 = vsel %vm741, %v2848, -inf
    %2854 = vmax.xlane.f32.xlu0 %v2853
    %v2855 = vpop.xlane.xlu0 %2854
    %v2856 = vsel %vm748, %v2849, -inf
    %2857 = vmax.xlane.f32.xlu0 %v2856
    %v2858 = vpop.xlane.xlu0 %2857
    %v2859 = vsub.f32 %v2847, %v2852
    %v2860 = vsub.f32 %v2848, %v2855
    %v2861 = vsub.f32 %v2849, %v2858
    %v2862 = vmul.f32 %v2859, 1.442695
    %v2863 = vpow.pop %v2862
    %v2864 = vmul.f32 %v2860, 1.442695
    %v2865 = vpow.pop %v2864
    %v2866 = vmul.f32 %v2861, 1.442695
    %v2867 = vpow.pop %v2866
    %v2868 = vsel %vm741, %v2863, 0.0
    %2869 = vadd.xlane.f32.xlu0 %v2868
    %v2870 = vpop.xlane.xlu0 %2869
    %v2871 = vsel %vm741, %v2865, 0.0
    %2872 = vadd.xlane.f32.xlu0 %v2871
    %v2873 = vpop.xlane.xlu0 %2872
    %v2874 = vsel %vm748, %v2867, 0.0
    %2875 = vadd.xlane.f32.xlu0 %v2874
    %v2876 = vpop.xlane.xlu0 %2875
    %v2877 = vrcp.pop %v2870
    %v2878 = vrcp.pop %v2873
    %v2879 = vrcp.pop %v2876
    %v2880 = vmul.f32 %v2863, %v2877
    %v2881 = vmul.f32 %v2865, %v2878
    %v2882 = vmul.f32 %v2867, %v2879
    %2883 = vrot.lane.b32.xlu0 %v2250, 96
    %v2884 = vpop.permute.xlu0 %2883
    %2885 = vrot.lane.b32.xlu0 %v2256, 96
    %v2886 = vpop.permute.xlu0 %2885
    %2887 = vrot.lane.b32.xlu0 %v2262, 96
    %v2888 = vpop.permute.xlu0 %2887
    %v2892 = vsel %vm741, %v2880, 0
    %v2895 = vsel %vm741, %v2881, 0
    %v2898 = vsel %vm741, %v2882, 0
    %v2900 = vsel %vm428, %v2888, 0
    %2902 = vmatprep.subr.mxu0 0.0
    %2903 = vmatpush1.msra.mxu0 %v2884
    %2904 = vmatprep.subr.mxu0 0.0
    %2905 = vmatpush1.msra.mxu0 %v2886
    %2906 = vmatprep.subr.mxu0 0.0
    %2907 = vmatpush1.msra.mxu0 %v2900
    %2908 = vmatprep.subr.mxu0 0.0
    %2909 = vmatpush1.msra.mxu0 0.0
    %2910 = vmatprep.subr.mxu0 0.0
    %2911 = vmatpush1.msra.mxu0 0.0
    %2912 = vmatprep.subr.mxu0 0.0
    %2913 = vmatpush1.msra.mxu0 0.0
    %2914 = vmatprep.subr.mxu0 0.0
    %2915 = vmatpush1.msra.mxu0 0.0
    %2916 = vmatprep.subr.mxu0 0.0
    %2917 = vmatpush1.msra.mxu0 0.0
    %2918 = vmatprep.subr.mxu0 0.0
    %2919 = vmatpush1.msra.mxu0 0.0
    %2920 = vmatprep.subr.mxu0 0.0
    %2921 = vmatpush1.msra.mxu0 0.0
    %2922 = vmatprep.subr.mxu0 0.0
    %2923 = vmatpush1.msra.mxu0 0.0
    %2924 = vmatprep.subr.mxu0 0.0
    %2925 = vmatpush1.msra.mxu0 0.0
    %2926 = vmatprep.subr.mxu0 0.0
    %2927 = vmatpush1.msra.mxu0 0.0
    %2928 = vmatprep.subr.mxu0 0.0
    %2929 = vmatpush1.msra.mxu0 0.0
    %2930 = vmatprep.subr.mxu0 0.0
    %2931 = vmatpush1.msra.mxu0 0.0
    %2932 = vmatprep.subr.mxu0 0.0
    %2933 = vmatpush1.msra.mxu0 0.0
    %2934 = vmatprep.subr.mxu0 0.0
    %2935 = vmatpush1.msra.mxu0 0.0
    %2936 = vmatprep.subr.mxu0 0.0
    %2937 = vmatpush1.msra.mxu0 0.0
    %2938 = vmatprep.subr.mxu0 0.0
    %2939 = vmatpush1.msra.mxu0 0.0
    %2940 = vmatprep.subr.mxu0 0.0
    %2941 = vmatpush1.msra.mxu0 0.0
    %2942 = vmatprep.subr.mxu0 0.0
    %2943 = vmatpush1.msra.mxu0 0.0
    %2944 = vmatprep.subr.mxu0 0.0
    %2945 = vmatpush1.msra.mxu0 0.0
    %2946 = vmatprep.subr.mxu0 0.0
    %2947 = vmatpush1.msra.mxu0 0.0
    %2948 = vmatprep.subr.mxu0 0.0
    %2949 = vmatpush1.msra.mxu0 0.0
    %2950 = vmatprep.subr.mxu0 0.0
    %2951 = vmatpush1.msra.mxu0 0.0
    %2952 = vmatprep.subr.mxu0 0.0
    %2953 = vmatpush1.msra.mxu0 0.0
    %2954 = vmatprep.subr.mxu0 0.0
    %2955 = vmatpush1.msra.mxu0 0.0
    %2956 = vmatprep.subr.mxu0 0.0
    %2957 = vmatpush1.msra.mxu0 0.0
    %2958 = vmatprep.subr.mxu0 0.0
    %2959 = vmatpush1.msra.mxu0 0.0
    %2960 = vmatprep.subr.mxu0 0.0
    %2961 = vmatpush1.msra.mxu0 0.0
    %2962 = vmatprep.subr.mxu0 0.0
    %2963 = vmatpush1.msra.mxu0 0.0
    %2964 = vmatprep.subr.mxu0 0.0
    %2965 = vmatpush1.msra.mxu0 0.0
    %2966 = vmatprep.mubr.f32.mxu0 0.0
    %2967 = vmatmul.mubr.f32.gmra.mrb[0].mxu0 %v2892
    %v2968 = vpop.f32.mrb[0].mxu0
    %v2969 = vadd.f32 0.0, %v2968
    %v2970 = vpop.f32.mrb[0].mxu0
    %2971 = vmatprep.mubr.f32.mxu0 0.0
    %2972 = vmatmul.mubr.f32.gmra.mrb[0].mxu0 %v2895
    %v2973 = vpop.f32.mrb[0].mxu0
    %v2974 = vadd.f32 0.0, %v2973
    %v2975 = vpop.f32.mrb[0].mxu0
    %2976 = vmatprep.mubr.f32.mxu0 0.0
    %2977 = vmatmul.mubr.f32.gmra.mrb[0].mxu0 %v2898
    %v2978 = vpop.f32.mrb[0].mxu0
    %v2979 = vadd.f32 0.0, %v2978
    %v2980 = vpop.f32.mrb[0].mxu0
    %2981 = vdwg.mxu0
    %2982 = vrot.lane.b32.xlu0 %v2248, 80
    %v2983 = vpop.permute.xlu0 %2982
    %2984 = vrot.lane.b32.xlu0 %v2254, 80
    %v2985 = vpop.permute.xlu0 %2984
    %2986 = vrot.lane.b32.xlu0 %v2260, 80
    %v2987 = vpop.permute.xlu0 %2986
    %2988 = vrot.lane.b32.xlu0 %v2248, 16
    %v2989 = vpop.permute.xlu0 %2988
    %2990 = vrot.lane.b32.xlu0 %v2254, 16
    %v2991 = vpop.permute.xlu0 %2990
    %2992 = vrot.lane.b32.xlu0 %v2260, 16
    %v2993 = vpop.permute.xlu0 %2992
    %v2994 = vsel %vm175, %v2983, 0
    %v2996 = vsel %vm175, %v2985, 0
    %v2998 = vsel %vm175, %v2987, 0
    %v3000 = vsel %vm175, %v2989, 0
    %v3002 = vsel %vm175, %v2991, 0
    %v3004 = vsel %vm175, %v2993, 0
    %3006 = vmatprep.subr.mxu0 0.0
    %3007 = vmatpush1.xpose.msra.mxu0 %v3000
    %3008 = vmatprep.subr.mxu0 0.0
    %3009 = vmatpush1.xpose.msra.mxu0 %v3002
    %3010 = vmatprep.subr.mxu0 0.0
    %3011 = vmatpush1.xpose.msra.mxu0 %v3004
    %3012 = vmatprep.subr.mxu0 0.0
    %3013 = vmatpush1.xpose.msra.mxu0 0.0
    %3014 = vmatprep.subr.mxu0 0.0
    %3015 = vmatpush1.xpose.msra.mxu0 0.0
    %3016 = vmatprep.subr.mxu0 0.0
    %3017 = vmatpush1.xpose.msra.mxu0 0.0
    %3018 = vmatprep.subr.mxu0 0.0
    %3019 = vmatpush1.xpose.msra.mxu0 0.0
    %3020 = vmatprep.subr.mxu0 0.0
    %3021 = vmatpush1.xpose.msra.mxu0 0.0
    %3022 = vmatprep.subr.mxu0 0.0
    %3023 = vmatpush1.xpose.msra.mxu0 0.0
    %3024 = vmatprep.subr.mxu0 0.0
    %3025 = vmatpush1.xpose.msra.mxu0 0.0
    %3026 = vmatprep.subr.mxu0 0.0
    %3027 = vmatpush1.xpose.msra.mxu0 0.0
    %3028 = vmatprep.subr.mxu0 0.0
    %3029 = vmatpush1.xpose.msra.mxu0 0.0
    %3030 = vmatprep.subr.mxu0 0.0
    %3031 = vmatpush1.xpose.msra.mxu0 0.0
    %3032 = vmatprep.subr.mxu0 0.0
    %3033 = vmatpush1.xpose.msra.mxu0 0.0
    %3034 = vmatprep.subr.mxu0 0.0
    %3035 = vmatpush1.xpose.msra.mxu0 0.0
    %3036 = vmatprep.subr.mxu0 0.0
    %3037 = vmatpush1.xpose.msra.mxu0 0.0
    %3038 = vmatprep.subr.mxu0 0.0
    %3039 = vmatpush1.xpose.msra.mxu0 0.0
    %3040 = vmatprep.subr.mxu0 0.0
    %3041 = vmatpush1.xpose.msra.mxu0 0.0
    %3042 = vmatprep.subr.mxu0 0.0
    %3043 = vmatpush1.xpose.msra.mxu0 0.0
    %3044 = vmatprep.subr.mxu0 0.0
    %3045 = vmatpush1.xpose.msra.mxu0 0.0
    %3046 = vmatprep.subr.mxu0 0.0
    %3047 = vmatpush1.xpose.msra.mxu0 0.0
    %3048 = vmatprep.subr.mxu0 0.0
    %3049 = vmatpush1.xpose.msra.mxu0 0.0
    %3050 = vmatprep.subr.mxu0 0.0
    %3051 = vmatpush1.xpose.msra.mxu0 0.0
    %3052 = vmatprep.subr.mxu0 0.0
    %3053 = vmatpush1.xpose.msra.mxu0 0.0
    %3054 = vmatprep.subr.mxu0 0.0
    %3055 = vmatpush1.xpose.msra.mxu0 0.0
    %3056 = vmatprep.subr.mxu0 0.0
    %3057 = vmatpush1.xpose.msra.mxu0 0.0
    %3058 = vmatprep.subr.mxu0 0.0
    %3059 = vmatpush1.xpose.msra.mxu0 0.0
    %3060 = vmatprep.subr.mxu0 0.0
    %3061 = vmatpush1.xpose.msra.mxu0 0.0
    %3062 = vmatprep.subr.mxu0 0.0
    %3063 = vmatpush1.xpose.msra.mxu0 0.0
    %3064 = vmatprep.subr.mxu0 0.0
    %3065 = vmatpush1.xpose.msra.mxu0 0.0
    %3066 = vmatprep.subr.mxu0 0.0
    %3067 = vmatpush1.xpose.msra.mxu0 0.0
    %3068 = vmatprep.subr.mxu0 0.0
    %3069 = vmatpush1.xpose.msra.mxu0 0.0
    %3070 = vmatprep.mubr.f32.mxu0 0.0
    %3071 = vmatmul.mubr.f32.gmra.mrb[0].mxu0 %v2994
    %v3072 = vpop.f32.mrb[0].mxu0
    %v3073 = vadd.f32 0.0, %v3072
    %v3074 = vpop.f32.mrb[0].mxu0
    %3075 = vmatprep.mubr.f32.mxu0 0.0
    %3076 = vmatmul.mubr.f32.gmra.mrb[0].mxu0 %v2996
    %v3077 = vpop.f32.mrb[0].mxu0
    %v3078 = vadd.f32 0.0, %v3077
    %v3079 = vpop.f32.mrb[0].mxu0
    %3080 = vmatprep.mubr.f32.mxu0 0.0
    %3081 = vmatmul.mubr.f32.gmra.mrb[0].mxu0 %v2998
    %v3082 = vpop.f32.mrb[0].mxu0
    %v3083 = vadd.f32 0.0, %v3082
    %v3084 = vpop.f32.mrb[0].mxu0
    %3085 = vdwg.mxu0
    %v3086 = vmul.f32 %v3073, 0.25
    %v3087 = vmul.f32 %v3078, 0.25
    %v3088 = vmul.f32 %v3083, 0.25
    %v3089 = vadd.f32 %v3086, %v137
    %v3090 = vadd.f32 %v3087, %v138
    %v3091 = vadd.f32 %v3088, %v139
    %v3092 = vsel %vm741, %v3089, -inf
    %3093 = vmax.xlane.f32.xlu0 %v3092
    %v3094 = vpop.xlane.xlu0 %3093
    %v3095 = vsel %vm741, %v3090, -inf
    %3096 = vmax.xlane.f32.xlu0 %v3095
    %v3097 = vpop.xlane.xlu0 %3096
    %v3098 = vsel %vm748, %v3091, -inf
    %3099 = vmax.xlane.f32.xlu0 %v3098
    %v3100 = vpop.xlane.xlu0 %3099
    %v3101 = vsub.f32 %v3089, %v3094
    %v3102 = vsub.f32 %v3090, %v3097
    %v3103 = vsub.f32 %v3091, %v3100
    %v3104 = vmul.f32 %v3101, 1.442695
    %v3105 = vpow.pop %v3104
    %v3106 = vmul.f32 %v3102, 1.442695
    %v3107 = vpow.pop %v3106
    %v3108 = vmul.f32 %v3103, 1.442695
    %v3109 = vpow.pop %v3108
    %v3110 = vsel %vm741, %v3105, 0.0
    %3111 = vadd.xlane.f32.xlu0 %v3110
    %v3112 = vpop.xlane.xlu0 %3111
    %v3113 = vsel %vm741, %v3107, 0.0
    %3114 = vadd.xlane.f32.xlu0 %v3113
    %v3115 = vpop.xlane.xlu0 %3114
    %v3116 = vsel %vm748, %v3109, 0.0
    %3117 = vadd.xlane.f32.xlu0 %v3116
    %v3118 = vpop.xlane.xlu0 %3117
    %v3119 = vrcp.pop %v3112
    %v3120 = vrcp.pop %v3115
    %v3121 = vrcp.pop %v3118
    %v3122 = vmul.f32 %v3105, %v3119
    %v3123 = vmul.f32 %v3107, %v3120
    %v3124 = vmul.f32 %v3109, %v3121
    %3125 = vrot.lane.b32.xlu0 %v2250, 80
    %v3126 = vpop.permute.xlu0 %3125
    %3127 = vrot.lane.b32.xlu0 %v2256, 80
    %v3128 = vpop.permute.xlu0 %3127
    %3129 = vrot.lane.b32.xlu0 %v2262, 80
    %v3130 = vpop.permute.xlu0 %3129
    %v3134 = vsel %vm741, %v3122, 0
    %v3137 = vsel %vm741, %v3123, 0
    %v3140 = vsel %vm741, %v3124, 0
    %v3142 = vsel %vm428, %v3130, 0
    %3144 = vmatprep.subr.mxu0 0.0
    %3145 = vmatpush1.msra.mxu0 %v3126
    %3146 = vmatprep.subr.mxu0 0.0
    %3147 = vmatpush1.msra.mxu0 %v3128
    %3148 = vmatprep.subr.mxu0 0.0
    %3149 = vmatpush1.msra.mxu0 %v3142
    %3150 = vmatprep.subr.mxu0 0.0
    %3151 = vmatpush1.msra.mxu0 0.0
    %3152 = vmatprep.subr.mxu0 0.0
    %3153 = vmatpush1.msra.mxu0 0.0
    %3154 = vmatprep.subr.mxu0 0.0
    %3155 = vmatpush1.msra.mxu0 0.0
    %3156 = vmatprep.subr.mxu0 0.0
    %3157 = vmatpush1.msra.mxu0 0.0
    %3158 = vmatprep.subr.mxu0 0.0
    %3159 = vmatpush1.msra.mxu0 0.0
    %3160 = vmatprep.subr.mxu0 0.0
    %3161 = vmatpush1.msra.mxu0 0.0
    %3162 = vmatprep.subr.mxu0 0.0
    %3163 = vmatpush1.msra.mxu0 0.0
    %3164 = vmatprep.subr.mxu0 0.0
    %3165 = vmatpush1.msra.mxu0 0.0
    %3166 = vmatprep.subr.mxu0 0.0
    %3167 = vmatpush1.msra.mxu0 0.0
    %3168 = vmatprep.subr.mxu0 0.0
    %3169 = vmatpush1.msra.mxu0 0.0
    %3170 = vmatprep.subr.mxu0 0.0
    %3171 = vmatpush1.msra.mxu0 0.0
    %3172 = vmatprep.subr.mxu0 0.0
    %3173 = vmatpush1.msra.mxu0 0.0
    %3174 = vmatprep.subr.mxu0 0.0
    %3175 = vmatpush1.msra.mxu0 0.0
    %3176 = vmatprep.subr.mxu0 0.0
    %3177 = vmatpush1.msra.mxu0 0.0
    %3178 = vmatprep.subr.mxu0 0.0
    %3179 = vmatpush1.msra.mxu0 0.0
    %3180 = vmatprep.subr.mxu0 0.0
    %3181 = vmatpush1.msra.mxu0 0.0
    %3182 = vmatprep.subr.mxu0 0.0
    %3183 = vmatpush1.msra.mxu0 0.0
    %3184 = vmatprep.subr.mxu0 0.0
    %3185 = vmatpush1.msra.mxu0 0.0
    %3186 = vmatprep.subr.mxu0 0.0
    %3187 = vmatpush1.msra.mxu0 0.0
    %3188 = vmatprep.subr.mxu0 0.0
    %3189 = vmatpush1.msra.mxu0 0.0
    %3190 = vmatprep.subr.mxu0 0.0
    %3191 = vmatpush1.msra.mxu0 0.0
    %3192 = vmatprep.subr.mxu0 0.0
    %3193 = vmatpush1.msra.mxu0 0.0
    %3194 = vmatprep.subr.mxu0 0.0
    %3195 = vmatpush1.msra.mxu0 0.0
    %3196 = vmatprep.subr.mxu0 0.0
    %3197 = vmatpush1.msra.mxu0 0.0
    %3198 = vmatprep.subr.mxu0 0.0
    %3199 = vmatpush1.msra.mxu0 0.0
    %3200 = vmatprep.subr.mxu0 0.0
    %3201 = vmatpush1.msra.mxu0 0.0
    %3202 = vmatprep.subr.mxu0 0.0
    %3203 = vmatpush1.msra.mxu0 0.0
    %3204 = vmatprep.subr.mxu0 0.0
    %3205 = vmatpush1.msra.mxu0 0.0
    %3206 = vmatprep.subr.mxu0 0.0
    %3207 = vmatpush1.msra.mxu0 0.0
    %3208 = vmatprep.mubr.f32.mxu0 0.0
    %3209 = vmatmul.mubr.f32.gmra.mrb[0].mxu0 %v3134
    %v3210 = vpop.f32.mrb[0].mxu0
    %v3211 = vadd.f32 0.0, %v3210
    %v3212 = vpop.f32.mrb[0].mxu0
    %3213 = vmatprep.mubr.f32.mxu0 0.0
    %3214 = vmatmul.mubr.f32.gmra.mrb[0].mxu0 %v3137
    %v3215 = vpop.f32.mrb[0].mxu0
    %v3216 = vadd.f32 0.0, %v3215
    %v3217 = vpop.f32.mrb[0].mxu0
    %3218 = vmatprep.mubr.f32.mxu0 0.0
    %3219 = vmatmul.mubr.f32.gmra.mrb[0].mxu0 %v3140
    %v3220 = vpop.f32.mrb[0].mxu0
    %v3221 = vadd.f32 0.0, %v3220
    %v3222 = vpop.f32.mrb[0].mxu0
    %3223 = vdwg.mxu0
    %3227 = vrot.lane.b32.xlu0 %v2727, 16
    %v3228 = vpop.permute.xlu0 %3227
    %3229 = vrot.lane.b32.xlu0 %v2732, 16
    %v3230 = vpop.permute.xlu0 %3229
    %3231 = vrot.lane.b32.xlu0 %v2737, 16
    %v3232 = vpop.permute.xlu0 %3231
    %3239 = vrot.lane.b32.xlu0 %v2969, 32
    %v3240 = vpop.permute.xlu0 %3239
    %3241 = vrot.lane.b32.xlu0 %v2974, 32
    %v3242 = vpop.permute.xlu0 %3241
    %3243 = vrot.lane.b32.xlu0 %v2979, 32
    %v3244 = vpop.permute.xlu0 %3243
    %3251 = vrot.lane.b32.xlu0 %v3211, 48
    %v3252 = vpop.permute.xlu0 %3251
    %3253 = vrot.lane.b32.xlu0 %v3216, 48
    %v3254 = vpop.permute.xlu0 %3253
    %3255 = vrot.lane.b32.xlu0 %v3221, 48
    %v3256 = vpop.permute.xlu0 %3255
    %v3260 = vsel %vm175, %v2483, %v3228
    %v3261 = vsel %vm175, %v2488, %v3230
    %v3262 = vsel %vm175, %v2493, %v3232
    %v3263 = vsel %vm1635, %v3260, %v3240
    %v3264 = vsel %vm1635, %v3261, %v3242
    %v3265 = vsel %vm1635, %v3262, %v3244
    %v3266 = vsel %vm1639, %v3263, %v3252
    %v3267 = vsel %vm1639, %v3264, %v3254
    %v3268 = vsel %vm1639, %v3265, %v3256
    %s3269 = scalar_lea.vmem %s37, 64
    %v3270 = vld [vmem:[%s3269] sm:$0xff]
    %v3271 = vld [vmem:[%s3269 + $0x8] sm:$0xff]
    %v3272 = vld [vmem:[%s3269 + $0x10] sm:$0xff]
    %v3273 = vld [vmem:[%s3269 + $0x18] sm:$0xff]
    %v3274 = vld [vmem:[%s3269 + $0x20] sm:$0xff]
    %v3275 = vld [vmem:[%s3269 + $0x28] sm:$0xff]
    %v3276 = vld [vmem:[%s3269 + $0x30] sm:$0xff]
    %v3277 = vld [vmem:[%s3269 + $0x38] sm:$0xff]
    %s3278 = scalar_lea.vmem %s39, 1
    %v3279 = vld [vmem:[%s3278] sm:$0x1]
    %v3281 = vlaneseq
    %v3282 = vshrl.u32 %v3281, 7
    %v3283 = vsub.s32 0, %v3282
    %v3284 = vrot.slane %v3279, %v3283
    %v3287 = vsel %vm454, %v3266, 0
    %v3290 = vsel %vm454, %v3267, 0
    %v3293 = vsel %vm454, %v3268, 0
    %3295 = vmatprep.subr.mxu0 0.0
    %3296 = vmatpush1.msra.mxu0 %v3270
    %3297 = vmatprep.subr.mxu0 0.0
    %3298 = vmatpush1.msra.mxu0 %v3271
    %3299 = vmatprep.subr.mxu0 0.0
    %3300 = vmatpush1.msra.mxu0 %v3272
    %3301 = vmatprep.subr.mxu0 0.0
    %3302 = vmatpush1.msra.mxu0 %v3273
    %3303 = vmatprep.subr.mxu0 0.0
    %3304 = vmatpush1.msra.mxu0 %v3274
    %3305 = vmatprep.subr.mxu0 0.0
    %3306 = vmatpush1.msra.mxu0 %v3275
    %3307 = vmatprep.subr.mxu0 0.0
    %3308 = vmatpush1.msra.mxu0 %v3276
    %3309 = vmatprep.subr.mxu0 0.0
    %3310 = vmatpush1.msra.mxu0 %v3277
    %3311 = vmatprep.subr.mxu0 0.0
    %3312 = vmatpush1.msra.mxu0 0.0
    %3313 = vmatprep.subr.mxu0 0.0
    %3314 = vmatpush1.msra.mxu0 0.0
    %3315 = vmatprep.subr.mxu0 0.0
    %3316 = vmatpush1.msra.mxu0 0.0
    %3317 = vmatprep.subr.mxu0 0.0
    %3318 = vmatpush1.msra.mxu0 0.0
    %3319 = vmatprep.subr.mxu0 0.0
    %3320 = vmatpush1.msra.mxu0 0.0
    %3321 = vmatprep.subr.mxu0 0.0
    %3322 = vmatpush1.msra.mxu0 0.0
    %3323 = vmatprep.subr.mxu0 0.0
    %3324 = vmatpush1.msra.mxu0 0.0
    %3325 = vmatprep.subr.mxu0 0.0
    %3326 = vmatpush1.msra.mxu0 0.0
    %3327 = vmatprep.subr.mxu0 0.0
    %3328 = vmatpush1.msra.mxu0 0.0
    %3329 = vmatprep.subr.mxu0 0.0
    %3330 = vmatpush1.msra.mxu0 0.0
    %3331 = vmatprep.subr.mxu0 0.0
    %3332 = vmatpush1.msra.mxu0 0.0
    %3333 = vmatprep.subr.mxu0 0.0
    %3334 = vmatpush1.msra.mxu0 0.0
    %3335 = vmatprep.subr.mxu0 0.0
    %3336 = vmatpush1.msra.mxu0 0.0
    %3337 = vmatprep.subr.mxu0 0.0
    %3338 = vmatpush1.msra.mxu0 0.0
    %3339 = vmatprep.subr.mxu0 0.0
    %3340 = vmatpush1.msra.mxu0 0.0
    %3341 = vmatprep.subr.mxu0 0.0
    %3342 = vmatpush1.msra.mxu0 0.0
    %3343 = vmatprep.subr.mxu0 0.0
    %3344 = vmatpush1.msra.mxu0 0.0
    %3345 = vmatprep.subr.mxu0 0.0
    %3346 = vmatpush1.msra.mxu0 0.0
    %3347 = vmatprep.subr.mxu0 0.0
    %3348 = vmatpush1.msra.mxu0 0.0
    %3349 = vmatprep.subr.mxu0 0.0
    %3350 = vmatpush1.msra.mxu0 0.0
    %3351 = vmatprep.subr.mxu0 0.0
    %3352 = vmatpush1.msra.mxu0 0.0
    %3353 = vmatprep.subr.mxu0 0.0
    %3354 = vmatpush1.msra.mxu0 0.0
    %3355 = vmatprep.subr.mxu0 0.0
    %3356 = vmatpush1.msra.mxu0 0.0
    %3357 = vmatprep.subr.mxu0 0.0
    %3358 = vmatpush1.msra.mxu0 0.0
    %3359 = vmatprep.mubr.f32.mxu0 0.0
    %3360 = vmatmul.mubr.f32.gmra.mrb[0].mxu0 %v3287
    %v3361 = vpop.f32.mrb[0].mxu0
    %v3362 = vadd.f32 %v3284, %v3361
    %v3363 = vpop.f32.mrb[0].mxu0
    %3364 = vmatprep.mubr.f32.mxu0 0.0
    %3365 = vmatmul.mubr.f32.gmra.mrb[0].mxu0 %v3290
    %v3366 = vpop.f32.mrb[0].mxu0
    %v3367 = vadd.f32 %v3284, %v3366
    %v3368 = vpop.f32.mrb[0].mxu0
    %3369 = vmatprep.mubr.f32.mxu0 0.0
    %3370 = vmatmul.mubr.f32.gmra.mrb[0].mxu0 %v3293
    %v3371 = vpop.f32.mrb[0].mxu0
    %v3372 = vadd.f32 %v3284, %v3371
    %v3373 = vpop.f32.mrb[0].mxu0
    %3374 = vdwg.mxu0
    %v3375 = vadd.f32 %v2078, %v3362
    %v3376 = vadd.f32 %v2079, %v3367
    %v3377 = vadd.f32 %v2080, %v3372
    %s3378 = scalar_lea.vmem %s41, 1
    %v3379 = vld [vmem:[%s3378] sm:$0x1]
    %s3380 = scalar_lea.vmem %s43, 1
    %v3381 = vld [vmem:[%s3380] sm:$0x1]
    %v3382 = vsel %vm454, %v3375, 0.0
    %3383 = vadd.xlane.f32.xlu0 %v3382
    %v3384 = vpop.xlane.xlu0 %3383
    %v3385 = vsel %vm454, %v3376, 0.0
    %3386 = vadd.xlane.f32.xlu0 %v3385
    %v3387 = vpop.xlane.xlu0 %3386
    %v3388 = vsel %vm461, %v3377, 0.0
    %3389 = vadd.xlane.f32.xlu0 %v3388
    %v3390 = vpop.xlane.xlu0 %3389
    %v3391 = vmul.f32 %v3384, %v465
    %v3392 = vmul.f32 %v3387, %v465
    %v3393 = vmul.f32 %v3390, %v465
    %v3394 = vsub.f32 %v3375, %v3391
    %v3395 = vsub.f32 %v3376, %v3392
    %v3396 = vsub.f32 %v3377, %v3393
    %v3397 = vmul.f32 %v3394, %v3394
    %v3398 = vmul.f32 %v3395, %v3395
    %v3399 = vmul.f32 %v3396, %v3396
    %v3400 = vsel %vm454, %v3397, 0.0
    %3401 = vadd.xlane.f32.xlu0 %v3400
    %v3402 = vpop.xlane.xlu0 %3401
    %v3403 = vsel %vm454, %v3398, 0.0
    %3404 = vadd.xlane.f32.xlu0 %v3403
    %v3405 = vpop.xlane.xlu0 %3404
    %v3406 = vsel %vm461, %v3399, 0.0
    %3407 = vadd.xlane.f32.xlu0 %v3406
    %v3408 = vpop.xlane.xlu0 %3407
    %v3409 = vmul.f32 %v3402, %v465
    %v3410 = vmul.f32 %v3405, %v465
    %v3411 = vmul.f32 %v3408, %v465
    %v3412 = vadd.f32 %v3409, 1e-05
    %v3413 = vadd.f32 %v3410, 1e-05
    %v3414 = vadd.f32 %v3411, 1e-05
    %v3415 = vrsqrt.pop %v3412
    %v3416 = vrsqrt.pop %v3413
    %v3417 = vrsqrt.pop %v3414
    %v3418 = vmul.f32 %v3394, %v3415
    %v3419 = vmul.f32 %v3395, %v3416
    %v3420 = vmul.f32 %v3396, %v3417
    %v3422 = vlaneseq
    %v3423 = vshrl.u32 %v3422, 7
    %v3424 = vsub.s32 0, %v3423
    %v3425 = vrot.slane %v3379, %v3424
    %v3427 = vmul.f32 %v3418, %v3425
    %v3428 = vmul.f32 %v3419, %v3425
    %v3429 = vmul.f32 %v3420, %v3425
    %v3431 = vlaneseq
    %v3432 = vshrl.u32 %v3431, 7
    %v3433 = vsub.s32 0, %v3432
    %v3434 = vrot.slane %v3381, %v3433
    %v3436 = vadd.f32 %v3427, %v3434
    %v3437 = vadd.f32 %v3428, %v3434
    %v3438 = vadd.f32 %v3429, %v3434
    %s3439 = scalar_lea.vmem %s45, 128
    %v3440 = vld [vmem:[%s3439] sm:$0xff]
    %v3441 = vld [vmem:[%s3439 + $0x8] sm:$0xff]
    %v3442 = vld [vmem:[%s3439 + $0x10] sm:$0xff]
    %v3443 = vld [vmem:[%s3439 + $0x18] sm:$0xff]
    %v3444 = vld [vmem:[%s3439 + $0x20] sm:$0xff]
    %v3445 = vld [vmem:[%s3439 + $0x28] sm:$0xff]
    %v3446 = vld [vmem:[%s3439 + $0x30] sm:$0xff]
    %v3447 = vld [vmem:[%s3439 + $0x38] sm:$0xff]
    %v3448 = vld [vmem:[%s3439 + $0x40] sm:$0xff]
    %v3449 = vld [vmem:[%s3439 + $0x48] sm:$0xff]
    %v3450 = vld [vmem:[%s3439 + $0x50] sm:$0xff]
    %v3451 = vld [vmem:[%s3439 + $0x58] sm:$0xff]
    %v3452 = vld [vmem:[%s3439 + $0x60] sm:$0xff]
    %v3453 = vld [vmem:[%s3439 + $0x68] sm:$0xff]
    %v3454 = vld [vmem:[%s3439 + $0x70] sm:$0xff]
    %v3455 = vld [vmem:[%s3439 + $0x78] sm:$0xff]
    %s3456 = scalar_lea.vmem %s47, 2
    %v3457 = vld [vmem:[%s3456] sm:$0x3]
    %v3459 = vlaneseq
    %v3460 = vshrl.u32 %v3459, 7
    %v3461 = vsub.s32 0, %v3460
    %v3462 = vrot.slane %v3457, %v3461
    %v3463 = vlaneseq
    %v3464 = vshrl.u32 %v3463, 7
    %v3465 = vsub.s32 1, %v3464
    %v3466 = vrot.slane %v3457, %v3465
    %v3470 = vsel %vm454, %v3436, 0
    %v3473 = vsel %vm454, %v3437, 0
    %v3476 = vsel %vm454, %v3438, 0
    %3478 = vmatprep.subr.mxu0 %v3441
    %3479 = vmatpush1.msra.mxu0 %v3440
    %3480 = vmatprep.subr.mxu0 %v3443
    %3481 = vmatpush1.msra.mxu0 %v3442
    %3482 = vmatprep.subr.mxu0 %v3445
    %3483 = vmatpush1.msra.mxu0 %v3444
    %3484 = vmatprep.subr.mxu0 %v3447
    %3485 = vmatpush1.msra.mxu0 %v3446
    %3486 = vmatprep.subr.mxu0 %v3449
    %3487 = vmatpush1.msra.mxu0 %v3448
    %3488 = vmatprep.subr.mxu0 %v3451
    %3489 = vmatpush1.msra.mxu0 %v3450
    %3490 = vmatprep.subr.mxu0 %v3453
    %3491 = vmatpush1.msra.mxu0 %v3452
    %3492 = vmatprep.subr.mxu0 %v3455
    %3493 = vmatpush1.msra.mxu0 %v3454
    %3494 = vmatprep.subr.mxu0 0.0
    %3495 = vmatpush1.msra.mxu0 0.0
    %3496 = vmatprep.subr.mxu0 0.0
    %3497 = vmatpush1.msra.mxu0 0.0
    %3498 = vmatprep.subr.mxu0 0.0
    %3499 = vmatpush1.msra.mxu0 0.0
    %3500 = vmatprep.subr.mxu0 0.0
    %3501 = vmatpush1.msra.mxu0 0.0
    %3502 = vmatprep.subr.mxu0 0.0
    %3503 = vmatpush1.msra.mxu0 0.0
    %3504 = vmatprep.subr.mxu0 0.0
    %3505 = vmatpush1.msra.mxu0 0.0
    %3506 = vmatprep.subr.mxu0 0.0
    %3507 = vmatpush1.msra.mxu0 0.0
    %3508 = vmatprep.subr.mxu0 0.0
    %3509 = vmatpush1.msra.mxu0 0.0
    %3510 = vmatprep.subr.mxu0 0.0
    %3511 = vmatpush1.msra.mxu0 0.0
    %3512 = vmatprep.subr.mxu0 0.0
    %3513 = vmatpush1.msra.mxu0 0.0
    %3514 = vmatprep.subr.mxu0 0.0
    %3515 = vmatpush1.msra.mxu0 0.0
    %3516 = vmatprep.subr.mxu0 0.0
    %3517 = vmatpush1.msra.mxu0 0.0
    %3518 = vmatprep.subr.mxu0 0.0
    %3519 = vmatpush1.msra.mxu0 0.0
    %3520 = vmatprep.subr.mxu0 0.0
    %3521 = vmatpush1.msra.mxu0 0.0
    %3522 = vmatprep.subr.mxu0 0.0
    %3523 = vmatpush1.msra.mxu0 0.0
    %3524 = vmatprep.subr.mxu0 0.0
    %3525 = vmatpush1.msra.mxu0 0.0
    %3526 = vmatprep.subr.mxu0 0.0
    %3527 = vmatpush1.msra.mxu0 0.0
    %3528 = vmatprep.subr.mxu0 0.0
    %3529 = vmatpush1.msra.mxu0 0.0
    %3530 = vmatprep.subr.mxu0 0.0
    %3531 = vmatpush1.msra.mxu0 0.0
    %3532 = vmatprep.subr.mxu0 0.0
    %3533 = vmatpush1.msra.mxu0 0.0
    %3534 = vmatprep.subr.mxu0 0.0
    %3535 = vmatpush1.msra.mxu0 0.0
    %3536 = vmatprep.subr.mxu0 0.0
    %3537 = vmatpush1.msra.mxu0 0.0
    %3538 = vmatprep.subr.mxu0 0.0
    %3539 = vmatpush1.msra.mxu0 0.0
    %3540 = vmatprep.subr.mxu0 0.0
    %3541 = vmatpush1.msra.mxu0 0.0
    %3542 = vmatprep.mubr.f32.mxu0 0.0
    %3543 = vmatmul.mubr.f32.gmra.mrb[0].mxu0 %v3470
    %v3544 = vpop.f32.mrb[0].mxu0
    %v3545 = vadd.f32 %v3462, %v3544
    %v3546 = vpop.f32.mrb[0].mxu0
    %v3547 = vadd.f32 %v3466, %v3546
    %3548 = vmatprep.mubr.f32.mxu0 0.0
    %3549 = vmatmul.mubr.f32.gmra.mrb[0].mxu0 %v3473
    %v3550 = vpop.f32.mrb[0].mxu0
    %v3551 = vadd.f32 %v3462, %v3550
    %v3552 = vpop.f32.mrb[0].mxu0
    %v3553 = vadd.f32 %v3466, %v3552
    %3554 = vmatprep.mubr.f32.mxu0 0.0
    %3555 = vmatmul.mubr.f32.gmra.mrb[0].mxu0 %v3476
    %v3556 = vpop.f32.mrb[0].mxu0
    %v3557 = vadd.f32 %v3462, %v3556
    %v3558 = vpop.f32.mrb[0].mxu0
    %v3559 = vadd.f32 %v3466, %v3558
    %3560 = vdwg.mxu0
    %v3561 = vmul.f32 %v3545, 0.5
    %v3562 = vmul.f32 %v3547, 0.5
    %v3563 = vmul.f32 %v3551, 0.5
    %v3564 = vmul.f32 %v3553, 0.5
    %v3565 = vmul.f32 %v3557, 0.5
    %v3566 = vmul.f32 %v3559, 0.5
    %v3567 = vmul.f32 %v3545, 0.70710677
    %v3568 = vmul.f32 %v3547, 0.70710677
    %v3569 = vmul.f32 %v3551, 0.70710677
    %v3570 = vmul.f32 %v3553, 0.70710677
    %v3571 = vmul.f32 %v3557, 0.70710677
    %v3572 = vmul.f32 %v3559, 0.70710677
    %v3573 = verf.f32.pop %v3567
    %v3574 = verf.f32.pop %v3568
    %v3575 = verf.f32.pop %v3569
    %v3576 = verf.f32.pop %v3570
    %v3577 = verf.f32.pop %v3571
    %v3578 = verf.f32.pop %v3572
    %v3579 = vadd.f32 %v3573, 1.0
    %v3580 = vadd.f32 %v3574, 1.0
    %v3581 = vadd.f32 %v3575, 1.0
    %v3582 = vadd.f32 %v3576, 1.0
    %v3583 = vadd.f32 %v3577, 1.0
    %v3584 = vadd.f32 %v3578, 1.0
    %v3585 = vmul.f32 %v3561, %v3579
    %v3586 = vmul.f32 %v3562, %v3580
    %v3587 = vmul.f32 %v3563, %v3581
    %v3588 = vmul.f32 %v3564, %v3582
    %v3589 = vmul.f32 %v3565, %v3583
    %v3590 = vmul.f32 %v3566, %v3584
    %s3591 = scalar_lea.vmem %s49, 256
    %v3592 = vld [vmem:[%s3591] sm:$0xff]
    %v3593 = vld [vmem:[%s3591 + $0x8] sm:$0xff]
    %v3594 = vld [vmem:[%s3591 + $0x10] sm:$0xff]
    %v3595 = vld [vmem:[%s3591 + $0x18] sm:$0xff]
    %v3596 = vld [vmem:[%s3591 + $0x20] sm:$0xff]
    %v3597 = vld [vmem:[%s3591 + $0x28] sm:$0xff]
    %v3598 = vld [vmem:[%s3591 + $0x30] sm:$0xff]
    %v3599 = vld [vmem:[%s3591 + $0x38] sm:$0xff]
    %v3600 = vld [vmem:[%s3591 + $0x40] sm:$0xff]
    %v3601 = vld [vmem:[%s3591 + $0x48] sm:$0xff]
    %v3602 = vld [vmem:[%s3591 + $0x50] sm:$0xff]
    %v3603 = vld [vmem:[%s3591 + $0x58] sm:$0xff]
    %v3604 = vld [vmem:[%s3591 + $0x60] sm:$0xff]
    %v3605 = vld [vmem:[%s3591 + $0x68] sm:$0xff]
    %v3606 = vld [vmem:[%s3591 + $0x70] sm:$0xff]
    %v3607 = vld [vmem:[%s3591 + $0x78] sm:$0xff]
    %v3608 = vld [vmem:[%s3591 + $0x80] sm:$0xff]
    %v3609 = vld [vmem:[%s3591 + $0x88] sm:$0xff]
    %v3610 = vld [vmem:[%s3591 + $0x90] sm:$0xff]
    %v3611 = vld [vmem:[%s3591 + $0x98] sm:$0xff]
    %v3612 = vld [vmem:[%s3591 + $0xa0] sm:$0xff]
    %v3613 = vld [vmem:[%s3591 + $0xa8] sm:$0xff]
    %v3614 = vld [vmem:[%s3591 + $0xb0] sm:$0xff]
    %v3615 = vld [vmem:[%s3591 + $0xb8] sm:$0xff]
    %v3616 = vld [vmem:[%s3591 + $0xc0] sm:$0xff]
    %v3617 = vld [vmem:[%s3591 + $0xc8] sm:$0xff]
    %v3618 = vld [vmem:[%s3591 + $0xd0] sm:$0xff]
    %v3619 = vld [vmem:[%s3591 + $0xd8] sm:$0xff]
    %v3620 = vld [vmem:[%s3591 + $0xe0] sm:$0xff]
    %v3621 = vld [vmem:[%s3591 + $0xe8] sm:$0xff]
    %v3622 = vld [vmem:[%s3591 + $0xf0] sm:$0xff]
    %v3623 = vld [vmem:[%s3591 + $0xf8] sm:$0xff]
    %s3624 = scalar_lea.vmem %s51, 1
    %v3625 = vld [vmem:[%s3624] sm:$0x1]
    %v3627 = vlaneseq
    %v3628 = vshrl.u32 %v3627, 7
    %v3629 = vsub.s32 0, %v3628
    %v3630 = vrot.slane %v3625, %v3629
    %3632 = vmatprep.subr.mxu0 0.0
    %3633 = vmatpush1.msra.mxu0 %v3592
    %3634 = vmatprep.subr.mxu0 0.0
    %3635 = vmatpush1.msra.mxu0 %v3593
    %3636 = vmatprep.subr.mxu0 0.0
    %3637 = vmatpush1.msra.mxu0 %v3594
    %3638 = vmatprep.subr.mxu0 0.0
    %3639 = vmatpush1.msra.mxu0 %v3595
    %3640 = vmatprep.subr.mxu0 0.0
    %3641 = vmatpush1.msra.mxu0 %v3596
    %3642 = vmatprep.subr.mxu0 0.0
    %3643 = vmatpush1.msra.mxu0 %v3597
    %3644 = vmatprep.subr.mxu0 0.0
    %3645 = vmatpush1.msra.mxu0 %v3598
    %3646 = vmatprep.subr.mxu0 0.0
    %3647 = vmatpush1.msra.mxu0 %v3599
    %3648 = vmatprep.subr.mxu0 0.0
    %3649 = vmatpush1.msra.mxu0 %v3600
    %3650 = vmatprep.subr.mxu0 0.0
    %3651 = vmatpush1.msra.mxu0 %v3601
    %3652 = vmatprep.subr.mxu0 0.0
    %3653 = vmatpush1.msra.mxu0 %v3602
    %3654 = vmatprep.subr.mxu0 0.0
    %3655 = vmatpush1.msra.mxu0 %v3603
    %3656 = vmatprep.subr.mxu0 0.0
    %3657 = vmatpush1.msra.mxu0 %v3604
    %3658 = vmatprep.subr.mxu0 0.0
    %3659 = vmatpush1.msra.mxu0 %v3605
    %3660 = vmatprep.subr.mxu0 0.0
    %3661 = vmatpush1.msra.mxu0 %v3606
    %3662 = vmatprep.subr.mxu0 0.0
    %3663 = vmatpush1.msra.mxu0 %v3607
    %3664 = vmatprep.subr.mxu0 0.0
    %3665 = vmatpush1.msra.mxu0 %v3608
    %3666 = vmatprep.subr.mxu0 0.0
    %3667 = vmatpush1.msra.mxu0 %v3609
    %3668 = vmatprep.subr.mxu0 0.0
    %3669 = vmatpush1.msra.mxu0 %v3610
    %3670 = vmatprep.subr.mxu0 0.0
    %3671 = vmatpush1.msra.mxu0 %v3611
    %3672 = vmatprep.subr.mxu0 0.0
    %3673 = vmatpush1.msra.mxu0 %v3612
    %3674 = vmatprep.subr.mxu0 0.0
    %3675 = vmatpush1.msra.mxu0 %v3613
    %3676 = vmatprep.subr.mxu0 0.0
    %3677 = vmatpush1.msra.mxu0 %v3614
    %3678 = vmatprep.subr.mxu0 0.0
    %3679 = vmatpush1.msra.mxu0 %v3615
    %3680 = vmatprep.subr.mxu0 0.0
    %3681 = vmatpush1.msra.mxu0 %v3616
    %3682 = vmatprep.subr.mxu0 0.0
    %3683 = vmatpush1.msra.mxu0 %v3617
    %3684 = vmatprep.subr.mxu0 0.0
    %3685 = vmatpush1.msra.mxu0 %v3618
    %3686 = vmatprep.subr.mxu0 0.0
    %3687 = vmatpush1.msra.mxu0 %v3619
    %3688 = vmatprep.subr.mxu0 0.0
    %3689 = vmatpush1.msra.mxu0 %v3620
    %3690 = vmatprep.subr.mxu0 0.0
    %3691 = vmatpush1.msra.mxu0 %v3621
    %3692 = vmatprep.subr.mxu0 0.0
    %3693 = vmatpush1.msra.mxu0 %v3622
    %3694 = vmatprep.subr.mxu0 0.0
    %3695 = vmatpush1.msra.mxu0 %v3623
    %3696 = vmatprep.mubr.f32.mxu0 %v3586
    %3697 = vmatmul.mubr.f32.gmra.mrb[0].mxu0 %v3585
    %v3698 = vpop.f32.mrb[0].mxu0
    %v3699 = vpop.f32.mrb[0].mxu0
    %3700 = vmatprep.mubr.f32.mxu0 %v3588
    %3701 = vmatmul.mubr.f32.gmra.mrb[0].mxu0 %v3587
    %v3702 = vpop.f32.mrb[0].mxu0
    %v3703 = vadd.f32 %v3630, %v3702
    %v3704 = vpop.f32.mrb[0].mxu0
    %3705 = vmatprep.mubr.f32.mxu0 %v3590
    %3706 = vmatmul.mubr.f32.gmra.mrb[0].mxu0 %v3589
    %v3707 = vpop.f32.mrb[0].mxu0
    %v3708 = vadd.f32 %v3630, %v3707
    %v3709 = vpop.f32.mrb[0].mxu0
    %3710 = vdwg.mxu0
    %v3711 = vadd.f32 %v3376, %v3703
    %v3712 = vadd.f32 %v3377, %v3708
    %v3713 = vld [vmem:[%s53] sm:$0x1]
    %v3714 = vld [vmem:[%s55] sm:$0x1]
    %v3715 = vsel %vm454, %v3711, 0.0
    %3716 = vadd.xlane.f32.xlu0 %v3715
    %v3717 = vpop.xlane.xlu0 %3716
    %v3718 = vsel %vm461, %v3712, 0.0
    %3719 = vadd.xlane.f32.xlu0 %v3718
    %v3720 = vpop.xlane.xlu0 %3719
    %v3721 = vmul.f32 %v3717, %v465
    %v3722 = vmul.f32 %v3720, %v465
    %v3723 = vsub.f32 %v3711, %v3721
    %v3724 = vsub.f32 %v3712, %v3722
    %v3725 = vmul.f32 %v3723, %v3723
    %v3726 = vmul.f32 %v3724, %v3724
    %v3727 = vsel %vm454, %v3725, 0.0
    %3728 = vadd.xlane.f32.xlu0 %v3727
    %v3729 = vpop.xlane.xlu0 %3728
    %v3730 = vsel %vm461, %v3726, 0.0
    %3731 = vadd.xlane.f32.xlu0 %v3730
    %v3732 = vpop.xlane.xlu0 %3731
    %v3733 = vmul.f32 %v3729, %v465
    %v3734 = vmul.f32 %v3732, %v465
    %v3735 = vadd.f32 %v3733, 1e-05
    %v3736 = vadd.f32 %v3734, 1e-05
    %v3737 = vrsqrt.pop %v3735
    %v3738 = vrsqrt.pop %v3736
    %v3739 = vmul.f32 %v3723, %v3737
    %v3740 = vmul.f32 %v3724, %v3738
    %v3742 = vlaneseq
    %v3743 = vshrl.u32 %v3742, 7
    %v3744 = vsub.s32 0, %v3743
    %v3745 = vrot.slane %v3713, %v3744
    %v3747 = vmul.f32 %v3739, %v3745
    %v3748 = vmul.f32 %v3740, %v3745
    %v3750 = vlaneseq
    %v3751 = vshrl.u32 %v3750, 7
    %v3752 = vsub.s32 0, %v3751
    %v3753 = vrot.slane %v3714, %v3752
    %v3755 = vadd.f32 %v3747, %v3753
    %v3756 = vadd.f32 %v3748, %v3753
    %v3757 = vld [vmem:[%s57] sm:$0xff]
    %v3758 = vld [vmem:[%s57 + $0x8] sm:$0xff]
    %v3759 = vld [vmem:[%s57 + $0x10] sm:$0xff]
    %v3760 = vld [vmem:[%s57 + $0x18] sm:$0xff]
    %v3761 = vld [vmem:[%s57 + $0x20] sm:$0xff]
    %v3762 = vld [vmem:[%s57 + $0x28] sm:$0xff]
    %v3763 = vld [vmem:[%s57 + $0x30] sm:$0xff]
    %v3764 = vld [vmem:[%s57 + $0x38] sm:$0xff]
    %v3765 = vld [vmem:[%s59] sm:$0x1]
    %v3767 = vlaneseq
    %v3768 = vshrl.u32 %v3767, 7
    %v3769 = vsub.s32 0, %v3768
    %v3770 = vrot.slane %v3765, %v3769
    %v3774 = vrot.slane %v3755, 6
    %v3775 = vrot.slane %v3756, 6
    %v3776 = vsel %vm448, %v3774, %v3775
    %v3777 = vsel %vm454, %v3776, 0
    %3779 = vmatprep.subr.mxu0 0.0
    %3780 = vmatpush1.msra.mxu0 %v3757
    %3781 = vmatprep.subr.mxu0 0.0
    %3782 = vmatpush1.msra.mxu0 %v3758
    %3783 = vmatprep.subr.mxu0 0.0
    %3784 = vmatpush1.msra.mxu0 %v3759
    %3785 = vmatprep.subr.mxu0 0.0
    %3786 = vmatpush1.msra.mxu0 %v3760
    %3787 = vmatprep.subr.mxu0 0.0
    %3788 = vmatpush1.msra.mxu0 %v3761
    %3789 = vmatprep.subr.mxu0 0.0
    %3790 = vmatpush1.msra.mxu0 %v3762
    %3791 = vmatprep.subr.mxu0 0.0
    %3792 = vmatpush1.msra.mxu0 %v3763
    %3793 = vmatprep.subr.mxu0 0.0
    %3794 = vmatpush1.msra.mxu0 %v3764
    %3795 = vmatprep.subr.mxu0 0.0
    %3796 = vmatpush1.msra.mxu0 0.0
    %3797 = vmatprep.subr.mxu0 0.0
    %3798 = vmatpush1.msra.mxu0 0.0
    %3799 = vmatprep.subr.mxu0 0.0
    %3800 = vmatpush1.msra.mxu0 0.0
    %3801 = vmatprep.subr.mxu0 0.0
    %3802 = vmatpush1.msra.mxu0 0.0
    %3803 = vmatprep.subr.mxu0 0.0
    %3804 = vmatpush1.msra.mxu0 0.0
    %3805 = vmatprep.subr.mxu0 0.0
    %3806 = vmatpush1.msra.mxu0 0.0
    %3807 = vmatprep.subr.mxu0 0.0
    %3808 = vmatpush1.msra.mxu0 0.0
    %3809 = vmatprep.subr.mxu0 0.0
    %3810 = vmatpush1.msra.mxu0 0.0
    %3811 = vmatprep.subr.mxu0 0.0
    %3812 = vmatpush1.msra.mxu0 0.0
    %3813 = vmatprep.subr.mxu0 0.0
    %3814 = vmatpush1.msra.mxu0 0.0
    %3815 = vmatprep.subr.mxu0 0.0
    %3816 = vmatpush1.msra.mxu0 0.0
    %3817 = vmatprep.subr.mxu0 0.0
    %3818 = vmatpush1.msra.mxu0 0.0
    %3819 = vmatprep.subr.mxu0 0.0
    %3820 = vmatpush1.msra.mxu0 0.0
    %3821 = vmatprep.subr.mxu0 0.0
    %3822 = vmatpush1.msra.mxu0 0.0
    %3823 = vmatprep.subr.mxu0 0.0
    %3824 = vmatpush1.msra.mxu0 0.0
    %3825 = vmatprep.subr.mxu0 0.0
    %3826 = vmatpush1.msra.mxu0 0.0
    %3827 = vmatprep.subr.mxu0 0.0
    %3828 = vmatpush1.msra.mxu0 0.0
    %3829 = vmatprep.subr.mxu0 0.0
    %3830 = vmatpush1.msra.mxu0 0.0
    %3831 = vmatprep.subr.mxu0 0.0
    %3832 = vmatpush1.msra.mxu0 0.0
    %3833 = vmatprep.subr.mxu0 0.0
    %3834 = vmatpush1.msra.mxu0 0.0
    %3835 = vmatprep.subr.mxu0 0.0
    %3836 = vmatpush1.msra.mxu0 0.0
    %3837 = vmatprep.subr.mxu0 0.0
    %3838 = vmatpush1.msra.mxu0 0.0
    %3839 = vmatprep.subr.mxu0 0.0
    %3840 = vmatpush1.msra.mxu0 0.0
    %3841 = vmatprep.subr.mxu0 0.0
    %3842 = vmatpush1.msra.mxu0 0.0
    %3843 = vmatprep.mubr.f32.mxu0 0.0
    %3844 = vmatmul.mubr.f32.gmra.mrb[0].mxu0 %v3777
    %v3845 = vpop.f32.mrb[0].mxu0
    %v3846 = vadd.f32 %v3770, %v3845
    %v3847 = vpop.f32.mrb[0].mxu0
    %3848 = vdwg.mxu0
    %v3849 = vmul.f32 %v3846, 0.5
    %v3850 = vmul.f32 %v3846, 0.70710677
    %v3851 = verf.f32.pop %v3850
    %v3852 = vadd.f32 %v3851, 1.0
    %v3853 = vmul.f32 %v3849, %v3852
    %v3854 = vld [vmem:[%s61] sm:$0xff]
    %v3855 = vld [vmem:[%s61 + $0x8] sm:$0xff]
    %v3856 = vld [vmem:[%s61 + $0x10] sm:$0xff]
    %v3857 = vld [vmem:[%s61 + $0x18] sm:$0xff]
    %v3858 = vld [vmem:[%s61 + $0x20] sm:$0xff]
    %v3859 = vld [vmem:[%s61 + $0x28] sm:$0xff]
    %v3860 = vld [vmem:[%s61 + $0x30] sm:$0xff]
    %v3861 = vld [vmem:[%s61 + $0x38] sm:$0xff]
    %v3862 = vld [vmem:[%s61 + $0x40] sm:$0xff]
    %v3863 = vld [vmem:[%s61 + $0x48] sm:$0xff]
    %v3864 = vld [vmem:[%s61 + $0x50] sm:$0xff]
    %v3865 = vld [vmem:[%s61 + $0x58] sm:$0xff]
    %v3866 = vld [vmem:[%s61 + $0x60] sm:$0xff]
    %v3867 = vld [vmem:[%s61 + $0x68] sm:$0xff]
    %v3868 = vld [vmem:[%s61 + $0x70] sm:$0xff]
    %v3869 = vld [vmem:[%s61 + $0x78] sm:$0xff]
    %v3870 = vld [vmem:[%s63] sm:$0x1]
    %v3872 = vlaneseq
    %v3873 = vshrl.u32 %v3872, 7
    %v3874 = vsub.s32 0, %v3873
    %v3875 = vrot.slane %v3870, %v3874
    %3877 = vmatprep.subr.mxu0 0.0
    %3878 = vmatpush1.msra.mxu0 %v3854
    %3879 = vmatprep.subr.mxu0 0.0
    %3880 = vmatpush1.msra.mxu0 %v3855
    %3881 = vmatprep.subr.mxu0 0.0
    %3882 = vmatpush1.msra.mxu0 %v3856
    %3883 = vmatprep.subr.mxu0 0.0
    %3884 = vmatpush1.msra.mxu0 %v3857
    %3885 = vmatprep.subr.mxu0 0.0
    %3886 = vmatpush1.msra.mxu0 %v3858
    %3887 = vmatprep.subr.mxu0 0.0
    %3888 = vmatpush1.msra.mxu0 %v3859
    %3889 = vmatprep.subr.mxu0 0.0
    %3890 = vmatpush1.msra.mxu0 %v3860
    %3891 = vmatprep.subr.mxu0 0.0
    %3892 = vmatpush1.msra.mxu0 %v3861
    %3893 = vmatprep.subr.mxu0 0.0
    %3894 = vmatpush1.msra.mxu0 %v3862
    %3895 = vmatprep.subr.mxu0 0.0
    %3896 = vmatpush1.msra.mxu0 %v3863
    %3897 = vmatprep.subr.mxu0 0.0
    %3898 = vmatpush1.msra.mxu0 %v3864
    %3899 = vmatprep.subr.mxu0 0.0
    %3900 = vmatpush1.msra.mxu0 %v3865
    %3901 = vmatprep.subr.mxu0 0.0
    %3902 = vmatpush1.msra.mxu0 %v3866
    %3903 = vmatprep.subr.mxu0 0.0
    %3904 = vmatpush1.msra.mxu0 %v3867
    %3905 = vmatprep.subr.mxu0 0.0
    %3906 = vmatpush1.msra.mxu0 %v3868
    %3907 = vmatprep.subr.mxu0 0.0
    %3908 = vmatpush1.msra.mxu0 %v3869
    %3909 = vmatprep.subr.mxu0 0.0
    %3910 = vmatpush1.msra.mxu0 0.0
    %3911 = vmatprep.subr.mxu0 0.0
    %3912 = vmatpush1.msra.mxu0 0.0
    %3913 = vmatprep.subr.mxu0 0.0
    %3914 = vmatpush1.msra.mxu0 0.0
    %3915 = vmatprep.subr.mxu0 0.0
    %3916 = vmatpush1.msra.mxu0 0.0
    %3917 = vmatprep.subr.mxu0 0.0
    %3918 = vmatpush1.msra.mxu0 0.0
    %3919 = vmatprep.subr.mxu0 0.0
    %3920 = vmatpush1.msra.mxu0 0.0
    %3921 = vmatprep.subr.mxu0 0.0
    %3922 = vmatpush1.msra.mxu0 0.0
    %3923 = vmatprep.subr.mxu0 0.0
    %3924 = vmatpush1.msra.mxu0 0.0
    %3925 = vmatprep.subr.mxu0 0.0
    %3926 = vmatpush1.msra.mxu0 0.0
    %3927 = vmatprep.subr.mxu0 0.0
    %3928 = vmatpush1.msra.mxu0 0.0
    %3929 = vmatprep.subr.mxu0 0.0
    %3930 = vmatpush1.msra.mxu0 0.0
    %3931 = vmatprep.subr.mxu0 0.0
    %3932 = vmatpush1.msra.mxu0 0.0
    %3933 = vmatprep.subr.mxu0 0.0
    %3934 = vmatpush1.msra.mxu0 0.0
    %3935 = vmatprep.subr.mxu0 0.0
    %3936 = vmatpush1.msra.mxu0 0.0
    %3937 = vmatprep.subr.mxu0 0.0
    %3938 = vmatpush1.msra.mxu0 0.0
    %3939 = vmatprep.subr.mxu0 0.0
    %3940 = vmatpush1.msra.mxu0 0.0
    %3941 = vmatprep.mubr.f32.mxu0 0.0
    %3942 = vmatmul.mubr.f32.gmra.mrb[0].mxu0 %v3853
    %v3943 = vpop.f32.mrb[0].mxu0
    %v3944 = vadd.f32 %v3875, %v3943
    %v3945 = vpop.f32.mrb[0].mxu0
    %3946 = vdwg.mxu0
    %3947 = vst.msk [vmem:[#allocation2] sm:$0xff] %vm352, %v3944
    // Predicated region
    $region130: #{tpu_custom_call.1} parent=1 // pred_check
      _
    $region131: #{tpu_custom_call.1} parent=1 // pred_check_branch
      %3949 = sbr.rel (0) target = $region133
    $region132: #{tpu_custom_call.1} parent=1 // pred_region
      %s3951 = ssub.s32 128, 128
      %3952 = vsyncadd [#allocation3], %s3951
      %s3954 = sshll.u32 [#allocation2], 4
      %s3955 = int_to_ptr.vmem [resolvable:$true] %s3954
      %3957 = dma.vmem_to_hbm [thread:$0]  %s3955, 128, %s65, [#allocation3]
    $region133: #{tpu_custom_call.1} parent=1 // pred_fallthru
      _
    // Predicated region
    $region134: #{tpu_custom_call.1} parent=1 // pred_check
      _
    $region135: #{tpu_custom_call.1} parent=1 // pred_check_branch
      %3959 = sbr.rel (0) target = $region137
    $region136: #{tpu_custom_call.1} parent=1 // pred_region
      %3960 = dma.done [#allocation3], 128
    $region137: #{tpu_custom_call.1} parent=1 // pred_fallthru
      _
    %3961 = vsyncpa [#allocation3], 1

</llo_original>
